<compile_context>
chip_gen: v5e
topology: v5e:2x2
jax: 0.10.0
libtpu: 0.0.40
codegen_flags: <defaults>
</compile_context>

<pallas_src>
import functools
import math

import jax
import jax.numpy as jnp
from jax.experimental import pallas as pl
from jax.experimental.pallas import tpu as pltpu


# ----------------------------------------------------------------------------- Pallas kernels

def _mish(y):
    # Mish with 1 exp + 1 approx reciprocal: tanh(softplus(y)) = t / (t + 2), t = e * (e + 2).
    # Clamp: for y > 20 the factor is 1 to f32 precision, and it avoids exp overflow.
    e = jnp.exp(jnp.minimum(y, 20.0))
    t = e * (e + 2.0)
    return y * t * pl.reciprocal(t + 2.0, approx=True)


def _mm1_kernel(w_ref, a_ref, b_ref, o_ref, *, apply_mish):
    # y = W @ A + shift ; Mish.  W resident (BN scale pre-folded), A tiled along lane-dense M.
    y = jnp.dot(w_ref[...], a_ref[...], preferred_element_type=jnp.float32)
    y = y + b_ref[...]
    if apply_mish:
        y = _mish(y)
    o_ref[...] = y.astype(o_ref.dtype)


def _mm2_kernel(w1_ref, a1_ref, w2_ref, a2_ref, b_ref, o_ref, *, apply_mish):
    # y = W1 @ A1 + W2 @ A2 + shift ; Mish.  Fuses the 1x1x1 redir skip branch into the
    # phase-decomposed transposed convolution (both dots accumulate in f32).
    y = jnp.dot(w1_ref[...], a1_ref[...], preferred_element_type=jnp.float32)
    y = y + jnp.dot(w2_ref[...], a2_ref[...], preferred_element_type=jnp.float32)
    y = y + b_ref[...]
    if apply_mish:
        y = _mish(y)
    o_ref[...] = y.astype(o_ref.dtype)


def _cdiv(a, b):
    return -(-a // b)


def _pick_tile(m, col_bytes):
    """Largest M tile (multiple of 128, up to 1024) that keeps >=2 grid steps when possible
    and the double-buffered per-step working set under a conservative VMEM budget
    (safe on v5e/v6e at the 16/32 MiB scoped defaults and on v7x's 64 MiB physical VMEM)."""
    budget = 5 * 1024 * 1024
    tm = 1024
    while tm > 128 and (2 * col_bytes * tm > budget or _cdiv(m, tm) < 2):
        tm //= 2
    return tm


def fused_matmul(w_list, a_list, shift, *, apply_mish, out_dtype):
    """out = sum_i W_i @ A_i + shift[:, None], optionally followed by Mish.

    W_i: (R, K_i) resident in VMEM; A_i: (K_i, M) tiled along the lane-dense M axis;
    shift: (R,). MXU operands in bf16, f32 accumulation + epilogue, output cast to out_dtype.
    """
    r = w_list[0].shape[0]
    m = a_list[0].shape[1]
    out_bytes = jnp.dtype(out_dtype).itemsize
    ksum = sum(a.shape[0] for a in a_list)
    col_bytes = ksum * 2 + r * out_bytes
    tm = _pick_tile(m, col_bytes)
    mp = _cdiv(m, tm) * tm          # pad M up (hardened tiling; padded cols sliced off below)

    args, in_specs = [], []
    for wmat, a in zip(w_list, a_list):
        k = wmat.shape[1]
        args.append(wmat.astype(jnp.bfloat16))
        in_specs.append(pl.BlockSpec((r, k), lambda i: (0, 0)))
        if mp != m:
            a = jnp.pad(a, ((0, 0), (0, mp - m)))
        args.append(a.astype(jnp.bfloat16))
        in_specs.append(pl.BlockSpec((k, tm), lambda i: (0, i)))
    args.append(shift.astype(jnp.float32).reshape(r, 1))
    in_specs.append(pl.BlockSpec((r, 1), lambda i: (0, 0)))

    # Advisory cost hint so XLA schedules other work around the custom call sensibly.
    cost = pl.CostEstimate(
        flops=2 * r * ksum * mp,
        transcendentals=(2 * r * mp) if apply_mish else 0,
        bytes_accessed=(sum(int(w.size) for w in w_list) * 2
                        + ksum * mp * 2 + r * 4 + r * mp * out_bytes),
    )

    kernel = _mm1_kernel if len(w_list) == 1 else _mm2_kernel
    out = pl.pallas_call(
        functools.partial(kernel, apply_mish=apply_mish),
        out_shape=jax.ShapeDtypeStruct((r, mp), out_dtype),
        grid=(mp // tm,),
        in_specs=in_specs,
        out_specs=pl.BlockSpec((r, tm), lambda i: (0, i)),
        compiler_params=pltpu.CompilerParams(dimension_semantics=("parallel",)),
        cost_estimate=cost,
    )(*args)
    return out[:, :m] if mp != m else out


# ----------------------------------------------------------------------------- conv lowering glue

def _im2col3d(x, k, stride, pad):
    """x: (C, N, D, H, W) -> A: (k^3*C, N*Do*Ho*Wo), rows ordered (tap_d, tap_h, tap_w, C).
    Channel-major layout means every slab reshapes to (C, M) with NO transpose."""
    c, n, d, h, w = x.shape
    if pad:
        x = jnp.pad(x, ((0, 0), (0, 0), (pad, pad), (pad, pad), (pad, pad)))
    do = (d + 2 * pad - k) // stride + 1
    ho = (h + 2 * pad - k) // stride + 1
    wo = (w + 2 * pad - k) // stride + 1
    m = n * do * ho * wo
    slabs = []
    for kd in range(k):
        for kh in range(k):
            for kw in range(k):
                slabs.append(
                    x[:, :,
                      kd:kd + do * stride:stride,
                      kh:kh + ho * stride:stride,
                      kw:kw + wo * stride:stride].reshape(c, m))
    return jnp.concatenate(slabs, axis=0), (n, do, ho, wo)


def conv3d_bn_mish(x, w, bn, *, stride):
    """3x3x3 Conv3d(bias=False, pad=1) + folded BatchNorm + Mish.  x: (Cin, N, D, H, W) bf16."""
    scale, shift = bn
    cout, cin = w.shape[0], w.shape[1]
    a, (n, do, ho, wo) = _im2col3d(x, 3, stride, 1)
    wmat = (w * scale[:, None, None, None, None]).transpose(0, 2, 3, 4, 1).reshape(cout, 27 * cin)
    y = fused_matmul([wmat], [a], shift, apply_mish=True, out_dtype=jnp.bfloat16)
    return y.reshape(cout, n, do, ho, wo)


# --- ConvTranspose3d(k=3, s=2, p=1, op=1) via sub-pixel phase decomposition -------------------

def _shift_stack(x):
    """(C, N, D, H, W) -> (8C, N*D*H*W): the 8 (+0/+1)-shifted views (zero padded at the end),
    ordered (dd, dh, dw)."""
    c, n, d, h, w = x.shape
    xp = jnp.pad(x, ((0, 0), (0, 0), (0, 1), (0, 1), (0, 1)))
    m = n * d * h * w
    slabs = []
    for dd in (0, 1):
        for dh in (0, 1):
            for dw in (0, 1):
                slabs.append(xp[:, :, dd:dd + d, dh:dh + h, dw:dw + w].reshape(c, m))
    return jnp.concatenate(slabs, axis=0)


def _parity_stack(r):
    """(C, N, 2D, 2H, 2W) -> (8C, N*D*H*W): the 8 output-parity sub-grids, ordered (pd, ph, pw)."""
    c, n, d2, h2, w2 = r.shape
    m = n * (d2 // 2) * (h2 // 2) * (w2 // 2)
    slabs = []
    for pd in (0, 1):
        for ph in (0, 1):
            for pw in (0, 1):
                slabs.append(r[:, :, pd::2, ph::2, pw::2].reshape(c, m))
    return jnp.concatenate(slabs, axis=0)


def _tap(parity, delta):
    """Kernel tap used by output parity `parity` with input shift `delta` (None if unused).
    Derived from out[o] = sum_k x[(o + p - k)/s] * w[k] with s=2, p=1, k in {0,1,2}."""
    if parity == 0:
        return 1 if delta == 0 else None
    return 0 if delta == 1 else 2


def _convT_phase_weights(w_t, scale):
    """w_t: (Cin, Cout, 3, 3, 3) -> (8*Cout, 8*Cin) phase-decomposed weight matrix with the
    BatchNorm scale folded in.  Row blocks = output parity (pd,ph,pw); col blocks = input shift."""
    cin, cout = w_t.shape[0], w_t.shape[1]
    zero = jnp.zeros((cout, cin), w_t.dtype)
    rows = []
    for pd in (0, 1):
        for ph in (0, 1):
            for pw in (0, 1):
                cols = []
                for dd in (0, 1):
                    for dh in (0, 1):
                        for dw in (0, 1):
                            kd, kh, kw = _tap(pd, dd), _tap(ph, dh), _tap(pw, dw)
                            if kd is None or kh is None or kw is None:
                                cols.append(zero)
                            else:
                                cols.append(w_t[:, :, kd, kh, kw].T * scale[:, None])
                rows.append(jnp.concatenate(cols, axis=1))
    return jnp.concatenate(rows, axis=0)


def _interleave_parity(y, cout, n, d, h, w):
    """(8*Cout, N*D*H*W) parity-major rows -> (Cout, N, 2D, 2H, 2W)."""
    y = y.reshape(2, 2, 2, cout, n, d, h, w)
    y = y.transpose(3, 4, 5, 0, 6, 1, 7, 2)
    return y.reshape(cout, n, 2 * d, 2 * h, 2 * w)


def conv_transpose3d_fused(x, w_t, bn, redir_in, wr, bn_r, *, out_dtype):
    """out = Mish( BN(ConvTranspose3d(x)) + BN_r(Conv1x1(redir_in)) ), fully fused in one kernel.
    x: (Cin, N, D, H, W);  redir_in: (Cr, N, 2D, 2H, 2W);  w_t: (Cin, Cout, 3, 3, 3)."""
    scale, shift = bn
    scale_r, shift_r = bn_r
    cin, n, d, h, w = x.shape
    cout = w_t.shape[1]
    a_main = _shift_stack(x)                                    # (8*Cin, M)
    a_skip = _parity_stack(redir_in)                            # (8*Cr,  M)
    w_main = _convT_phase_weights(w_t, scale)                   # (8*Cout, 8*Cin)
    wr_mat = wr[:, :, 0, 0, 0] * scale_r[:, None]               # (Cout, Cr), BN scale folded
    w_skip = jnp.kron(jnp.eye(8, dtype=wr_mat.dtype), wr_mat)   # block-diag (8*Cout, 8*Cr)
    b = jnp.tile(shift, 8) + jnp.tile(shift_r, 8)               # (8*Cout,)
    y = fused_matmul([w_main, w_skip], [a_main, a_skip], b,
                     apply_mish=True, out_dtype=out_dtype)      # (8*Cout, M)
    return _interleave_parity(y, cout, n, d, h, w)


# ----------------------------------------------------------------------------- parameter init

def _init_bn(key, c):
    k1, k2, k3, k4 = jax.random.split(key, 4)
    gamma = 1.0 + 0.1 * jax.random.normal(k1, (c,), jnp.float32)
    beta = 0.1 * jax.random.normal(k2, (c,), jnp.float32)
    mean = 0.05 * jax.random.normal(k3, (c,), jnp.float32)
    var = 1.0 + 0.1 * jax.random.uniform(k4, (c,), jnp.float32)
    eps = 1e-5
    scale = gamma / jnp.sqrt(var + eps)
    shift = beta - mean * scale
    return scale, shift


def _init_conv_w(key, cout, cin, k):
    fan_in = cin * k * k * k
    return jax.random.normal(key, (cout, cin, k, k, k), jnp.float32) / math.sqrt(fan_in)


def _init_convT_w(key, cin, cout, k):
    fan_in = cin * k * k * k
    return jax.random.normal(key, (cin, cout, k, k, k), jnp.float32) / math.sqrt(fan_in)


def init_hourglass_params(key, c):
    keys = jax.random.split(key, 16)
    p = {}
    p["w1"] = _init_conv_w(keys[0], 2 * c, c, 3);       p["bn1"] = _init_bn(keys[1], 2 * c)
    p["w2"] = _init_conv_w(keys[2], 2 * c, 2 * c, 3);   p["bn2"] = _init_bn(keys[3], 2 * c)
    p["w3"] = _init_conv_w(keys[4], 4 * c, 2 * c, 3);   p["bn3"] = _init_bn(keys[5], 4 * c)
    p["w4"] = _init_conv_w(keys[6], 4 * c, 4 * c, 3);   p["bn4"] = _init_bn(keys[7], 4 * c)
    p["w5"] = _init_convT_w(keys[8], 4 * c, 2 * c, 3);  p["bn5"] = _init_bn(keys[9], 2 * c)
    p["w6"] = _init_convT_w(keys[10], 2 * c, c, 3);     p["bn6"] = _init_bn(keys[11], c)
    p["wr1"] = _init_conv_w(keys[12], c, c, 1);         p["bnr1"] = _init_bn(keys[13], c)
    p["wr2"] = _init_conv_w(keys[14], 2 * c, 2 * c, 1); p["bnr2"] = _init_bn(keys[15], 2 * c)
    return p


# ----------------------------------------------------------------------------- HourGlass forward

def hourglass_forward(x_ncdhw, p):
    # channel-major (C, N, D, H, W) + bf16 activations end-to-end; f32 NCDHW only at boundaries.
    x = x_ncdhw.transpose(1, 0, 2, 3, 4).astype(jnp.bfloat16)
    conv1 = conv3d_bn_mish(x, p["w1"], p["bn1"], stride=2)
    conv2 = conv3d_bn_mish(conv1, p["w2"], p["bn2"], stride=1)
    conv3 = conv3d_bn_mish(conv2, p["w3"], p["bn3"], stride=2)
    conv4 = conv3d_bn_mish(conv3, p["w4"], p["bn4"], stride=1)
    # conv5 = Mish(BN(convT(conv4)) + redir2(conv2)) ; conv6 = Mish(BN(convT(conv5)) + redir1(x))
    conv5 = conv_transpose3d_fused(conv4, p["w5"], p["bn5"], conv2, p["wr2"], p["bnr2"],
                                   out_dtype=jnp.bfloat16)
    conv6 = conv_transpose3d_fused(conv5, p["w6"], p["bn6"], x, p["wr1"], p["bnr1"],
                                   out_dtype=jnp.float32)
    return conv6.transpose(1, 0, 2, 3, 4)


# ----------------------------------------------------------------------------- pure-JAX reference

def _mish_ref(x):
    return x * jnp.tanh(jax.nn.softplus(x))


def _convbn_ref(x, w, bn, stride, pad):
    scale, shift = bn
    y = jax.lax.conv_general_dilated(
        x, w, window_strides=(stride,) * 3, padding=[(pad, pad)] * 3,
        dimension_numbers=("NCDHW", "OIDHW", "NCDHW"))
    return y * scale[None, :, None, None, None] + shift[None, :, None, None, None]


def _convTbn_ref(x, w_t, bn):
    scale, shift = bn
    w_conv = jnp.flip(w_t, axis=(2, 3, 4)).transpose(1, 0, 2, 3, 4)
    y = jax.lax.conv_general_dilated(
        x, w_conv, window_strides=(1, 1, 1), padding=[(1, 2)] * 3, lhs_dilation=(2, 2, 2),
        dimension_numbers=("NCDHW", "OIDHW", "NCDHW"))
    return y * scale[None, :, None, None, None] + shift[None, :, None, None, None]


def hourglass_ref(x, p):
    c1 = _mish_ref(_convbn_ref(x, p["w1"], p["bn1"], 2, 1))
    c2 = _mish_ref(_convbn_ref(c1, p["w2"], p["bn2"], 1, 1))
    c3 = _mish_ref(_convbn_ref(c2, p["w3"], p["bn3"], 2, 1))
    c4 = _mish_ref(_convbn_ref(c3, p["w4"], p["bn4"], 1, 1))
    r2 = _convbn_ref(c2, p["wr2"], p["bnr2"], 1, 0)
    r1 = _convbn_ref(x, p["wr1"], p["bnr1"], 1, 0)
    c5 = _mish_ref(_convTbn_ref(c4, p["w5"], p["bn5"]) + r2)
    c6 = _mish_ref(_convTbn_ref(c5, p["w6"], p["bn6"]) + r1)
    return c6


# ----------------------------------------------------------------------------- main

if __name__ == "__main__":
    key = jax.random.PRNGKey(0)
    k_x, k_p = jax.random.split(key)

    N, C, D, H, W = 2, 4, 8, 16, 16  # D, H, W divisible by 4 (two stride-2 stages)
    x = jax.random.normal(k_x, (N, C, D, H, W), jnp.float32)
    params = init_hourglass_params(k_p, C)

    out = jax.jit(hourglass_forward)(x, params)
    out = jax.block_until_ready(out)

    assert out.shape == (N, C, D, H, W), out.shape
    assert bool(jnp.all(jnp.isfinite(out)))

    # Loose self-check vs a pure-JAX f32 reference (kernel path runs bf16 activations/weights).
    x_q = x.astype(jnp.bfloat16).astype(jnp.float32)
    ref = jax.block_until_ready(jax.jit(hourglass_ref)(x_q, params))
    err = float(jnp.max(jnp.abs(out - ref)))
    mag = float(jnp.max(jnp.abs(ref)))
    assert err <= 0.1 * mag + 0.1, (err, mag)

    print("KERNEL_OK")
</pallas_src>

<mosaic_0001>
module attributes {stable_mosaic.version = 11 : i64} {
  func.func @_mm1_kernel(%arg0: i32, %arg1: memref<8x108xbf16, #tpu.memory_space<vmem>>, %arg2: memref<108x256xbf16, #tpu.memory_space<vmem>>, %arg3: memref<8x1xf32, #tpu.memory_space<vmem>>, %arg4: memref<8x256xbf16, #tpu.memory_space<vmem>>) attributes {dimension_semantics = [#tpu.dimension_semantics<parallel>], iteration_bounds = array<i64: 2>, scalar_prefetch = 0 : i64, scratch_operands = 0 : i64, tpu.core_type = #tpu.core_type<tc>, window_params = [{pipeline_mode = #tpu.pipeline_mode<synchronous>, transform_indices = @transform_0, window_bounds = array<i64: 8, 108>}, {transform_indices = @transform_1, window_bounds = array<i64: 108, 256>}, {pipeline_mode = #tpu.pipeline_mode<synchronous>, transform_indices = @transform_2, window_bounds = array<i64: 8, 1>}, {transform_indices = @transform_3, window_bounds = array<i64: 8, 256>}]} {
    %c0 = arith.constant 0 : index
    %c0_0 = arith.constant 0 : index
    %0 = vector.load %arg1[%c0, %c0_0] : memref<8x108xbf16, #tpu.memory_space<vmem>>, vector<8x108xbf16>
    %c0_1 = arith.constant 0 : index
    %c0_2 = arith.constant 0 : index
    %1 = vector.load %arg2[%c0_1, %c0_2] : memref<108x256xbf16, #tpu.memory_space<vmem>>, vector<108x256xbf16>
    %cst = arith.constant dense<0.000000e+00> : vector<8x256xf32>
    %2 = tpu.matmul %0, %1, %cst {dimension_numbers = #tpu.dot_dimension_numbers<[1], [0], [0], [1], [0, 0, 1, 1], [], []>} : vector<8x108xbf16>, vector<108x256xbf16>, vector<8x256xf32> -> vector<8x256xf32>
    %c0_3 = arith.constant 0 : index
    %c0_4 = arith.constant 0 : index
    %3 = vector.load %arg3[%c0_3, %c0_4] : memref<8x1xf32, #tpu.memory_space<vmem>>, vector<8x1xf32>
    %4 = vector.broadcast %3 : vector<8x1xf32> to vector<8x256xf32>
    %5 = arith.addf %2, %4 : vector<8x256xf32>
    %cst_5 = arith.constant 2.000000e+01 : f32
    %6 = vector.broadcast %cst_5 : f32 to vector<8x256xf32>
    %7 = arith.minimumf %5, %6 : vector<8x256xf32>
    %8 = math.exp %7 : vector<8x256xf32>
    %cst_6 = arith.constant 2.000000e+00 : f32
    %9 = vector.broadcast %cst_6 : f32 to vector<8x256xf32>
    %10 = arith.addf %8, %9 : vector<8x256xf32>
    %11 = arith.mulf %8, %10 : vector<8x256xf32>
    %12 = arith.mulf %5, %11 : vector<8x256xf32>
    %cst_7 = arith.constant 2.000000e+00 : f32
    %13 = vector.broadcast %cst_7 : f32 to vector<8x256xf32>
    %14 = arith.addf %11, %13 : vector<8x256xf32>
    %15 = tpu.reciprocal %14 {approx = true} : vector<8x256xf32> -> vector<8x256xf32>
    %16 = arith.mulf %12, %15 : vector<8x256xf32>
    %17 = arith.truncf %16 : vector<8x256xf32> to vector<8x256xbf16>
    %c0_8 = arith.constant 0 : index
    %c0_9 = arith.constant 0 : index
    %18 = vector.load %arg4[%c0_8, %c0_9] : memref<8x256xbf16, #tpu.memory_space<vmem>>, vector<8x256xbf16>
    tpu.vector_store %arg4[%c0_8, %c0_9], %17 {strides = array<i32>} : memref<8x256xbf16, #tpu.memory_space<vmem>>, vector<8x256xbf16>,
    return
  }
  func.func @transform_0(%arg0: i32) -> (i32, i32) {
    %c0_i32 = arith.constant 0 : i32
    %c0_i32_0 = arith.constant 0 : i32
    %c0_i32_1 = arith.constant 0 : i32
    return %c0_i32, %c0_i32_0 : i32, i32
  }
  func.func @transform_1(%arg0: i32) -> (i32, i32) {
    %c0_i32 = arith.constant 0 : i32
    %c0_i32_0 = arith.constant 0 : i32
    return %c0_i32, %arg0 : i32, i32
  }
  func.func @transform_2(%arg0: i32) -> (i32, i32) {
    %c0_i32 = arith.constant 0 : i32
    %c0_i32_0 = arith.constant 0 : i32
    %c0_i32_1 = arith.constant 0 : i32
    return %c0_i32, %c0_i32_0 : i32, i32
  }
  func.func @transform_3(%arg0: i32) -> (i32, i32) {
    %c0_i32 = arith.constant 0 : i32
    %c0_i32_0 = arith.constant 0 : i32
    return %c0_i32, %arg0 : i32, i32
  }
}

module attributes {stable_mosaic.version = 11 : i64} {
  func.func @_mm1_kernel(%arg0: i32, %arg1: memref<8x216xbf16, #tpu.memory_space<vmem>>, %arg2: memref<216x256xbf16, #tpu.memory_space<vmem>>, %arg3: memref<8x1xf32, #tpu.memory_space<vmem>>, %arg4: memref<8x256xbf16, #tpu.memory_space<vmem>>) attributes {dimension_semantics = [#tpu.dimension_semantics<parallel>], iteration_bounds = array<i64: 2>, scalar_prefetch = 0 : i64, scratch_operands = 0 : i64, tpu.core_type = #tpu.core_type<tc>, window_params = [{pipeline_mode = #tpu.pipeline_mode<synchronous>, transform_indices = @transform_0, window_bounds = array<i64: 8, 216>}, {transform_indices = @transform_1, window_bounds = array<i64: 216, 256>}, {pipeline_mode = #tpu.pipeline_mode<synchronous>, transform_indices = @transform_2, window_bounds = array<i64: 8, 1>}, {transform_indices = @transform_3, window_bounds = array<i64: 8, 256>}]} {
    %c0 = arith.constant 0 : index
    %c0_0 = arith.constant 0 : index
    %0 = vector.load %arg1[%c0, %c0_0] : memref<8x216xbf16, #tpu.memory_space<vmem>>, vector<8x216xbf16>
    %c0_1 = arith.constant 0 : index
    %c0_2 = arith.constant 0 : index
    %1 = vector.load %arg2[%c0_1, %c0_2] : memref<216x256xbf16, #tpu.memory_space<vmem>>, vector<216x256xbf16>
    %cst = arith.constant dense<0.000000e+00> : vector<8x256xf32>
    %2 = tpu.matmul %0, %1, %cst {dimension_numbers = #tpu.dot_dimension_numbers<[1], [0], [0], [1], [0, 0, 1, 1], [], []>} : vector<8x216xbf16>, vector<216x256xbf16>, vector<8x256xf32> -> vector<8x256xf32>
    %c0_3 = arith.constant 0 : index
    %c0_4 = arith.constant 0 : index
    %3 = vector.load %arg3[%c0_3, %c0_4] : memref<8x1xf32, #tpu.memory_space<vmem>>, vector<8x1xf32>
    %4 = vector.broadcast %3 : vector<8x1xf32> to vector<8x256xf32>
    %5 = arith.addf %2, %4 : vector<8x256xf32>
    %cst_5 = arith.constant 2.000000e+01 : f32
    %6 = vector.broadcast %cst_5 : f32 to vector<8x256xf32>
    %7 = arith.minimumf %5, %6 : vector<8x256xf32>
    %8 = math.exp %7 : vector<8x256xf32>
    %cst_6 = arith.constant 2.000000e+00 : f32
    %9 = vector.broadcast %cst_6 : f32 to vector<8x256xf32>
    %10 = arith.addf %8, %9 : vector<8x256xf32>
    %11 = arith.mulf %8, %10 : vector<8x256xf32>
    %12 = arith.mulf %5, %11 : vector<8x256xf32>
    %cst_7 = arith.constant 2.000000e+00 : f32
    %13 = vector.broadcast %cst_7 : f32 to vector<8x256xf32>
    %14 = arith.addf %11, %13 : vector<8x256xf32>
    %15 = tpu.reciprocal %14 {approx = true} : vector<8x256xf32> -> vector<8x256xf32>
    %16 = arith.mulf %12, %15 : vector<8x256xf32>
    %17 = arith.truncf %16 : vector<8x256xf32> to vector<8x256xbf16>
    %c0_8 = arith.constant 0 : index
    %c0_9 = arith.constant 0 : index
    %18 = vector.load %arg4[%c0_8, %c0_9] : memref<8x256xbf16, #tpu.memory_space<vmem>>, vector<8x256xbf16>
    tpu.vector_store %arg4[%c0_8, %c0_9], %17 {strides = array<i32>} : memref<8x256xbf16, #tpu.memory_space<vmem>>, vector<8x256xbf16>,
    return
  }
  func.func @transform_0(%arg0: i32) -> (i32, i32) {
    %c0_i32 = arith.constant 0 : i32
    %c0_i32_0 = arith.constant 0 : i32
    %c0_i32_1 = arith.constant 0 : i32
    return %c0_i32, %c0_i32_0 : i32, i32
  }
  func.func @transform_1(%arg0: i32) -> (i32, i32) {
    %c0_i32 = arith.constant 0 : i32
    %c0_i32_0 = arith.constant 0 : i32
    return %c0_i32, %arg0 : i32, i32
  }
  func.func @transform_2(%arg0: i32) -> (i32, i32) {
    %c0_i32 = arith.constant 0 : i32
    %c0_i32_0 = arith.constant 0 : i32
    %c0_i32_1 = arith.constant 0 : i32
    return %c0_i32, %c0_i32_0 : i32, i32
  }
  func.func @transform_3(%arg0: i32) -> (i32, i32) {
    %c0_i32 = arith.constant 0 : i32
    %c0_i32_0 = arith.constant 0 : i32
    return %c0_i32, %arg0 : i32, i32
  }
}

module attributes {stable_mosaic.version = 11 : i64} {
  func.func @_mm1_kernel(%arg0: i32, %arg1: memref<16x216xbf16, #tpu.memory_space<vmem>>, %arg2: memref<216x128xbf16, #tpu.memory_space<vmem>>, %arg3: memref<16x1xf32, #tpu.memory_space<vmem>>, %arg4: memref<16x128xbf16, #tpu.memory_space<vmem>>) attributes {dimension_semantics = [#tpu.dimension_semantics<parallel>], iteration_bounds = array<i64: 1>, scalar_prefetch = 0 : i64, scratch_operands = 0 : i64, tpu.core_type = #tpu.core_type<tc>, window_params = [{pipeline_mode = #tpu.pipeline_mode<synchronous>, transform_indices = @transform_0, window_bounds = array<i64: 16, 216>}, {transform_indices = @transform_1, window_bounds = array<i64: 216, 128>}, {pipeline_mode = #tpu.pipeline_mode<synchronous>, transform_indices = @transform_2, window_bounds = array<i64: 16, 1>}, {transform_indices = @transform_3, window_bounds = array<i64: 16, 128>}]} {
    %c0 = arith.constant 0 : index
    %c0_0 = arith.constant 0 : index
    %0 = vector.load %arg1[%c0, %c0_0] : memref<16x216xbf16, #tpu.memory_space<vmem>>, vector<16x216xbf16>
    %c0_1 = arith.constant 0 : index
    %c0_2 = arith.constant 0 : index
    %1 = vector.load %arg2[%c0_1, %c0_2] : memref<216x128xbf16, #tpu.memory_space<vmem>>, vector<216x128xbf16>
    %cst = arith.constant dense<0.000000e+00> : vector<16x128xf32>
    %2 = tpu.matmul %0, %1, %cst {dimension_numbers = #tpu.dot_dimension_numbers<[1], [0], [0], [1], [0, 0, 1, 1], [], []>} : vector<16x216xbf16>, vector<216x128xbf16>, vector<16x128xf32> -> vector<16x128xf32>
    %c0_3 = arith.constant 0 : index
    %c0_4 = arith.constant 0 : index
    %3 = vector.load %arg3[%c0_3, %c0_4] : memref<16x1xf32, #tpu.memory_space<vmem>>, vector<16x1xf32>
    %4 = vector.broadcast %3 : vector<16x1xf32> to vector<16x128xf32>
    %5 = arith.addf %2, %4 : vector<16x128xf32>
    %cst_5 = arith.constant 2.000000e+01 : f32
    %6 = vector.broadcast %cst_5 : f32 to vector<16x128xf32>
    %7 = arith.minimumf %5, %6 : vector<16x128xf32>
    %8 = math.exp %7 : vector<16x128xf32>
    %cst_6 = arith.constant 2.000000e+00 : f32
    %9 = vector.broadcast %cst_6 : f32 to vector<16x128xf32>
    %10 = arith.addf %8, %9 : vector<16x128xf32>
    %11 = arith.mulf %8, %10 : vector<16x128xf32>
    %12 = arith.mulf %5, %11 : vector<16x128xf32>
    %cst_7 = arith.constant 2.000000e+00 : f32
    %13 = vector.broadcast %cst_7 : f32 to vector<16x128xf32>
    %14 = arith.addf %11, %13 : vector<16x128xf32>
    %15 = tpu.reciprocal %14 {approx = true} : vector<16x128xf32> -> vector<16x128xf32>
    %16 = arith.mulf %12, %15 : vector<16x128xf32>
    %17 = arith.truncf %16 : vector<16x128xf32> to vector<16x128xbf16>
    %c0_8 = arith.constant 0 : index
    %c0_9 = arith.constant 0 : index
    %18 = vector.load %arg4[%c0_8, %c0_9] : memref<16x128xbf16, #tpu.memory_space<vmem>>, vector<16x128xbf16>
    tpu.vector_store %arg4[%c0_8, %c0_9], %17 {strides = array<i32>} : memref<16x128xbf16, #tpu.memory_space<vmem>>, vector<16x128xbf16>,
    return
  }
  func.func @transform_0(%arg0: i32) -> (i32, i32) {
    %c0_i32 = arith.constant 0 : i32
    %c0_i32_0 = arith.constant 0 : i32
    %c0_i32_1 = arith.constant 0 : i32
    return %c0_i32, %c0_i32_0 : i32, i32
  }
  func.func @transform_1(%arg0: i32) -> (i32, i32) {
    %c0_i32 = arith.constant 0 : i32
    %c0_i32_0 = arith.constant 0 : i32
    return %c0_i32, %arg0 : i32, i32
  }
  func.func @transform_2(%arg0: i32) -> (i32, i32) {
    %c0_i32 = arith.constant 0 : i32
    %c0_i32_0 = arith.constant 0 : i32
    %c0_i32_1 = arith.constant 0 : i32
    return %c0_i32, %c0_i32_0 : i32, i32
  }
  func.func @transform_3(%arg0: i32) -> (i32, i32) {
    %c0_i32 = arith.constant 0 : i32
    %c0_i32_0 = arith.constant 0 : i32
    return %c0_i32, %arg0 : i32, i32
  }
}

module attributes {stable_mosaic.version = 11 : i64} {
  func.func @_mm1_kernel(%arg0: i32, %arg1: memref<16x432xbf16, #tpu.memory_space<vmem>>, %arg2: memref<432x128xbf16, #tpu.memory_space<vmem>>, %arg3: memref<16x1xf32, #tpu.memory_space<vmem>>, %arg4: memref<16x128xbf16, #tpu.memory_space<vmem>>) attributes {dimension_semantics = [#tpu.dimension_semantics<parallel>], iteration_bounds = array<i64: 1>, scalar_prefetch = 0 : i64, scratch_operands = 0 : i64, tpu.core_type = #tpu.core_type<tc>, window_params = [{pipeline_mode = #tpu.pipeline_mode<synchronous>, transform_indices = @transform_0, window_bounds = array<i64: 16, 432>}, {transform_indices = @transform_1, window_bounds = array<i64: 432, 128>}, {pipeline_mode = #tpu.pipeline_mode<synchronous>, transform_indices = @transform_2, window_bounds = array<i64: 16, 1>}, {transform_indices = @transform_3, window_bounds = array<i64: 16, 128>}]} {
    %c0 = arith.constant 0 : index
    %c0_0 = arith.constant 0 : index
    %0 = vector.load %arg1[%c0, %c0_0] : memref<16x432xbf16, #tpu.memory_space<vmem>>, vector<16x432xbf16>
    %c0_1 = arith.constant 0 : index
    %c0_2 = arith.constant 0 : index
    %1 = vector.load %arg2[%c0_1, %c0_2] : memref<432x128xbf16, #tpu.memory_space<vmem>>, vector<432x128xbf16>
    %cst = arith.constant dense<0.000000e+00> : vector<16x128xf32>
    %2 = tpu.matmul %0, %1, %cst {dimension_numbers = #tpu.dot_dimension_numbers<[1], [0], [0], [1], [0, 0, 1, 1], [], []>} : vector<16x432xbf16>, vector<432x128xbf16>, vector<16x128xf32> -> vector<16x128xf32>
    %c0_3 = arith.constant 0 : index
    %c0_4 = arith.constant 0 : index
    %3 = vector.load %arg3[%c0_3, %c0_4] : memref<16x1xf32, #tpu.memory_space<vmem>>, vector<16x1xf32>
    %4 = vector.broadcast %3 : vector<16x1xf32> to vector<16x128xf32>
    %5 = arith.addf %2, %4 : vector<16x128xf32>
    %cst_5 = arith.constant 2.000000e+01 : f32
    %6 = vector.broadcast %cst_5 : f32 to vector<16x128xf32>
    %7 = arith.minimumf %5, %6 : vector<16x128xf32>
    %8 = math.exp %7 : vector<16x128xf32>
    %cst_6 = arith.constant 2.000000e+00 : f32
    %9 = vector.broadcast %cst_6 : f32 to vector<16x128xf32>
    %10 = arith.addf %8, %9 : vector<16x128xf32>
    %11 = arith.mulf %8, %10 : vector<16x128xf32>
    %12 = arith.mulf %5, %11 : vector<16x128xf32>
    %cst_7 = arith.constant 2.000000e+00 : f32
    %13 = vector.broadcast %cst_7 : f32 to vector<16x128xf32>
    %14 = arith.addf %11, %13 : vector<16x128xf32>
    %15 = tpu.reciprocal %14 {approx = true} : vector<16x128xf32> -> vector<16x128xf32>
    %16 = arith.mulf %12, %15 : vector<16x128xf32>
    %17 = arith.truncf %16 : vector<16x128xf32> to vector<16x128xbf16>
    %c0_8 = arith.constant 0 : index
    %c0_9 = arith.constant 0 : index
    %18 = vector.load %arg4[%c0_8, %c0_9] : memref<16x128xbf16, #tpu.memory_space<vmem>>, vector<16x128xbf16>
    tpu.vector_store %arg4[%c0_8, %c0_9], %17 {strides = array<i32>} : memref<16x128xbf16, #tpu.memory_space<vmem>>, vector<16x128xbf16>,
    return
  }
  func.func @transform_0(%arg0: i32) -> (i32, i32) {
    %c0_i32 = arith.constant 0 : i32
    %c0_i32_0 = arith.constant 0 : i32
    %c0_i32_1 = arith.constant 0 : i32
    return %c0_i32, %c0_i32_0 : i32, i32
  }
  func.func @transform_1(%arg0: i32) -> (i32, i32) {
    %c0_i32 = arith.constant 0 : i32
    %c0_i32_0 = arith.constant 0 : i32
    return %c0_i32, %arg0 : i32, i32
  }
  func.func @transform_2(%arg0: i32) -> (i32, i32) {
    %c0_i32 = arith.constant 0 : i32
    %c0_i32_0 = arith.constant 0 : i32
    %c0_i32_1 = arith.constant 0 : i32
    return %c0_i32, %c0_i32_0 : i32, i32
  }
  func.func @transform_3(%arg0: i32) -> (i32, i32) {
    %c0_i32 = arith.constant 0 : i32
    %c0_i32_0 = arith.constant 0 : i32
    return %c0_i32, %arg0 : i32, i32
  }
}

module attributes {stable_mosaic.version = 11 : i64} {
  func.func @_mm2_kernel(%arg0: i32, %arg1: memref<64x128xbf16, #tpu.memory_space<vmem>>, %arg2: memref<128x128xbf16, #tpu.memory_space<vmem>>, %arg3: memref<64x64xbf16, #tpu.memory_space<vmem>>, %arg4: memref<64x128xbf16, #tpu.memory_space<vmem>>, %arg5: memref<64x1xf32, #tpu.memory_space<vmem>>, %arg6: memref<64x128xbf16, #tpu.memory_space<vmem>>) attributes {dimension_semantics = [#tpu.dimension_semantics<parallel>], iteration_bounds = array<i64: 1>, scalar_prefetch = 0 : i64, scratch_operands = 0 : i64, tpu.core_type = #tpu.core_type<tc>, window_params = [{pipeline_mode = #tpu.pipeline_mode<synchronous>, transform_indices = @transform_0, window_bounds = array<i64: 64, 128>}, {transform_indices = @transform_1, window_bounds = array<i64: 128, 128>}, {pipeline_mode = #tpu.pipeline_mode<synchronous>, transform_indices = @transform_2, window_bounds = array<i64: 64, 64>}, {transform_indices = @transform_3, window_bounds = array<i64: 64, 128>}, {pipeline_mode = #tpu.pipeline_mode<synchronous>, transform_indices = @transform_4, window_bounds = array<i64: 64, 1>}, {transform_indices = @transform_5, window_bounds = array<i64: 64, 128>}]} {
    %c0 = arith.constant 0 : index
    %c0_0 = arith.constant 0 : index
    %0 = vector.load %arg1[%c0, %c0_0] : memref<64x128xbf16, #tpu.memory_space<vmem>>, vector<64x128xbf16>
    %c0_1 = arith.constant 0 : index
    %c0_2 = arith.constant 0 : index
    %1 = vector.load %arg2[%c0_1, %c0_2] : memref<128x128xbf16, #tpu.memory_space<vmem>>, vector<128x128xbf16>
    %cst = arith.constant dense<0.000000e+00> : vector<64x128xf32>
    %2 = tpu.matmul %0, %1, %cst {dimension_numbers = #tpu.dot_dimension_numbers<[1], [0], [0], [1], [0, 0, 1, 1], [], []>} : vector<64x128xbf16>, vector<128x128xbf16>, vector<64x128xf32> -> vector<64x128xf32>
    %c0_3 = arith.constant 0 : index
    %c0_4 = arith.constant 0 : index
    %3 = vector.load %arg3[%c0_3, %c0_4] : memref<64x64xbf16, #tpu.memory_space<vmem>>, vector<64x64xbf16>
    %c0_5 = arith.constant 0 : index
    %c0_6 = arith.constant 0 : index
    %4 = vector.load %arg4[%c0_5, %c0_6] : memref<64x128xbf16, #tpu.memory_space<vmem>>, vector<64x128xbf16>
    %cst_7 = arith.constant dense<0.000000e+00> : vector<64x128xf32>
    %5 = tpu.matmul %3, %4, %cst_7 {dimension_numbers = #tpu.dot_dimension_numbers<[1], [0], [0], [1], [0, 0, 1, 1], [], []>} : vector<64x64xbf16>, vector<64x128xbf16>, vector<64x128xf32> -> vector<64x128xf32>
    %6 = arith.addf %2, %5 : vector<64x128xf32>
    %c0_8 = arith.constant 0 : index
    %c0_9 = arith.constant 0 : index
    %7 = vector.load %arg5[%c0_8, %c0_9] : memref<64x1xf32, #tpu.memory_space<vmem>>, vector<64x1xf32>
    %8 = vector.broadcast %7 : vector<64x1xf32> to vector<64x128xf32>
    %9 = arith.addf %6, %8 : vector<64x128xf32>
    %cst_10 = arith.constant 2.000000e+01 : f32
    %10 = vector.broadcast %cst_10 : f32 to vector<64x128xf32>
    %11 = arith.minimumf %9, %10 : vector<64x128xf32>
    %12 = math.exp %11 : vector<64x128xf32>
    %cst_11 = arith.constant 2.000000e+00 : f32
    %13 = vector.broadcast %cst_11 : f32 to vector<64x128xf32>
    %14 = arith.addf %12, %13 : vector<64x128xf32>
    %15 = arith.mulf %12, %14 : vector<64x128xf32>
    %16 = arith.mulf %9, %15 : vector<64x128xf32>
    %cst_12 = arith.constant 2.000000e+00 : f32
    %17 = vector.broadcast %cst_12 : f32 to vector<64x128xf32>
    %18 = arith.addf %15, %17 : vector<64x128xf32>
    %19 = tpu.reciprocal %18 {approx = true} : vector<64x128xf32> -> vector<64x128xf32>
    %20 = arith.mulf %16, %19 : vector<64x128xf32>
    %21 = arith.truncf %20 : vector<64x128xf32> to vector<64x128xbf16>
    %c0_13 = arith.constant 0 : index
    %c0_14 = arith.constant 0 : index
    %22 = vector.load %arg6[%c0_13, %c0_14] : memref<64x128xbf16, #tpu.memory_space<vmem>>, vector<64x128xbf16>
    tpu.vector_store %arg6[%c0_13, %c0_14], %21 {strides = array<i32>} : memref<64x128xbf16, #tpu.memory_space<vmem>>, vector<64x128xbf16>,
    return
  }
  func.func @transform_0(%arg0: i32) -> (i32, i32) {
    %c0_i32 = arith.constant 0 : i32
    %c0_i32_0 = arith.constant 0 : i32
    %c0_i32_1 = arith.constant 0 : i32
    return %c0_i32, %c0_i32_0 : i32, i32
  }
  func.func @transform_1(%arg0: i32) -> (i32, i32) {
    %c0_i32 = arith.constant 0 : i32
    %c0_i32_0 = arith.constant 0 : i32
    return %c0_i32, %arg0 : i32, i32
  }
  func.func @transform_2(%arg0: i32) -> (i32, i32) {
    %c0_i32 = arith.constant 0 : i32
    %c0_i32_0 = arith.constant 0 : i32
    %c0_i32_1 = arith.constant 0 : i32
    return %c0_i32, %c0_i32_0 : i32, i32
  }
  func.func @transform_3(%arg0: i32) -> (i32, i32) {
    %c0_i32 = arith.constant 0 : i32
    %c0_i32_0 = arith.constant 0 : i32
    return %c0_i32, %arg0 : i32, i32
  }
  func.func @transform_4(%arg0: i32) -> (i32, i32) {
    %c0_i32 = arith.constant 0 : i32
    %c0_i32_0 = arith.constant 0 : i32
    %c0_i32_1 = arith.constant 0 : i32
    return %c0_i32, %c0_i32_0 : i32, i32
  }
  func.func @transform_5(%arg0: i32) -> (i32, i32) {
    %c0_i32 = arith.constant 0 : i32
    %c0_i32_0 = arith.constant 0 : i32
    return %c0_i32, %arg0 : i32, i32
  }
}

module attributes {stable_mosaic.version = 11 : i64} {
  func.func @_mm2_kernel(%arg0: i32, %arg1: memref<32x64xbf16, #tpu.memory_space<vmem>>, %arg2: memref<64x256xbf16, #tpu.memory_space<vmem>>, %arg3: memref<32x32xbf16, #tpu.memory_space<vmem>>, %arg4: memref<32x256xbf16, #tpu.memory_space<vmem>>, %arg5: memref<32x1xf32, #tpu.memory_space<vmem>>, %arg6: memref<32x256xf32, #tpu.memory_space<vmem>>) attributes {dimension_semantics = [#tpu.dimension_semantics<parallel>], iteration_bounds = array<i64: 2>, scalar_prefetch = 0 : i64, scratch_operands = 0 : i64, tpu.core_type = #tpu.core_type<tc>, window_params = [{pipeline_mode = #tpu.pipeline_mode<synchronous>, transform_indices = @transform_0, window_bounds = array<i64: 32, 64>}, {transform_indices = @transform_1, window_bounds = array<i64: 64, 256>}, {pipeline_mode = #tpu.pipeline_mode<synchronous>, transform_indices = @transform_2, window_bounds = array<i64: 32, 32>}, {transform_indices = @transform_3, window_bounds = array<i64: 32, 256>}, {pipeline_mode = #tpu.pipeline_mode<synchronous>, transform_indices = @transform_4, window_bounds = array<i64: 32, 1>}, {transform_indices = @transform_5, window_bounds = array<i64: 32, 256>}]} {
    %c0 = arith.constant 0 : index
    %c0_0 = arith.constant 0 : index
    %0 = vector.load %arg1[%c0, %c0_0] : memref<32x64xbf16, #tpu.memory_space<vmem>>, vector<32x64xbf16>
    %c0_1 = arith.constant 0 : index
    %c0_2 = arith.constant 0 : index
    %1 = vector.load %arg2[%c0_1, %c0_2] : memref<64x256xbf16, #tpu.memory_space<vmem>>, vector<64x256xbf16>
    %cst = arith.constant dense<0.000000e+00> : vector<32x256xf32>
    %2 = tpu.matmul %0, %1, %cst {dimension_numbers = #tpu.dot_dimension_numbers<[1], [0], [0], [1], [0, 0, 1, 1], [], []>} : vector<32x64xbf16>, vector<64x256xbf16>, vector<32x256xf32> -> vector<32x256xf32>
    %c0_3 = arith.constant 0 : index
    %c0_4 = arith.constant 0 : index
    %3 = vector.load %arg3[%c0_3, %c0_4] : memref<32x32xbf16, #tpu.memory_space<vmem>>, vector<32x32xbf16>
    %c0_5 = arith.constant 0 : index
    %c0_6 = arith.constant 0 : index
    %4 = vector.load %arg4[%c0_5, %c0_6] : memref<32x256xbf16, #tpu.memory_space<vmem>>, vector<32x256xbf16>
    %cst_7 = arith.constant dense<0.000000e+00> : vector<32x256xf32>
    %5 = tpu.matmul %3, %4, %cst_7 {dimension_numbers = #tpu.dot_dimension_numbers<[1], [0], [0], [1], [0, 0, 1, 1], [], []>} : vector<32x32xbf16>, vector<32x256xbf16>, vector<32x256xf32> -> vector<32x256xf32>
    %6 = arith.addf %2, %5 : vector<32x256xf32>
    %c0_8 = arith.constant 0 : index
    %c0_9 = arith.constant 0 : index
    %7 = vector.load %arg5[%c0_8, %c0_9] : memref<32x1xf32, #tpu.memory_space<vmem>>, vector<32x1xf32>
    %8 = vector.broadcast %7 : vector<32x1xf32> to vector<32x256xf32>
    %9 = arith.addf %6, %8 : vector<32x256xf32>
    %cst_10 = arith.constant 2.000000e+01 : f32
    %10 = vector.broadcast %cst_10 : f32 to vector<32x256xf32>
    %11 = arith.minimumf %9, %10 : vector<32x256xf32>
    %12 = math.exp %11 : vector<32x256xf32>
    %cst_11 = arith.constant 2.000000e+00 : f32
    %13 = vector.broadcast %cst_11 : f32 to vector<32x256xf32>
    %14 = arith.addf %12, %13 : vector<32x256xf32>
    %15 = arith.mulf %12, %14 : vector<32x256xf32>
    %16 = arith.mulf %9, %15 : vector<32x256xf32>
    %cst_12 = arith.constant 2.000000e+00 : f32
    %17 = vector.broadcast %cst_12 : f32 to vector<32x256xf32>
    %18 = arith.addf %15, %17 : vector<32x256xf32>
    %19 = tpu.reciprocal %18 {approx = true} : vector<32x256xf32> -> vector<32x256xf32>
    %20 = arith.mulf %16, %19 : vector<32x256xf32>
    %c0_13 = arith.constant 0 : index
    %c0_14 = arith.constant 0 : index
    %21 = vector.load %arg6[%c0_13, %c0_14] : memref<32x256xf32, #tpu.memory_space<vmem>>, vector<32x256xf32>
    tpu.vector_store %arg6[%c0_13, %c0_14], %20 {strides = array<i32>} : memref<32x256xf32, #tpu.memory_space<vmem>>, vector<32x256xf32>,
    return
  }
  func.func @transform_0(%arg0: i32) -> (i32, i32) {
    %c0_i32 = arith.constant 0 : i32
    %c0_i32_0 = arith.constant 0 : i32
    %c0_i32_1 = arith.constant 0 : i32
    return %c0_i32, %c0_i32_0 : i32, i32
  }
  func.func @transform_1(%arg0: i32) -> (i32, i32) {
    %c0_i32 = arith.constant 0 : i32
    %c0_i32_0 = arith.constant 0 : i32
    return %c0_i32, %arg0 : i32, i32
  }
  func.func @transform_2(%arg0: i32) -> (i32, i32) {
    %c0_i32 = arith.constant 0 : i32
    %c0_i32_0 = arith.constant 0 : i32
    %c0_i32_1 = arith.constant 0 : i32
    return %c0_i32, %c0_i32_0 : i32, i32
  }
  func.func @transform_3(%arg0: i32) -> (i32, i32) {
    %c0_i32 = arith.constant 0 : i32
    %c0_i32_0 = arith.constant 0 : i32
    return %c0_i32, %arg0 : i32, i32
  }
  func.func @transform_4(%arg0: i32) -> (i32, i32) {
    %c0_i32 = arith.constant 0 : i32
    %c0_i32_0 = arith.constant 0 : i32
    %c0_i32_1 = arith.constant 0 : i32
    return %c0_i32, %c0_i32_0 : i32, i32
  }
  func.func @transform_5(%arg0: i32) -> (i32, i32) {
    %c0_i32 = arith.constant 0 : i32
    %c0_i32_0 = arith.constant 0 : i32
    return %c0_i32, %arg0 : i32, i32
  }
}

</mosaic_0001>

<llo_original>
// kernel: hourglass_forward.6
$region0: #{hourglass_forward.6}
  #allocation0 [shape = 'u32[]', space=smem, size = 0x4, offset = 0x4, fixed_abs, tag = 'smem constant byte address 0x4 - core index']
  #allocation1 [shape = 'u32[72,128]{1,0:T(1,128)}', space=vmem, size = 0x9000, scoped, tag = 'internal scratch']
  %s0 = inlined_call_operand.vmem [shape: bf16[8,108], index: 0, kind: input, shape index: {}]
  %s1 = inlined_call_operand.vmem [shape: bf16[108,512], index: 1, kind: input, shape index: {}]
  %s2 = inlined_call_operand.vmem [shape: f32[8,1], index: 2, kind: input, shape index: {}]
  %s3 = inlined_call_operand.vmem [shape: bf16[8,512], index: 3, kind: output, shape index: {}]
  %s4 = sld [smem:[#allocation0]]
  $region83: #{hourglass_forward.6} parent=0
    _
  %s6 = ssub.s32 1, %s4
  %s7 = scalar_select 0, %s6, %s4
  $region1: #{hourglass_forward.6} parent=0
    #allocation2 [shape = 'u8[114688]{0}', space=vmem, size = 0x1c000, scoped, tag = 'input window, operand 1']
    loop: start=0, step=1, limit=4
    $region2: #{hourglass_forward.6} parent=1 // loop_pre_header
      _
    $region3: #{hourglass_forward.6} parent=1 // loop_header
      %s9 = sphi 0, %s13
      %p10 = scmp.ge.s32.totalorder %s9, 4
      %s17 = sphi 0, %s17
      %s19 = sphi 0, %s17
      %s20 = sphi 0, %s19
      %s34 = sphi 0, %s20
      %s40 = sphi 0, %s42
      %s43 = sphi 0, %s40
      %s44 = sphi 0, %s43
      %s60 = sphi 0, %s44
      %s64 = sphi 0, %s64
      %s66 = sphi 0, %s64
      %s67 = sphi 0, %s66
      %s81 = sphi 0, %s67
      %s87 = sphi 0, %s89
      %s90 = sphi 0, %s87
      %s91 = sphi 0, %s90
      %s107 = sphi 0, %s91
    $region4: #{hourglass_forward.6} parent=1 // loop_header_branch
      %12 = sbr.rel (%p10) target = $region8
    $region5: #{hourglass_forward.6} parent=1 // loop_body
      %s14 = ssub.s32 %s9, 1
      %s15 = ssub.s32 %s9, 2
      %s16 = sadd.s32 %s9, 1
      %s18 = sadd.s32 %s17, 1
      %p21 = scmp.eq.s32.totalorder %s9, 1
      %p22 = scmp.ne.s32.totalorder %s17, %s19
      %p23 = scmp.eq.s32.totalorder %s9, 0
      %p24 = por %p22, %p23
      %p25 = scmp.ne.s32.totalorder %s17, %s19
      %p26 = scmp.eq.s32.totalorder %s14, 1
      %p27 = por %p25, %p26
      %p28 = scmp.ne.s32.totalorder %s19, %s20
      %p29 = scmp.eq.s32.totalorder %s14, 0
      %p30 = por %p28, %p29
      %p31 = scmp.ne.s32.totalorder %s19, %s20
      %p32 = scmp.eq.s32.totalorder %s15, 1
      %p33 = por %p31, %p32
      %p35 = scmp.ne.s32.totalorder %s20, %s34
      %p36 = scmp.eq.s32.totalorder %s15, 0
      %p37 = por %p35, %p36
      %s38 = ssub.s32 %s9, %s16
      %p39 = scmp.eq.s32.totalorder %s38, 0
      %s41 = sadd.s32 %s40, 1
      %s42 = scalar_select %p39, %s40, %s41
      %p45 = pneg %p39
      %p46 = scmp.eq.s32.totalorder %s9, 1
      %p47 = por %p45, %p46
      %p48 = scmp.ne.s32.totalorder %s40, %s43
      %p49 = scmp.eq.s32.totalorder %s9, 0
      %p50 = por %p48, %p49
      %p51 = scmp.ne.s32.totalorder %s40, %s43
      %p52 = scmp.eq.s32.totalorder %s14, 1
      %p53 = por %p51, %p52
      %p54 = scmp.ne.s32.totalorder %s43, %s44
      %p55 = scmp.eq.s32.totalorder %s14, 0
      %p56 = por %p54, %p55
      %p57 = scmp.ne.s32.totalorder %s43, %s44
      %p58 = scmp.eq.s32.totalorder %s15, 1
      %p59 = por %p57, %p58
      %p61 = scmp.ne.s32.totalorder %s44, %s60
      %p62 = scmp.eq.s32.totalorder %s15, 0
      %p63 = por %p61, %p62
      %s65 = sadd.s32 %s64, 1
      %p68 = scmp.eq.s32.totalorder %s9, 1
      %p69 = scmp.ne.s32.totalorder %s64, %s66
      %p70 = scmp.eq.s32.totalorder %s9, 0
      %p71 = por %p69, %p70
      %p72 = scmp.ne.s32.totalorder %s64, %s66
      %p73 = scmp.eq.s32.totalorder %s14, 1
      %p74 = por %p72, %p73
      %p75 = scmp.ne.s32.totalorder %s66, %s67
      %p76 = scmp.eq.s32.totalorder %s14, 0
      %p77 = por %p75, %p76
      %p78 = scmp.ne.s32.totalorder %s66, %s67
      %p79 = scmp.eq.s32.totalorder %s15, 1
      %p80 = por %p78, %p79
      %p82 = scmp.ne.s32.totalorder %s67, %s81
      %p83 = scmp.eq.s32.totalorder %s15, 0
      %p84 = por %p82, %p83
      %s85 = ssub.s32 %s9, %s16
      %p86 = scmp.eq.s32.totalorder %s85, 0
      %s88 = sadd.s32 %s87, 1
      %s89 = scalar_select %p86, %s87, %s88
      %p92 = pneg %p86
      %p93 = scmp.eq.s32.totalorder %s9, 1
      %p94 = por %p92, %p93
      %p95 = scmp.ne.s32.totalorder %s87, %s90
      %p96 = scmp.eq.s32.totalorder %s9, 0
      %p97 = por %p95, %p96
      %p98 = scmp.ne.s32.totalorder %s87, %s90
      %p99 = scmp.eq.s32.totalorder %s14, 1
      %p100 = por %p98, %p99
      %p101 = scmp.ne.s32.totalorder %s90, %s91
      %p102 = scmp.eq.s32.totalorder %s14, 0
      %p103 = por %p101, %p102
      %p104 = scmp.ne.s32.totalorder %s90, %s91
      %p105 = scmp.eq.s32.totalorder %s15, 1
      %p106 = por %p104, %p105
      %p108 = scmp.ne.s32.totalorder %s91, %s107
      %p109 = scmp.eq.s32.totalorder %s15, 0
      %p110 = por %p108, %p109
      %p111 = scmp.le.s32.totalorder 1, %s9
      %p112 = scmp.lt.s32.totalorder %s9, 3
      %p113 = pnand %p111, %p112
      %p114 = pneg %p113
      // Predicated region
      $region9: #{hourglass_forward.6} parent=5 // pred_check
        _
      $region10: #{hourglass_forward.6} parent=5 // pred_check_branch
        %116 = sbr.rel (%p113) target = $region12
      $region11: #{hourglass_forward.6} parent=5 // pred_region
        %s117 = ssub.s32 %s9, 1
        // Predicated region
        $region13: #{hourglass_forward.6} parent=11 // pred_check
          %p118 = pneg %p30
        $region14: #{hourglass_forward.6} parent=11 // pred_check_branch
          %120 = sbr.rel (%p118) target = $region16
        $region15: #{hourglass_forward.6} parent=11 // pred_region
          _
        $region16: #{hourglass_forward.6} parent=11 // pred_fallthru
          _
        // Predicated region
        $region17: #{hourglass_forward.6} parent=11 // pred_check
          %p121 = pneg %p77
        $region18: #{hourglass_forward.6} parent=11 // pred_check_branch
          %123 = sbr.rel (%p121) target = $region20
        $region19: #{hourglass_forward.6} parent=11 // pred_region
          _
        $region20: #{hourglass_forward.6} parent=11 // pred_fallthru
          _
      $region12: #{hourglass_forward.6} parent=5 // pred_fallthru
        _
      %p124 = scmp.lt.s32.totalorder %s9, 2
      // Predicated region
      $region21: #{hourglass_forward.6} parent=5 // pred_check
        %p125 = pneg %p124
      $region22: #{hourglass_forward.6} parent=5 // pred_check_branch
        %127 = sbr.rel (%p125) target = $region24
      $region23: #{hourglass_forward.6} parent=5 // pred_region
        // Predicated region
        $region25: #{hourglass_forward.6} parent=23 // pred_check
          %p128 = pneg %p50
        $region26: #{hourglass_forward.6} parent=23 // pred_check_branch
          %130 = sbr.rel (%p128) target = $region28
        $region27: #{hourglass_forward.6} parent=23 // pred_region
          %s131 = sand.u32 %s40, 1
          %s132 = sand.u32 %s40, 1
          %s133 = smul.addr %s132, 112
          %s134 = scalar_lea.vmem [#allocation2], %s133
          %s135 = smul.u32 2, %s9
          %s136 = smul.addr %s135, 4
          %s137 = scalar_lea.vmem %s1, %s136
          // Predicated region
          $region29: #{hourglass_forward.6} parent=27 // pred_check
            _
          $region30: #{hourglass_forward.6} parent=27 // pred_check_branch
            %139 = sbr.rel (0) target = $region32
          $region31: #{hourglass_forward.6} parent=27 // pred_region
            // Predicated region
            $region33: #{hourglass_forward.6} parent=31 // pred_check
              _
            $region34: #{hourglass_forward.6} parent=31 // pred_check_branch
              %141 = sbr.rel (0) target = $region36
            $region35: #{hourglass_forward.6} parent=31 // pred_region
              // Predicated region
              $region48: #{hourglass_forward.6} parent=35 // pred_check
                _
              $region49: #{hourglass_forward.6} parent=35 // pred_check_branch
                %183 = sbr.rel (0) target = $region51
              $region50: #{hourglass_forward.6} parent=35 // pred_region
                loop: start=0, step=1, limit=1
                $region52: #{hourglass_forward.6} parent=50 // loop_pre_header
                  _
                $region53: #{hourglass_forward.6} parent=50 // loop_header
                  %s185 = sphi 0, %s189
                  %p186 = scmp.ge.s32.totalorder %s185, 1
                  %s190 = sphi %s137, %s137
                  %s191 = sphi %s134, %s134
                $region54: #{hourglass_forward.6} parent=50 // loop_header_branch
                  %188 = sbr.rel (%p186) target = $region58
                $region55: #{hourglass_forward.6} parent=50 // loop_body
                  %v192 = vld [vmem:[%s190] sm:$0xff]
                  %193 = vst [vmem:[%s191] sm:$0xff] %v192
                  %v194 = vld [vmem:[%s190 + $0x10] sm:$0xff]
                  %195 = vst [vmem:[%s191 + $0x8] sm:$0xff] %v194
                  %v196 = vld [vmem:[%s190 + $0x20] sm:$0xff]
                  %197 = vst [vmem:[%s191 + $0x10] sm:$0xff] %v196
                  %v198 = vld [vmem:[%s190 + $0x30] sm:$0xff]
                  %199 = vst [vmem:[%s191 + $0x18] sm:$0xff] %v198
                  %v200 = vld [vmem:[%s190 + $0x40] sm:$0xff]
                  %201 = vst [vmem:[%s191 + $0x20] sm:$0xff] %v200
                  %v202 = vld [vmem:[%s190 + $0x50] sm:$0xff]
                  %203 = vst [vmem:[%s191 + $0x28] sm:$0xff] %v202
                  %v204 = vld [vmem:[%s190 + $0x60] sm:$0xff]
                  %205 = vst [vmem:[%s191 + $0x30] sm:$0xff] %v204
                  %v206 = vld [vmem:[%s190 + $0x70] sm:$0xff]
                  %207 = vst [vmem:[%s191 + $0x38] sm:$0xff] %v206
                  %v208 = vld [vmem:[%s190 + $0x80] sm:$0xff]
                  %209 = vst [vmem:[%s191 + $0x40] sm:$0xff] %v208
                  %v210 = vld [vmem:[%s190 + $0x90] sm:$0xff]
                  %211 = vst [vmem:[%s191 + $0x48] sm:$0xff] %v210
                  %v212 = vld [vmem:[%s190 + $0xa0] sm:$0xff]
                  %213 = vst [vmem:[%s191 + $0x50] sm:$0xff] %v212
                  %v214 = vld [vmem:[%s190 + $0xb0] sm:$0xff]
                  %215 = vst [vmem:[%s191 + $0x58] sm:$0xff] %v214
                  %v216 = vld [vmem:[%s190 + $0xc0] sm:$0xff]
                  %217 = vst [vmem:[%s191 + $0x60] sm:$0xff] %v216
                  %v218 = vld [vmem:[%s190 + $0xd0] sm:$0xff]
                  %219 = vst [vmem:[%s191 + $0x68] sm:$0xff] %v218
                $region56: #{hourglass_forward.6} parent=50 // loop_footer
                  %s189 = sadd.s32 1, %s185
                $region57: #{hourglass_forward.6} parent=50 // loop_footer_branch
                  %184 = sbr.rel target = $region53
                $region58: #{hourglass_forward.6} parent=50 // loop_exit
                  _
              $region51: #{hourglass_forward.6} parent=35 // pred_fallthru
                _
              // Predicated region
              $region59: #{hourglass_forward.6} parent=35 // pred_check
                _
              $region60: #{hourglass_forward.6} parent=35 // pred_check_branch
                %221 = sbr.rel target = $region62
              $region61: #{hourglass_forward.6} parent=35 // pred_region
                _
              $region62: #{hourglass_forward.6} parent=35 // pred_fallthru
                _
            $region36: #{hourglass_forward.6} parent=31 // pred_fallthru
              _
            // Predicated region
            $region37: #{hourglass_forward.6} parent=31 // pred_check
              _
            $region38: #{hourglass_forward.6} parent=31 // pred_check_branch
              %143 = sbr.rel target = $region40
            $region39: #{hourglass_forward.6} parent=31 // pred_region
              %s145 = ssub.s32 256, 1
              loop: start=0, step=1, limit=1
              $region41: #{hourglass_forward.6} parent=39 // loop_pre_header
                _
              $region42: #{hourglass_forward.6} parent=39 // loop_header
                %s147 = sphi 0, %s151
                %p148 = scmp.ge.s32.totalorder %s147, 1
                %s152 = sphi %s137, %s137
                %s153 = sphi %s134, %s134
              $region43: #{hourglass_forward.6} parent=39 // loop_header_branch
                %150 = sbr.rel (%p148) target = $region47
              $region44: #{hourglass_forward.6} parent=39 // loop_body
                %v154 = vld [vmem:[%s152] sm:%s145]
                %155 = vst [vmem:[%s153] sm:%s145] %v154
                %v156 = vld [vmem:[%s152 + $0x10] sm:%s145]
                %157 = vst [vmem:[%s153 + $0x8] sm:%s145] %v156
                %v158 = vld [vmem:[%s152 + $0x20] sm:%s145]
                %159 = vst [vmem:[%s153 + $0x10] sm:%s145] %v158
                %v160 = vld [vmem:[%s152 + $0x30] sm:%s145]
                %161 = vst [vmem:[%s153 + $0x18] sm:%s145] %v160
                %v162 = vld [vmem:[%s152 + $0x40] sm:%s145]
                %163 = vst [vmem:[%s153 + $0x20] sm:%s145] %v162
                %v164 = vld [vmem:[%s152 + $0x50] sm:%s145]
                %165 = vst [vmem:[%s153 + $0x28] sm:%s145] %v164
                %v166 = vld [vmem:[%s152 + $0x60] sm:%s145]
                %167 = vst [vmem:[%s153 + $0x30] sm:%s145] %v166
                %v168 = vld [vmem:[%s152 + $0x70] sm:%s145]
                %169 = vst [vmem:[%s153 + $0x38] sm:%s145] %v168
                %v170 = vld [vmem:[%s152 + $0x80] sm:%s145]
                %171 = vst [vmem:[%s153 + $0x40] sm:%s145] %v170
                %v172 = vld [vmem:[%s152 + $0x90] sm:%s145]
                %173 = vst [vmem:[%s153 + $0x48] sm:%s145] %v172
                %v174 = vld [vmem:[%s152 + $0xa0] sm:%s145]
                %175 = vst [vmem:[%s153 + $0x50] sm:%s145] %v174
                %v176 = vld [vmem:[%s152 + $0xb0] sm:%s145]
                %177 = vst [vmem:[%s153 + $0x58] sm:%s145] %v176
                %v178 = vld [vmem:[%s152 + $0xc0] sm:%s145]
                %179 = vst [vmem:[%s153 + $0x60] sm:%s145] %v178
                %v180 = vld [vmem:[%s152 + $0xd0] sm:%s145]
                %181 = vst [vmem:[%s153 + $0x68] sm:%s145] %v180
              $region45: #{hourglass_forward.6} parent=39 // loop_footer
                %s151 = sadd.s32 1, %s147
              $region46: #{hourglass_forward.6} parent=39 // loop_footer_branch
                %146 = sbr.rel target = $region42
              $region47: #{hourglass_forward.6} parent=39 // loop_exit
                _
            $region40: #{hourglass_forward.6} parent=31 // pred_fallthru
              _
          $region32: #{hourglass_forward.6} parent=27 // pred_fallthru
            _
          %222 = vnop
        $region28: #{hourglass_forward.6} parent=23 // pred_fallthru
          _
      $region24: #{hourglass_forward.6} parent=5 // pred_fallthru
        _
      %p223 = scmp.le.s32.totalorder 1, %s9
      %p224 = scmp.lt.s32.totalorder %s9, 3
      %p225 = pnand %p223, %p224
      %p226 = pneg %p225
      // Predicated region
      $region63: #{hourglass_forward.6} parent=5 // pred_check
        _
      $region64: #{hourglass_forward.6} parent=5 // pred_check_branch
        %228 = sbr.rel (%p225) target = $region66
      $region65: #{hourglass_forward.6} parent=5 // pred_region
        %s229 = ssub.s32 %s9, 1
        %s230 = sand.u32 %s43, 1
        %s231 = sand.u32 %s43, 1
        %s232 = smul.addr %s231, 112
        %s233 = scalar_lea.vmem [#allocation2], %s232
        // Predicated region
        $region67: #{hourglass_forward.6} parent=65 // pred_check
          %p234 = pneg %p56
        $region68: #{hourglass_forward.6} parent=65 // pred_check_branch
          %236 = sbr.rel (%p234) target = $region70
        $region69: #{hourglass_forward.6} parent=65 // pred_region
          _
        $region70: #{hourglass_forward.6} parent=65 // pred_fallthru
          _
        %p237 = pneg %p30
        %p238 = pneg %p27
        %s239 = sand.u32 %s43, 1
        %s240 = sand.u32 %s43, 1
        %s241 = smul.addr %s240, 112
        %s242 = scalar_lea.vmem [#allocation2], %s241
        %p243 = pneg %p56
        %p244 = pneg %p53
        %p245 = pneg %p77
        %p246 = pneg %p74
        %p247 = pneg %p103
        %p248 = pneg %p100
        %s249 = smul.u32 2, %s14
        %p250 = scmp.lt.s32.totalorder %s249, 3
        %s251 = scalar_select %p250, %s249, 3
        %s252 = smul.addr %s251, 4
        %s253 = scalar_lea.vmem %s3, %s252
        %s254 = smul.u32 2, %s14
        %s255 = smul.u32 2, %s14
        %p256 = scmp.lt.s32.totalorder %s255, 3
        %s257 = scalar_select %p256, %s255, 3
        %s258 = smul.addr %s257, 4
        %s259 = scalar_lea.vmem %s3, %s258
        %s260 = smul.u32 2, %s14
        %v262 = vld [vmem:[%s0] sm:$0xf]
        %v263 = vld [vmem:[%s233] sm:$0xff]
        %v264 = vld [vmem:[%s233 + $0x8] sm:$0xff]
        %v265 = vld [vmem:[%s233 + $0x10] sm:$0xff]
        %v266 = vld [vmem:[%s233 + $0x18] sm:$0xff]
        %v267 = vld [vmem:[%s233 + $0x20] sm:$0xff]
        %v268 = vld [vmem:[%s233 + $0x28] sm:$0xff]
        %v269 = vld [vmem:[%s233 + $0x30] sm:$0xff]
        %v270 = vld [vmem:[%s233 + $0x38] sm:$0xff]
        %v271 = vld [vmem:[%s233 + $0x40] sm:$0xff]
        %v272 = vld [vmem:[%s233 + $0x48] sm:$0xff]
        %v273 = vld [vmem:[%s233 + $0x50] sm:$0xff]
        %v274 = vld [vmem:[%s233 + $0x58] sm:$0xff]
        %v275 = vld [vmem:[%s233 + $0x60] sm:$0xff]
        %v276 = vld [vmem:[%s233 + $0x68] sm:$0x33]
        %v277 = vld [vmem:[%s2] sm:$0xff]
        %279 = vset.pattern.permute.xlu0 0
        %280 = vperm.xlu0 %279, %v277
        %v281 = vpop.permute.xlu0 %280
        %v297 = vunpack.c.l.b16 %v263
        %v298 = vunpack.c.h.b16 %v263
        %v299 = vunpack.c.l.b16 %v264
        %v300 = vunpack.c.h.b16 %v264
        %v301 = vunpack.c.l.b16 %v265
        %v302 = vunpack.c.h.b16 %v265
        %v303 = vunpack.c.l.b16 %v266
        %v304 = vunpack.c.h.b16 %v266
        %v305 = vunpack.c.l.b16 %v267
        %v306 = vunpack.c.h.b16 %v267
        %v307 = vunpack.c.l.b16 %v268
        %v308 = vunpack.c.h.b16 %v268
        %v309 = vunpack.c.l.b16 %v269
        %v310 = vunpack.c.h.b16 %v269
        %v311 = vunpack.c.l.b16 %v270
        %v312 = vunpack.c.h.b16 %v270
        %v313 = vunpack.c.l.b16 %v271
        %v314 = vunpack.c.h.b16 %v271
        %v315 = vunpack.c.l.b16 %v272
        %v316 = vunpack.c.h.b16 %v272
        %v317 = vunpack.c.l.b16 %v273
        %v318 = vunpack.c.h.b16 %v273
        %v319 = vunpack.c.l.b16 %v274
        %v320 = vunpack.c.h.b16 %v274
        %v321 = vunpack.c.l.b16 %v275
        %v322 = vunpack.c.h.b16 %v275
        %v323 = vunpack.c.l.b16 %v276
        %v324 = vunpack.c.h.b16 %v276
        %v325 = vpack.c.b16 %v299, %v297
        %v326 = vpack.c.b16 %v300, %v298
        %v327 = vpack.c.b16 %v303, %v301
        %v328 = vpack.c.b16 %v304, %v302
        %v329 = vpack.c.b16 %v307, %v305
        %v330 = vpack.c.b16 %v308, %v306
        %v331 = vpack.c.b16 %v311, %v309
        %v332 = vpack.c.b16 %v312, %v310
        %v333 = vpack.c.b16 %v315, %v313
        %v334 = vpack.c.b16 %v316, %v314
        %v335 = vpack.c.b16 %v319, %v317
        %v336 = vpack.c.b16 %v320, %v318
        %v337 = vpack.c.b16 %v323, %v321
        %v338 = vpack.c.b16 %v324, %v322
        %vm351 = vcmask 883712
        %v353 = vsel %vm351, %v262, 0
        %vm355 = vcmask 1045504
        %v357 = vsel %vm355, %v337, 0
        %v360 = vsel %vm355, %v338, 0
        %362 = vmatpush.bf16.msra.mxu0 0
        %363 = vmatpush.bf16.msra.mxu0 %v357
        %364 = vmatpush.bf16.msra.mxu0 %v335
        %365 = vmatpush.bf16.msra.mxu0 %v333
        %366 = vmatpush.bf16.msra.mxu0 %v331
        %367 = vmatpush.bf16.msra.mxu0 %v329
        %368 = vmatpush.bf16.msra.mxu0 %v327
        %369 = vmatpush.bf16.msra.mxu0 %v325
        %370 = vmatmul.bf16.gmra.mxu0 %v353
        %v371 = vpop.f32.mrf.mxu0
        %v372 = vadd.f32 %v281, %v371
        %v373 = vpop.f32.mrf.mxu0
        %374 = vdwg.mxu0
        %375 = vmatpush.bf16.msra.mxu0 0
        %376 = vmatpush.bf16.msra.mxu0 %v360
        %377 = vmatpush.bf16.msra.mxu0 %v336
        %378 = vmatpush.bf16.msra.mxu0 %v334
        %379 = vmatpush.bf16.msra.mxu0 %v332
        %380 = vmatpush.bf16.msra.mxu0 %v330
        %381 = vmatpush.bf16.msra.mxu0 %v328
        %382 = vmatpush.bf16.msra.mxu0 %v326
        %383 = vmatmul.bf16.gmra.mxu0 %v353
        %v384 = vpop.f32.mrf.mxu0
        %v385 = vadd.f32 %v281, %v384
        %v386 = vpop.f32.mrf.mxu0
        %387 = vdwg.mxu0
        %v388 = vmin.f32 %v372, 20.0
        %v389 = vmin.f32 %v385, 20.0
        %v390 = vmul.f32 %v388, 1.442695
        %v391 = vpow.pop %v390
        %v392 = vmul.f32 %v389, 1.442695
        %v393 = vpow.pop %v392
        %v394 = vadd.f32 %v391, 2.0
        %v395 = vadd.f32 %v393, 2.0
        %v396 = vmul.f32 %v391, %v394
        %v397 = vmul.f32 %v393, %v395
        %v398 = vmul.f32 %v372, %v396
        %v399 = vmul.f32 %v385, %v397
        %v400 = vadd.f32 %v396, 2.0
        %v401 = vadd.f32 %v397, 2.0
        %v402 = vrcp.pop %v400
        %v403 = vrcp.pop %v401
        %v404 = vmul.f32 %v398, %v402
        %v405 = vmul.f32 %v399, %v403
        %v406 = vpack.c.bf16 %v405, %v404
        %407 = vst [vmem:[%s259] sm:$0xff] %v406
        %s408 = smul.u32 2, %s14
        %p409 = scmp.lt.s32.totalorder %s408, 3
        %s410 = scalar_select %p409, %s408, 3
        %s411 = smul.addr %s410, 4
        %s412 = scalar_lea.vmem %s3, %s411
        // Predicated region
        $region71: #{hourglass_forward.6} parent=65 // pred_check
          %p413 = pneg %p100
        $region72: #{hourglass_forward.6} parent=65 // pred_check_branch
          %415 = sbr.rel (%p413) target = $region74
        $region73: #{hourglass_forward.6} parent=65 // pred_region
          %s416 = smul.u32 2, %s14
        $region74: #{hourglass_forward.6} parent=65 // pred_fallthru
          _
      $region66: #{hourglass_forward.6} parent=5 // pred_fallthru
        _
      %p417 = scmp.le.s32.totalorder 2, %s9
      // Predicated region
      $region75: #{hourglass_forward.6} parent=5 // pred_check
        %p418 = pneg %p417
      $region76: #{hourglass_forward.6} parent=5 // pred_check_branch
        %420 = sbr.rel (%p418) target = $region78
      $region77: #{hourglass_forward.6} parent=5 // pred_region
        %s421 = ssub.s32 %s9, 2
        // Predicated region
        $region79: #{hourglass_forward.6} parent=77 // pred_check
          %p422 = pneg %p106
        $region80: #{hourglass_forward.6} parent=77 // pred_check_branch
          %424 = sbr.rel (%p422) target = $region82
        $region81: #{hourglass_forward.6} parent=77 // pred_region
          %s425 = smul.u32 2, %s15
          %p426 = scmp.lt.s32.totalorder %s425, 3
          %s427 = scalar_select %p426, %s425, 3
          %s428 = smul.addr %s427, 4
          %s429 = scalar_lea.vmem %s3, %s428
        $region82: #{hourglass_forward.6} parent=77 // pred_fallthru
          _
      $region78: #{hourglass_forward.6} parent=5 // pred_fallthru
        _
    $region6: #{hourglass_forward.6} parent=1 // loop_footer
      %s13 = sadd.s32 1, %s9
    $region7: #{hourglass_forward.6} parent=1 // loop_footer_branch
      %8 = sbr.rel target = $region3
    $region8: #{hourglass_forward.6} parent=1 // loop_exit
      _

// kernel: hourglass_forward.7
$region0: #{hourglass_forward.7}
  #allocation0 [shape = 'u32[]', space=smem, size = 0x4, offset = 0x4, fixed_abs, tag = 'smem constant byte address 0x4 - core index']
  #allocation1 [shape = 'u32[72,128]{1,0:T(1,128)}', space=vmem, size = 0x9000, scoped, tag = 'internal scratch']
  %s0 = inlined_call_operand.vmem [shape: bf16[8,216], index: 0, kind: input, shape index: {}]
  %s1 = inlined_call_operand.vmem [shape: bf16[216,512], index: 1, kind: input, shape index: {}]
  %s2 = inlined_call_operand.vmem [shape: f32[8,1], index: 2, kind: input, shape index: {}]
  %s3 = inlined_call_operand.vmem [shape: bf16[8,512], index: 3, kind: output, shape index: {}]
  %s4 = sld [smem:[#allocation0]]
  $region83: #{hourglass_forward.7} parent=0
    _
  %s6 = ssub.s32 1, %s4
  %s7 = scalar_select 0, %s6, %s4
  $region1: #{hourglass_forward.7} parent=0
    #allocation2 [shape = 'u8[221184]{0}', space=vmem, size = 0x36000, scoped, tag = 'input window, operand 1']
    loop: start=0, step=1, limit=4
    $region2: #{hourglass_forward.7} parent=1 // loop_pre_header
      _
    $region3: #{hourglass_forward.7} parent=1 // loop_header
      %s9 = sphi 0, %s13
      %p10 = scmp.ge.s32.totalorder %s9, 4
      %s17 = sphi 0, %s17
      %s19 = sphi 0, %s17
      %s20 = sphi 0, %s19
      %s34 = sphi 0, %s20
      %s40 = sphi 0, %s42
      %s43 = sphi 0, %s40
      %s44 = sphi 0, %s43
      %s60 = sphi 0, %s44
      %s64 = sphi 0, %s64
      %s66 = sphi 0, %s64
      %s67 = sphi 0, %s66
      %s81 = sphi 0, %s67
      %s87 = sphi 0, %s89
      %s90 = sphi 0, %s87
      %s91 = sphi 0, %s90
      %s107 = sphi 0, %s91
    $region4: #{hourglass_forward.7} parent=1 // loop_header_branch
      %12 = sbr.rel (%p10) target = $region8
    $region5: #{hourglass_forward.7} parent=1 // loop_body
      %s14 = ssub.s32 %s9, 1
      %s15 = ssub.s32 %s9, 2
      %s16 = sadd.s32 %s9, 1
      %s18 = sadd.s32 %s17, 1
      %p21 = scmp.eq.s32.totalorder %s9, 1
      %p22 = scmp.ne.s32.totalorder %s17, %s19
      %p23 = scmp.eq.s32.totalorder %s9, 0
      %p24 = por %p22, %p23
      %p25 = scmp.ne.s32.totalorder %s17, %s19
      %p26 = scmp.eq.s32.totalorder %s14, 1
      %p27 = por %p25, %p26
      %p28 = scmp.ne.s32.totalorder %s19, %s20
      %p29 = scmp.eq.s32.totalorder %s14, 0
      %p30 = por %p28, %p29
      %p31 = scmp.ne.s32.totalorder %s19, %s20
      %p32 = scmp.eq.s32.totalorder %s15, 1
      %p33 = por %p31, %p32
      %p35 = scmp.ne.s32.totalorder %s20, %s34
      %p36 = scmp.eq.s32.totalorder %s15, 0
      %p37 = por %p35, %p36
      %s38 = ssub.s32 %s9, %s16
      %p39 = scmp.eq.s32.totalorder %s38, 0
      %s41 = sadd.s32 %s40, 1
      %s42 = scalar_select %p39, %s40, %s41
      %p45 = pneg %p39
      %p46 = scmp.eq.s32.totalorder %s9, 1
      %p47 = por %p45, %p46
      %p48 = scmp.ne.s32.totalorder %s40, %s43
      %p49 = scmp.eq.s32.totalorder %s9, 0
      %p50 = por %p48, %p49
      %p51 = scmp.ne.s32.totalorder %s40, %s43
      %p52 = scmp.eq.s32.totalorder %s14, 1
      %p53 = por %p51, %p52
      %p54 = scmp.ne.s32.totalorder %s43, %s44
      %p55 = scmp.eq.s32.totalorder %s14, 0
      %p56 = por %p54, %p55
      %p57 = scmp.ne.s32.totalorder %s43, %s44
      %p58 = scmp.eq.s32.totalorder %s15, 1
      %p59 = por %p57, %p58
      %p61 = scmp.ne.s32.totalorder %s44, %s60
      %p62 = scmp.eq.s32.totalorder %s15, 0
      %p63 = por %p61, %p62
      %s65 = sadd.s32 %s64, 1
      %p68 = scmp.eq.s32.totalorder %s9, 1
      %p69 = scmp.ne.s32.totalorder %s64, %s66
      %p70 = scmp.eq.s32.totalorder %s9, 0
      %p71 = por %p69, %p70
      %p72 = scmp.ne.s32.totalorder %s64, %s66
      %p73 = scmp.eq.s32.totalorder %s14, 1
      %p74 = por %p72, %p73
      %p75 = scmp.ne.s32.totalorder %s66, %s67
      %p76 = scmp.eq.s32.totalorder %s14, 0
      %p77 = por %p75, %p76
      %p78 = scmp.ne.s32.totalorder %s66, %s67
      %p79 = scmp.eq.s32.totalorder %s15, 1
      %p80 = por %p78, %p79
      %p82 = scmp.ne.s32.totalorder %s67, %s81
      %p83 = scmp.eq.s32.totalorder %s15, 0
      %p84 = por %p82, %p83
      %s85 = ssub.s32 %s9, %s16
      %p86 = scmp.eq.s32.totalorder %s85, 0
      %s88 = sadd.s32 %s87, 1
      %s89 = scalar_select %p86, %s87, %s88
      %p92 = pneg %p86
      %p93 = scmp.eq.s32.totalorder %s9, 1
      %p94 = por %p92, %p93
      %p95 = scmp.ne.s32.totalorder %s87, %s90
      %p96 = scmp.eq.s32.totalorder %s9, 0
      %p97 = por %p95, %p96
      %p98 = scmp.ne.s32.totalorder %s87, %s90
      %p99 = scmp.eq.s32.totalorder %s14, 1
      %p100 = por %p98, %p99
      %p101 = scmp.ne.s32.totalorder %s90, %s91
      %p102 = scmp.eq.s32.totalorder %s14, 0
      %p103 = por %p101, %p102
      %p104 = scmp.ne.s32.totalorder %s90, %s91
      %p105 = scmp.eq.s32.totalorder %s15, 1
      %p106 = por %p104, %p105
      %p108 = scmp.ne.s32.totalorder %s91, %s107
      %p109 = scmp.eq.s32.totalorder %s15, 0
      %p110 = por %p108, %p109
      %p111 = scmp.le.s32.totalorder 1, %s9
      %p112 = scmp.lt.s32.totalorder %s9, 3
      %p113 = pnand %p111, %p112
      %p114 = pneg %p113
      // Predicated region
      $region9: #{hourglass_forward.7} parent=5 // pred_check
        _
      $region10: #{hourglass_forward.7} parent=5 // pred_check_branch
        %116 = sbr.rel (%p113) target = $region12
      $region11: #{hourglass_forward.7} parent=5 // pred_region
        %s117 = ssub.s32 %s9, 1
        // Predicated region
        $region13: #{hourglass_forward.7} parent=11 // pred_check
          %p118 = pneg %p30
        $region14: #{hourglass_forward.7} parent=11 // pred_check_branch
          %120 = sbr.rel (%p118) target = $region16
        $region15: #{hourglass_forward.7} parent=11 // pred_region
          _
        $region16: #{hourglass_forward.7} parent=11 // pred_fallthru
          _
        // Predicated region
        $region17: #{hourglass_forward.7} parent=11 // pred_check
          %p121 = pneg %p77
        $region18: #{hourglass_forward.7} parent=11 // pred_check_branch
          %123 = sbr.rel (%p121) target = $region20
        $region19: #{hourglass_forward.7} parent=11 // pred_region
          _
        $region20: #{hourglass_forward.7} parent=11 // pred_fallthru
          _
      $region12: #{hourglass_forward.7} parent=5 // pred_fallthru
        _
      %p124 = scmp.lt.s32.totalorder %s9, 2
      // Predicated region
      $region21: #{hourglass_forward.7} parent=5 // pred_check
        %p125 = pneg %p124
      $region22: #{hourglass_forward.7} parent=5 // pred_check_branch
        %127 = sbr.rel (%p125) target = $region24
      $region23: #{hourglass_forward.7} parent=5 // pred_region
        // Predicated region
        $region25: #{hourglass_forward.7} parent=23 // pred_check
          %p128 = pneg %p50
        $region26: #{hourglass_forward.7} parent=23 // pred_check_branch
          %130 = sbr.rel (%p128) target = $region28
        $region27: #{hourglass_forward.7} parent=23 // pred_region
          %s131 = sand.u32 %s40, 1
          %s132 = sand.u32 %s40, 1
          %s133 = smul.addr %s132, 216
          %s134 = scalar_lea.vmem [#allocation2], %s133
          %s135 = smul.u32 2, %s9
          %s136 = smul.addr %s135, 4
          %s137 = scalar_lea.vmem %s1, %s136
          // Predicated region
          $region29: #{hourglass_forward.7} parent=27 // pred_check
            _
          $region30: #{hourglass_forward.7} parent=27 // pred_check_branch
            %139 = sbr.rel (0) target = $region32
          $region31: #{hourglass_forward.7} parent=27 // pred_region
            // Predicated region
            $region33: #{hourglass_forward.7} parent=31 // pred_check
              _
            $region34: #{hourglass_forward.7} parent=31 // pred_check_branch
              %141 = sbr.rel (0) target = $region36
            $region35: #{hourglass_forward.7} parent=31 // pred_region
              // Predicated region
              $region48: #{hourglass_forward.7} parent=35 // pred_check
                _
              $region49: #{hourglass_forward.7} parent=35 // pred_check_branch
                %209 = sbr.rel (0) target = $region51
              $region50: #{hourglass_forward.7} parent=35 // pred_region
                loop: start=0, step=1, limit=1
                $region52: #{hourglass_forward.7} parent=50 // loop_pre_header
                  _
                $region53: #{hourglass_forward.7} parent=50 // loop_header
                  %s211 = sphi 0, %s215
                  %p212 = scmp.ge.s32.totalorder %s211, 1
                  %s216 = sphi %s137, %s137
                  %s217 = sphi %s134, %s134
                $region54: #{hourglass_forward.7} parent=50 // loop_header_branch
                  %214 = sbr.rel (%p212) target = $region58
                $region55: #{hourglass_forward.7} parent=50 // loop_body
                  %v218 = vld [vmem:[%s216] sm:$0xff]
                  %219 = vst [vmem:[%s217] sm:$0xff] %v218
                  %v220 = vld [vmem:[%s216 + $0x10] sm:$0xff]
                  %221 = vst [vmem:[%s217 + $0x8] sm:$0xff] %v220
                  %v222 = vld [vmem:[%s216 + $0x20] sm:$0xff]
                  %223 = vst [vmem:[%s217 + $0x10] sm:$0xff] %v222
                  %v224 = vld [vmem:[%s216 + $0x30] sm:$0xff]
                  %225 = vst [vmem:[%s217 + $0x18] sm:$0xff] %v224
                  %v226 = vld [vmem:[%s216 + $0x40] sm:$0xff]
                  %227 = vst [vmem:[%s217 + $0x20] sm:$0xff] %v226
                  %v228 = vld [vmem:[%s216 + $0x50] sm:$0xff]
                  %229 = vst [vmem:[%s217 + $0x28] sm:$0xff] %v228
                  %v230 = vld [vmem:[%s216 + $0x60] sm:$0xff]
                  %231 = vst [vmem:[%s217 + $0x30] sm:$0xff] %v230
                  %v232 = vld [vmem:[%s216 + $0x70] sm:$0xff]
                  %233 = vst [vmem:[%s217 + $0x38] sm:$0xff] %v232
                  %v234 = vld [vmem:[%s216 + $0x80] sm:$0xff]
                  %235 = vst [vmem:[%s217 + $0x40] sm:$0xff] %v234
                  %v236 = vld [vmem:[%s216 + $0x90] sm:$0xff]
                  %237 = vst [vmem:[%s217 + $0x48] sm:$0xff] %v236
                  %v238 = vld [vmem:[%s216 + $0xa0] sm:$0xff]
                  %239 = vst [vmem:[%s217 + $0x50] sm:$0xff] %v238
                  %v240 = vld [vmem:[%s216 + $0xb0] sm:$0xff]
                  %241 = vst [vmem:[%s217 + $0x58] sm:$0xff] %v240
                  %v242 = vld [vmem:[%s216 + $0xc0] sm:$0xff]
                  %243 = vst [vmem:[%s217 + $0x60] sm:$0xff] %v242
                  %v244 = vld [vmem:[%s216 + $0xd0] sm:$0xff]
                  %245 = vst [vmem:[%s217 + $0x68] sm:$0xff] %v244
                  %v246 = vld [vmem:[%s216 + $0xe0] sm:$0xff]
                  %247 = vst [vmem:[%s217 + $0x70] sm:$0xff] %v246
                  %v248 = vld [vmem:[%s216 + $0xf0] sm:$0xff]
                  %249 = vst [vmem:[%s217 + $0x78] sm:$0xff] %v248
                  %v250 = vld [vmem:[%s216 + $0x100] sm:$0xff]
                  %251 = vst [vmem:[%s217 + $0x80] sm:$0xff] %v250
                  %v252 = vld [vmem:[%s216 + $0x110] sm:$0xff]
                  %253 = vst [vmem:[%s217 + $0x88] sm:$0xff] %v252
                  %v254 = vld [vmem:[%s216 + $0x120] sm:$0xff]
                  %255 = vst [vmem:[%s217 + $0x90] sm:$0xff] %v254
                  %v256 = vld [vmem:[%s216 + $0x130] sm:$0xff]
                  %257 = vst [vmem:[%s217 + $0x98] sm:$0xff] %v256
                  %v258 = vld [vmem:[%s216 + $0x140] sm:$0xff]
                  %259 = vst [vmem:[%s217 + $0xa0] sm:$0xff] %v258
                  %v260 = vld [vmem:[%s216 + $0x150] sm:$0xff]
                  %261 = vst [vmem:[%s217 + $0xa8] sm:$0xff] %v260
                  %v262 = vld [vmem:[%s216 + $0x160] sm:$0xff]
                  %263 = vst [vmem:[%s217 + $0xb0] sm:$0xff] %v262
                  %v264 = vld [vmem:[%s216 + $0x170] sm:$0xff]
                  %265 = vst [vmem:[%s217 + $0xb8] sm:$0xff] %v264
                  %v266 = vld [vmem:[%s216 + $0x180] sm:$0xff]
                  %267 = vst [vmem:[%s217 + $0xc0] sm:$0xff] %v266
                  %v268 = vld [vmem:[%s216 + $0x190] sm:$0xff]
                  %269 = vst [vmem:[%s217 + $0xc8] sm:$0xff] %v268
                  %v270 = vld [vmem:[%s216 + $0x1a0] sm:$0xff]
                  %271 = vst [vmem:[%s217 + $0xd0] sm:$0xff] %v270
                $region56: #{hourglass_forward.7} parent=50 // loop_footer
                  %s215 = sadd.s32 1, %s211
                $region57: #{hourglass_forward.7} parent=50 // loop_footer_branch
                  %210 = sbr.rel target = $region53
                $region58: #{hourglass_forward.7} parent=50 // loop_exit
                  _
              $region51: #{hourglass_forward.7} parent=35 // pred_fallthru
                _
              // Predicated region
              $region59: #{hourglass_forward.7} parent=35 // pred_check
                _
              $region60: #{hourglass_forward.7} parent=35 // pred_check_branch
                %273 = sbr.rel target = $region62
              $region61: #{hourglass_forward.7} parent=35 // pred_region
                _
              $region62: #{hourglass_forward.7} parent=35 // pred_fallthru
                _
            $region36: #{hourglass_forward.7} parent=31 // pred_fallthru
              _
            // Predicated region
            $region37: #{hourglass_forward.7} parent=31 // pred_check
              _
            $region38: #{hourglass_forward.7} parent=31 // pred_check_branch
              %143 = sbr.rel target = $region40
            $region39: #{hourglass_forward.7} parent=31 // pred_region
              %s145 = ssub.s32 256, 1
              loop: start=0, step=1, limit=1
              $region41: #{hourglass_forward.7} parent=39 // loop_pre_header
                _
              $region42: #{hourglass_forward.7} parent=39 // loop_header
                %s147 = sphi 0, %s151
                %p148 = scmp.ge.s32.totalorder %s147, 1
                %s152 = sphi %s137, %s137
                %s153 = sphi %s134, %s134
              $region43: #{hourglass_forward.7} parent=39 // loop_header_branch
                %150 = sbr.rel (%p148) target = $region47
              $region44: #{hourglass_forward.7} parent=39 // loop_body
                %v154 = vld [vmem:[%s152] sm:%s145]
                %155 = vst [vmem:[%s153] sm:%s145] %v154
                %v156 = vld [vmem:[%s152 + $0x10] sm:%s145]
                %157 = vst [vmem:[%s153 + $0x8] sm:%s145] %v156
                %v158 = vld [vmem:[%s152 + $0x20] sm:%s145]
                %159 = vst [vmem:[%s153 + $0x10] sm:%s145] %v158
                %v160 = vld [vmem:[%s152 + $0x30] sm:%s145]
                %161 = vst [vmem:[%s153 + $0x18] sm:%s145] %v160
                %v162 = vld [vmem:[%s152 + $0x40] sm:%s145]
                %163 = vst [vmem:[%s153 + $0x20] sm:%s145] %v162
                %v164 = vld [vmem:[%s152 + $0x50] sm:%s145]
                %165 = vst [vmem:[%s153 + $0x28] sm:%s145] %v164
                %v166 = vld [vmem:[%s152 + $0x60] sm:%s145]
                %167 = vst [vmem:[%s153 + $0x30] sm:%s145] %v166
                %v168 = vld [vmem:[%s152 + $0x70] sm:%s145]
                %169 = vst [vmem:[%s153 + $0x38] sm:%s145] %v168
                %v170 = vld [vmem:[%s152 + $0x80] sm:%s145]
                %171 = vst [vmem:[%s153 + $0x40] sm:%s145] %v170
                %v172 = vld [vmem:[%s152 + $0x90] sm:%s145]
                %173 = vst [vmem:[%s153 + $0x48] sm:%s145] %v172
                %v174 = vld [vmem:[%s152 + $0xa0] sm:%s145]
                %175 = vst [vmem:[%s153 + $0x50] sm:%s145] %v174
                %v176 = vld [vmem:[%s152 + $0xb0] sm:%s145]
                %177 = vst [vmem:[%s153 + $0x58] sm:%s145] %v176
                %v178 = vld [vmem:[%s152 + $0xc0] sm:%s145]
                %179 = vst [vmem:[%s153 + $0x60] sm:%s145] %v178
                %v180 = vld [vmem:[%s152 + $0xd0] sm:%s145]
                %181 = vst [vmem:[%s153 + $0x68] sm:%s145] %v180
                %v182 = vld [vmem:[%s152 + $0xe0] sm:%s145]
                %183 = vst [vmem:[%s153 + $0x70] sm:%s145] %v182
                %v184 = vld [vmem:[%s152 + $0xf0] sm:%s145]
                %185 = vst [vmem:[%s153 + $0x78] sm:%s145] %v184
                %v186 = vld [vmem:[%s152 + $0x100] sm:%s145]
                %187 = vst [vmem:[%s153 + $0x80] sm:%s145] %v186
                %v188 = vld [vmem:[%s152 + $0x110] sm:%s145]
                %189 = vst [vmem:[%s153 + $0x88] sm:%s145] %v188
                %v190 = vld [vmem:[%s152 + $0x120] sm:%s145]
                %191 = vst [vmem:[%s153 + $0x90] sm:%s145] %v190
                %v192 = vld [vmem:[%s152 + $0x130] sm:%s145]
                %193 = vst [vmem:[%s153 + $0x98] sm:%s145] %v192
                %v194 = vld [vmem:[%s152 + $0x140] sm:%s145]
                %195 = vst [vmem:[%s153 + $0xa0] sm:%s145] %v194
                %v196 = vld [vmem:[%s152 + $0x150] sm:%s145]
                %197 = vst [vmem:[%s153 + $0xa8] sm:%s145] %v196
                %v198 = vld [vmem:[%s152 + $0x160] sm:%s145]
                %199 = vst [vmem:[%s153 + $0xb0] sm:%s145] %v198
                %v200 = vld [vmem:[%s152 + $0x170] sm:%s145]
                %201 = vst [vmem:[%s153 + $0xb8] sm:%s145] %v200
                %v202 = vld [vmem:[%s152 + $0x180] sm:%s145]
                %203 = vst [vmem:[%s153 + $0xc0] sm:%s145] %v202
                %v204 = vld [vmem:[%s152 + $0x190] sm:%s145]
                %205 = vst [vmem:[%s153 + $0xc8] sm:%s145] %v204
                %v206 = vld [vmem:[%s152 + $0x1a0] sm:%s145]
                %207 = vst [vmem:[%s153 + $0xd0] sm:%s145] %v206
              $region45: #{hourglass_forward.7} parent=39 // loop_footer
                %s151 = sadd.s32 1, %s147
              $region46: #{hourglass_forward.7} parent=39 // loop_footer_branch
                %146 = sbr.rel target = $region42
              $region47: #{hourglass_forward.7} parent=39 // loop_exit
                _
            $region40: #{hourglass_forward.7} parent=31 // pred_fallthru
              _
          $region32: #{hourglass_forward.7} parent=27 // pred_fallthru
            _
          %274 = vnop
        $region28: #{hourglass_forward.7} parent=23 // pred_fallthru
          _
      $region24: #{hourglass_forward.7} parent=5 // pred_fallthru
        _
      %p275 = scmp.le.s32.totalorder 1, %s9
      %p276 = scmp.lt.s32.totalorder %s9, 3
      %p277 = pnand %p275, %p276
      %p278 = pneg %p277
      // Predicated region
      $region63: #{hourglass_forward.7} parent=5 // pred_check
        _
      $region64: #{hourglass_forward.7} parent=5 // pred_check_branch
        %280 = sbr.rel (%p277) target = $region66
      $region65: #{hourglass_forward.7} parent=5 // pred_region
        %s281 = ssub.s32 %s9, 1
        %s282 = sand.u32 %s43, 1
        %s283 = sand.u32 %s43, 1
        %s284 = smul.addr %s283, 216
        %s285 = scalar_lea.vmem [#allocation2], %s284
        // Predicated region
        $region67: #{hourglass_forward.7} parent=65 // pred_check
          %p286 = pneg %p56
        $region68: #{hourglass_forward.7} parent=65 // pred_check_branch
          %288 = sbr.rel (%p286) target = $region70
        $region69: #{hourglass_forward.7} parent=65 // pred_region
          _
        $region70: #{hourglass_forward.7} parent=65 // pred_fallthru
          _
        %p289 = pneg %p30
        %p290 = pneg %p27
        %s291 = sand.u32 %s43, 1
        %s292 = sand.u32 %s43, 1
        %s293 = smul.addr %s292, 216
        %s294 = scalar_lea.vmem [#allocation2], %s293
        %p295 = pneg %p56
        %p296 = pneg %p53
        %p297 = pneg %p77
        %p298 = pneg %p74
        %p299 = pneg %p103
        %p300 = pneg %p100
        %s301 = smul.u32 2, %s14
        %p302 = scmp.lt.s32.totalorder %s301, 3
        %s303 = scalar_select %p302, %s301, 3
        %s304 = smul.addr %s303, 4
        %s305 = scalar_lea.vmem %s3, %s304
        %s306 = smul.u32 2, %s14
        %s307 = smul.u32 2, %s14
        %p308 = scmp.lt.s32.totalorder %s307, 3
        %s309 = scalar_select %p308, %s307, 3
        %s310 = smul.addr %s309, 4
        %s311 = scalar_lea.vmem %s3, %s310
        %s312 = smul.u32 2, %s14
        %v314 = vld [vmem:[%s0] sm:$0xff]
        %v315 = vld [vmem:[%s285] sm:$0xff]
        %v316 = vld [vmem:[%s285 + $0x8] sm:$0xff]
        %v317 = vld [vmem:[%s285 + $0x10] sm:$0xff]
        %v318 = vld [vmem:[%s285 + $0x18] sm:$0xff]
        %v319 = vld [vmem:[%s285 + $0x20] sm:$0xff]
        %v320 = vld [vmem:[%s285 + $0x28] sm:$0xff]
        %v321 = vld [vmem:[%s285 + $0x30] sm:$0xff]
        %v322 = vld [vmem:[%s285 + $0x38] sm:$0xff]
        %v323 = vld [vmem:[%s285 + $0x40] sm:$0xff]
        %v324 = vld [vmem:[%s285 + $0x48] sm:$0xff]
        %v325 = vld [vmem:[%s285 + $0x50] sm:$0xff]
        %v326 = vld [vmem:[%s285 + $0x58] sm:$0xff]
        %v327 = vld [vmem:[%s285 + $0x60] sm:$0xff]
        %v328 = vld [vmem:[%s285 + $0x68] sm:$0xff]
        %v329 = vld [vmem:[%s285 + $0x70] sm:$0xff]
        %v330 = vld [vmem:[%s285 + $0x78] sm:$0xff]
        %v331 = vld [vmem:[%s285 + $0x80] sm:$0xff]
        %v332 = vld [vmem:[%s285 + $0x88] sm:$0xff]
        %v333 = vld [vmem:[%s285 + $0x90] sm:$0xff]
        %v334 = vld [vmem:[%s285 + $0x98] sm:$0xff]
        %v335 = vld [vmem:[%s285 + $0xa0] sm:$0xff]
        %v336 = vld [vmem:[%s285 + $0xa8] sm:$0xff]
        %v337 = vld [vmem:[%s285 + $0xb0] sm:$0xff]
        %v338 = vld [vmem:[%s285 + $0xb8] sm:$0xff]
        %v339 = vld [vmem:[%s285 + $0xc0] sm:$0xff]
        %v340 = vld [vmem:[%s285 + $0xc8] sm:$0xff]
        %v341 = vld [vmem:[%s285 + $0xd0] sm:$0xff]
        %v342 = vld [vmem:[%s2] sm:$0xff]
        %344 = vset.pattern.permute.xlu0 0
        %345 = vperm.xlu0 %344, %v342
        %v346 = vpop.permute.xlu0 %345
        %v349 = vunpack.c.l.b16 %v314
        %v350 = vunpack.c.h.b16 %v314
        %v351 = vpack.c.b16 %v349, %v349
        %v352 = vpack.c.b16 %v350, %v350
        %v381 = vunpack.c.l.b16 %v315
        %v382 = vunpack.c.h.b16 %v315
        %v383 = vunpack.c.l.b16 %v316
        %v384 = vunpack.c.h.b16 %v316
        %v385 = vunpack.c.l.b16 %v317
        %v386 = vunpack.c.h.b16 %v317
        %v387 = vunpack.c.l.b16 %v318
        %v388 = vunpack.c.h.b16 %v318
        %v389 = vunpack.c.l.b16 %v319
        %v390 = vunpack.c.h.b16 %v319
        %v391 = vunpack.c.l.b16 %v320
        %v392 = vunpack.c.h.b16 %v320
        %v393 = vunpack.c.l.b16 %v321
        %v394 = vunpack.c.h.b16 %v321
        %v395 = vunpack.c.l.b16 %v322
        %v396 = vunpack.c.h.b16 %v322
        %v397 = vunpack.c.l.b16 %v323
        %v398 = vunpack.c.h.b16 %v323
        %v399 = vunpack.c.l.b16 %v324
        %v400 = vunpack.c.h.b16 %v324
        %v401 = vunpack.c.l.b16 %v325
        %v402 = vunpack.c.h.b16 %v325
        %v403 = vunpack.c.l.b16 %v326
        %v404 = vunpack.c.h.b16 %v326
        %v405 = vunpack.c.l.b16 %v327
        %v406 = vunpack.c.h.b16 %v327
        %v407 = vunpack.c.l.b16 %v328
        %v408 = vunpack.c.h.b16 %v328
        %v409 = vunpack.c.l.b16 %v329
        %v410 = vunpack.c.h.b16 %v329
        %v411 = vunpack.c.l.b16 %v330
        %v412 = vunpack.c.h.b16 %v330
        %v413 = vunpack.c.l.b16 %v331
        %v414 = vunpack.c.h.b16 %v331
        %v415 = vunpack.c.l.b16 %v332
        %v416 = vunpack.c.h.b16 %v332
        %v417 = vunpack.c.l.b16 %v333
        %v418 = vunpack.c.h.b16 %v333
        %v419 = vunpack.c.l.b16 %v334
        %v420 = vunpack.c.h.b16 %v334
        %v421 = vunpack.c.l.b16 %v335
        %v422 = vunpack.c.h.b16 %v335
        %v423 = vunpack.c.l.b16 %v336
        %v424 = vunpack.c.h.b16 %v336
        %v425 = vunpack.c.l.b16 %v337
        %v426 = vunpack.c.h.b16 %v337
        %v427 = vunpack.c.l.b16 %v338
        %v428 = vunpack.c.h.b16 %v338
        %v429 = vunpack.c.l.b16 %v339
        %v430 = vunpack.c.h.b16 %v339
        %v431 = vunpack.c.l.b16 %v340
        %v432 = vunpack.c.h.b16 %v340
        %v433 = vunpack.c.l.b16 %v341
        %v434 = vunpack.c.h.b16 %v341
        %v435 = vpack.c.b16 %v383, %v381
        %v436 = vpack.c.b16 %v384, %v382
        %v437 = vpack.c.b16 %v387, %v385
        %v438 = vpack.c.b16 %v388, %v386
        %v439 = vpack.c.b16 %v391, %v389
        %v440 = vpack.c.b16 %v392, %v390
        %v441 = vpack.c.b16 %v395, %v393
        %v442 = vpack.c.b16 %v396, %v394
        %v443 = vpack.c.b16 %v399, %v397
        %v444 = vpack.c.b16 %v400, %v398
        %v445 = vpack.c.b16 %v403, %v401
        %v446 = vpack.c.b16 %v404, %v402
        %v447 = vpack.c.b16 %v407, %v405
        %v448 = vpack.c.b16 %v408, %v406
        %v449 = vpack.c.b16 %v411, %v409
        %v450 = vpack.c.b16 %v412, %v410
        %v451 = vpack.c.b16 %v415, %v413
        %v452 = vpack.c.b16 %v416, %v414
        %v453 = vpack.c.b16 %v419, %v417
        %v454 = vpack.c.b16 %v420, %v418
        %v455 = vpack.c.b16 %v423, %v421
        %v456 = vpack.c.b16 %v424, %v422
        %v457 = vpack.c.b16 %v427, %v425
        %v458 = vpack.c.b16 %v428, %v426
        %v459 = vpack.c.b16 %v431, %v429
        %v460 = vpack.c.b16 %v432, %v430
        %v461 = vpack.c.b16 %v433, %v433
        %v462 = vpack.c.b16 %v434, %v434
        %vm489 = vcmask 719872
        %v491 = vsel %vm489, %v352, 0
        %vm493 = vcmask 1043456
        %v495 = vsel %vm493, %v461, 0
        %v498 = vsel %vm493, %v462, 0
        %500 = vmatpush.bf16.msra.mxu0 %v449
        %501 = vmatpush.bf16.msra.mxu0 %v447
        %502 = vmatpush.bf16.msra.mxu0 %v445
        %503 = vmatpush.bf16.msra.mxu0 %v443
        %504 = vmatpush.bf16.msra.mxu0 %v441
        %505 = vmatpush.bf16.msra.mxu0 %v439
        %506 = vmatpush.bf16.msra.mxu0 %v437
        %507 = vmatpush.bf16.msra.mxu0 %v435
        %508 = vmatmul.bf16.gmra.mxu0 %v351
        %v509 = vpop.f32.mrf.mxu0
        %v510 = vadd.f32 %v346, %v509
        %v511 = vpop.f32.mrf.mxu0
        %512 = vdwg.mxu0
        %513 = vmatpush.bf16.msra.mxu0 0
        %514 = vmatpush.bf16.msra.mxu0 0
        %515 = vmatpush.bf16.msra.mxu0 %v495
        %516 = vmatpush.bf16.msra.mxu0 %v459
        %517 = vmatpush.bf16.msra.mxu0 %v457
        %518 = vmatpush.bf16.msra.mxu0 %v455
        %519 = vmatpush.bf16.msra.mxu0 %v453
        %520 = vmatpush.bf16.msra.mxu0 %v451
        %521 = vmatmul.bf16.gmra.mxu0 %v491
        %v522 = vpop.f32.mrf.mxu0
        %v523 = vadd.f32 %v510, %v522
        %v524 = vpop.f32.mrf.mxu0
        %525 = vdwg.mxu0
        %526 = vmatpush.bf16.msra.mxu0 %v450
        %527 = vmatpush.bf16.msra.mxu0 %v448
        %528 = vmatpush.bf16.msra.mxu0 %v446
        %529 = vmatpush.bf16.msra.mxu0 %v444
        %530 = vmatpush.bf16.msra.mxu0 %v442
        %531 = vmatpush.bf16.msra.mxu0 %v440
        %532 = vmatpush.bf16.msra.mxu0 %v438
        %533 = vmatpush.bf16.msra.mxu0 %v436
        %534 = vmatmul.bf16.gmra.mxu0 %v351
        %v535 = vpop.f32.mrf.mxu0
        %v536 = vadd.f32 %v346, %v535
        %v537 = vpop.f32.mrf.mxu0
        %538 = vdwg.mxu0
        %539 = vmatpush.bf16.msra.mxu0 0
        %540 = vmatpush.bf16.msra.mxu0 0
        %541 = vmatpush.bf16.msra.mxu0 %v498
        %542 = vmatpush.bf16.msra.mxu0 %v460
        %543 = vmatpush.bf16.msra.mxu0 %v458
        %544 = vmatpush.bf16.msra.mxu0 %v456
        %545 = vmatpush.bf16.msra.mxu0 %v454
        %546 = vmatpush.bf16.msra.mxu0 %v452
        %547 = vmatmul.bf16.gmra.mxu0 %v491
        %v548 = vpop.f32.mrf.mxu0
        %v549 = vadd.f32 %v536, %v548
        %v550 = vpop.f32.mrf.mxu0
        %551 = vdwg.mxu0
        %v552 = vmin.f32 %v523, 20.0
        %v553 = vmin.f32 %v549, 20.0
        %v554 = vmul.f32 %v552, 1.442695
        %v555 = vpow.pop %v554
        %v556 = vmul.f32 %v553, 1.442695
        %v557 = vpow.pop %v556
        %v558 = vadd.f32 %v555, 2.0
        %v559 = vadd.f32 %v557, 2.0
        %v560 = vmul.f32 %v555, %v558
        %v561 = vmul.f32 %v557, %v559
        %v562 = vmul.f32 %v523, %v560
        %v563 = vmul.f32 %v549, %v561
        %v564 = vadd.f32 %v560, 2.0
        %v565 = vadd.f32 %v561, 2.0
        %v566 = vrcp.pop %v564
        %v567 = vrcp.pop %v565
        %v568 = vmul.f32 %v562, %v566
        %v569 = vmul.f32 %v563, %v567
        %v570 = vpack.c.bf16 %v569, %v568
        %571 = vst [vmem:[%s311] sm:$0xff] %v570
        %s572 = smul.u32 2, %s14
        %p573 = scmp.lt.s32.totalorder %s572, 3
        %s574 = scalar_select %p573, %s572, 3
        %s575 = smul.addr %s574, 4
        %s576 = scalar_lea.vmem %s3, %s575
        // Predicated region
        $region71: #{hourglass_forward.7} parent=65 // pred_check
          %p577 = pneg %p100
        $region72: #{hourglass_forward.7} parent=65 // pred_check_branch
          %579 = sbr.rel (%p577) target = $region74
        $region73: #{hourglass_forward.7} parent=65 // pred_region
          %s580 = smul.u32 2, %s14
        $region74: #{hourglass_forward.7} parent=65 // pred_fallthru
          _
      $region66: #{hourglass_forward.7} parent=5 // pred_fallthru
        _
      %p581 = scmp.le.s32.totalorder 2, %s9
      // Predicated region
      $region75: #{hourglass_forward.7} parent=5 // pred_check
        %p582 = pneg %p581
      $region76: #{hourglass_forward.7} parent=5 // pred_check_branch
        %584 = sbr.rel (%p582) target = $region78
      $region77: #{hourglass_forward.7} parent=5 // pred_region
        %s585 = ssub.s32 %s9, 2
        // Predicated region
        $region79: #{hourglass_forward.7} parent=77 // pred_check
          %p586 = pneg %p106
        $region80: #{hourglass_forward.7} parent=77 // pred_check_branch
          %588 = sbr.rel (%p586) target = $region82
        $region81: #{hourglass_forward.7} parent=77 // pred_region
          %s589 = smul.u32 2, %s15
          %p590 = scmp.lt.s32.totalorder %s589, 3
          %s591 = scalar_select %p590, %s589, 3
          %s592 = smul.addr %s591, 4
          %s593 = scalar_lea.vmem %s3, %s592
        $region82: #{hourglass_forward.7} parent=77 // pred_fallthru
          _
      $region78: #{hourglass_forward.7} parent=5 // pred_fallthru
        _
    $region6: #{hourglass_forward.7} parent=1 // loop_footer
      %s13 = sadd.s32 1, %s9
    $region7: #{hourglass_forward.7} parent=1 // loop_footer_branch
      %8 = sbr.rel target = $region3
    $region8: #{hourglass_forward.7} parent=1 // loop_exit
      _

// kernel: hourglass_forward.8
$region0: #{hourglass_forward.8}
  #allocation0 [shape = 'u32[]', space=smem, size = 0x4, offset = 0x4, fixed_abs, tag = 'smem constant byte address 0x4 - core index']
  #allocation1 [shape = 'u32[72,128]{1,0:T(1,128)}', space=vmem, size = 0x9000, scoped, tag = 'internal scratch']
  %s0 = inlined_call_operand.vmem [shape: bf16[16,216], index: 0, kind: input, shape index: {}]
  %s1 = inlined_call_operand.vmem [shape: bf16[216,128], index: 1, kind: input, shape index: {}]
  %s2 = inlined_call_operand.vmem [shape: f32[16,1], index: 2, kind: input, shape index: {}]
  %s3 = inlined_call_operand.vmem [shape: bf16[16,128], index: 3, kind: output, shape index: {}]
  %s4 = sld [smem:[#allocation0]]
  $region22: #{hourglass_forward.8} parent=0
    _
  %s6 = ssub.s32 1, %s4
  %s7 = scalar_select 0, %s6, %s4
  // Predicated region
  $region2: #{hourglass_forward.8} parent=0 // pred_check
    _
  $region3: #{hourglass_forward.8} parent=0 // pred_check_branch
    %9 = sbr.rel (0) target = $region5
  $region4: #{hourglass_forward.8} parent=0 // pred_region
    _
  $region5: #{hourglass_forward.8} parent=0 // pred_fallthru
    _
  // Predicated region
  $region6: #{hourglass_forward.8} parent=0 // pred_check
    _
  $region7: #{hourglass_forward.8} parent=0 // pred_check_branch
    %11 = sbr.rel (0) target = $region9
  $region8: #{hourglass_forward.8} parent=0 // pred_region
    _
  $region9: #{hourglass_forward.8} parent=0 // pred_fallthru
    _
  // Predicated region
  $region10: #{hourglass_forward.8} parent=0 // pred_check
    _
  $region11: #{hourglass_forward.8} parent=0 // pred_check_branch
    %13 = sbr.rel (0) target = $region13
  $region12: #{hourglass_forward.8} parent=0 // pred_region
    _
  $region13: #{hourglass_forward.8} parent=0 // pred_fallthru
    _
  %v15 = vld [vmem:[%s0] sm:$0xff]
  %v16 = vld [vmem:[%s0 + $0x8] sm:$0xff]
  %v17 = vld [vmem:[%s1] sm:$0xf]
  %v18 = vld [vmem:[%s1 + $0x4] sm:$0xf]
  %v19 = vld [vmem:[%s1 + $0x8] sm:$0xf]
  %v20 = vld [vmem:[%s1 + $0xc] sm:$0xf]
  %v21 = vld [vmem:[%s1 + $0x10] sm:$0xf]
  %v22 = vld [vmem:[%s1 + $0x14] sm:$0xf]
  %v23 = vld [vmem:[%s1 + $0x18] sm:$0xf]
  %v24 = vld [vmem:[%s1 + $0x1c] sm:$0xf]
  %v25 = vld [vmem:[%s1 + $0x20] sm:$0xf]
  %v26 = vld [vmem:[%s1 + $0x24] sm:$0xf]
  %v27 = vld [vmem:[%s1 + $0x28] sm:$0xf]
  %v28 = vld [vmem:[%s1 + $0x2c] sm:$0xf]
  %v29 = vld [vmem:[%s1 + $0x30] sm:$0xf]
  %v30 = vld [vmem:[%s1 + $0x34] sm:$0xf]
  %v31 = vld [vmem:[%s1 + $0x38] sm:$0xf]
  %v32 = vld [vmem:[%s1 + $0x3c] sm:$0xf]
  %v33 = vld [vmem:[%s1 + $0x40] sm:$0xf]
  %v34 = vld [vmem:[%s1 + $0x44] sm:$0xf]
  %v35 = vld [vmem:[%s1 + $0x48] sm:$0xf]
  %v36 = vld [vmem:[%s1 + $0x4c] sm:$0xf]
  %v37 = vld [vmem:[%s1 + $0x50] sm:$0xf]
  %v38 = vld [vmem:[%s1 + $0x54] sm:$0xf]
  %v39 = vld [vmem:[%s1 + $0x58] sm:$0xf]
  %v40 = vld [vmem:[%s1 + $0x5c] sm:$0xf]
  %v41 = vld [vmem:[%s1 + $0x60] sm:$0xf]
  %v42 = vld [vmem:[%s1 + $0x64] sm:$0xf]
  %v43 = vld [vmem:[%s1 + $0x68] sm:$0xf]
  %v44 = vld [vmem:[%s2] sm:$0xff]
  %v45 = vld [vmem:[%s2 + $0x8] sm:$0xff]
  %47 = vset.pattern.permute.xlu0 0
  %48 = vperm.xlu0 %47, %v44
  %v49 = vpop.permute.xlu0 %48
  %52 = vset.pattern.permute.xlu0 0
  %53 = vperm.xlu0 %52, %v45
  %v54 = vpop.permute.xlu0 %53
  %v58 = vunpack.c.l.b16 %v15
  %v59 = vunpack.c.h.b16 %v15
  %v60 = vunpack.c.l.b16 %v16
  %v61 = vunpack.c.h.b16 %v16
  %v62 = vpack.c.b16 %v60, %v58
  %v63 = vpack.c.b16 %v61, %v59
  %v92 = vunpack.c.l.b16 %v17
  %v93 = vunpack.c.l.b16 %v18
  %v94 = vunpack.c.l.b16 %v19
  %v95 = vunpack.c.l.b16 %v20
  %v96 = vunpack.c.l.b16 %v21
  %v97 = vunpack.c.l.b16 %v22
  %v98 = vunpack.c.l.b16 %v23
  %v99 = vunpack.c.l.b16 %v24
  %v100 = vunpack.c.l.b16 %v25
  %v101 = vunpack.c.l.b16 %v26
  %v102 = vunpack.c.l.b16 %v27
  %v103 = vunpack.c.l.b16 %v28
  %v104 = vunpack.c.l.b16 %v29
  %v105 = vunpack.c.l.b16 %v30
  %v106 = vunpack.c.l.b16 %v31
  %v107 = vunpack.c.l.b16 %v32
  %v108 = vunpack.c.l.b16 %v33
  %v109 = vunpack.c.l.b16 %v34
  %v110 = vunpack.c.l.b16 %v35
  %v111 = vunpack.c.l.b16 %v36
  %v112 = vunpack.c.l.b16 %v37
  %v113 = vunpack.c.l.b16 %v38
  %v114 = vunpack.c.l.b16 %v39
  %v115 = vunpack.c.l.b16 %v40
  %v116 = vunpack.c.l.b16 %v41
  %v117 = vunpack.c.l.b16 %v42
  %v118 = vunpack.c.l.b16 %v43
  %v119 = vpack.c.b16 %v93, %v92
  %v120 = vpack.c.b16 %v95, %v94
  %v121 = vpack.c.b16 %v97, %v96
  %v122 = vpack.c.b16 %v99, %v98
  %v123 = vpack.c.b16 %v101, %v100
  %v124 = vpack.c.b16 %v103, %v102
  %v125 = vpack.c.b16 %v105, %v104
  %v126 = vpack.c.b16 %v107, %v106
  %v127 = vpack.c.b16 %v109, %v108
  %v128 = vpack.c.b16 %v111, %v110
  %v129 = vpack.c.b16 %v113, %v112
  %v130 = vpack.c.b16 %v115, %v114
  %v131 = vpack.c.b16 %v117, %v116
  %v132 = vpack.c.b16 %v118, %v118
  %vm146 = vcmask 719872
  %v148 = vsel %vm146, %v63, 0
  %vm150 = vcmask 1043456
  %v152 = vsel %vm150, %v132, 0
  %154 = vmatpush.bf16.msra.mxu0 %v126
  %155 = vmatpush.bf16.msra.mxu0 %v125
  %156 = vmatpush.bf16.msra.mxu0 %v124
  %157 = vmatpush.bf16.msra.mxu0 %v123
  %158 = vmatpush.bf16.msra.mxu0 %v122
  %159 = vmatpush.bf16.msra.mxu0 %v121
  %160 = vmatpush.bf16.msra.mxu0 %v120
  %161 = vmatpush.bf16.msra.mxu0 %v119
  %162 = vmatmul.bf16.gmra.mxu0 %v62
  %v163 = vpop.f32.mrf.mxu0
  %v164 = vadd.f32 %v49, %v163
  %v165 = vpop.f32.mrf.mxu0
  %v166 = vadd.f32 %v54, %v165
  %167 = vdwg.mxu0
  %168 = vmatpush.bf16.msra.mxu0 0
  %169 = vmatpush.bf16.msra.mxu0 0
  %170 = vmatpush.bf16.msra.mxu0 %v152
  %171 = vmatpush.bf16.msra.mxu0 %v131
  %172 = vmatpush.bf16.msra.mxu0 %v130
  %173 = vmatpush.bf16.msra.mxu0 %v129
  %174 = vmatpush.bf16.msra.mxu0 %v128
  %175 = vmatpush.bf16.msra.mxu0 %v127
  %176 = vmatmul.bf16.gmra.mxu0 %v148
  %v177 = vpop.f32.mrf.mxu0
  %v178 = vadd.f32 %v164, %v177
  %v179 = vpop.f32.mrf.mxu0
  %v180 = vadd.f32 %v166, %v179
  %181 = vdwg.mxu0
  %v182 = vmin.f32 %v178, 20.0
  %v183 = vmin.f32 %v180, 20.0
  %v184 = vmul.f32 %v182, 1.442695
  %v185 = vpow.pop %v184
  %v186 = vmul.f32 %v183, 1.442695
  %v187 = vpow.pop %v186
  %v188 = vadd.f32 %v185, 2.0
  %v189 = vadd.f32 %v187, 2.0
  %v190 = vmul.f32 %v185, %v188
  %v191 = vmul.f32 %v187, %v189
  %v192 = vmul.f32 %v178, %v190
  %v193 = vmul.f32 %v180, %v191
  %v194 = vadd.f32 %v190, 2.0
  %v195 = vadd.f32 %v191, 2.0
  %v196 = vrcp.pop %v194
  %v197 = vrcp.pop %v195
  %v198 = vmul.f32 %v192, %v196
  %v199 = vmul.f32 %v193, %v197
  %v200 = vpack.c.bf16 %v198, %v198
  %v201 = vpack.c.bf16 %v199, %v199
  %202 = vst [vmem:[%s3] sm:$0xf] %v200
  %203 = vst [vmem:[%s3 + $0x4] sm:$0xf] %v201
  // Predicated region
  $region14: #{hourglass_forward.8} parent=0 // pred_check
    _
  $region15: #{hourglass_forward.8} parent=0 // pred_check_branch
    %205 = sbr.rel (0) target = $region17
  $region16: #{hourglass_forward.8} parent=0 // pred_region
    _
  $region17: #{hourglass_forward.8} parent=0 // pred_fallthru
    _
  // Predicated region
  $region18: #{hourglass_forward.8} parent=0 // pred_check
    _
  $region19: #{hourglass_forward.8} parent=0 // pred_check_branch
    %207 = sbr.rel (0) target = $region21
  $region20: #{hourglass_forward.8} parent=0 // pred_region
    _
  $region21: #{hourglass_forward.8} parent=0 // pred_fallthru
    _

// kernel: hourglass_forward.9
$region0: #{hourglass_forward.9}
  #allocation0 [shape = 'u32[]', space=smem, size = 0x4, offset = 0x4, fixed_abs, tag = 'smem constant byte address 0x4 - core index']
  #allocation1 [shape = 'u32[72,128]{1,0:T(1,128)}', space=vmem, size = 0x9000, scoped, tag = 'internal scratch']
  %s0 = inlined_call_operand.vmem [shape: bf16[16,432], index: 0, kind: input, shape index: {}]
  %s1 = inlined_call_operand.vmem [shape: bf16[432,128], index: 1, kind: input, shape index: {}]
  %s2 = inlined_call_operand.vmem [shape: f32[16,1], index: 2, kind: input, shape index: {}]
  %s3 = inlined_call_operand.vmem [shape: bf16[16,128], index: 3, kind: output, shape index: {}]
  %s4 = sld [smem:[#allocation0]]
  $region22: #{hourglass_forward.9} parent=0
    _
  %s6 = ssub.s32 1, %s4
  %s7 = scalar_select 0, %s6, %s4
  // Predicated region
  $region2: #{hourglass_forward.9} parent=0 // pred_check
    _
  $region3: #{hourglass_forward.9} parent=0 // pred_check_branch
    %9 = sbr.rel (0) target = $region5
  $region4: #{hourglass_forward.9} parent=0 // pred_region
    _
  $region5: #{hourglass_forward.9} parent=0 // pred_fallthru
    _
  // Predicated region
  $region6: #{hourglass_forward.9} parent=0 // pred_check
    _
  $region7: #{hourglass_forward.9} parent=0 // pred_check_branch
    %11 = sbr.rel (0) target = $region9
  $region8: #{hourglass_forward.9} parent=0 // pred_region
    _
  $region9: #{hourglass_forward.9} parent=0 // pred_fallthru
    _
  // Predicated region
  $region10: #{hourglass_forward.9} parent=0 // pred_check
    _
  $region11: #{hourglass_forward.9} parent=0 // pred_check_branch
    %13 = sbr.rel (0) target = $region13
  $region12: #{hourglass_forward.9} parent=0 // pred_region
    _
  $region13: #{hourglass_forward.9} parent=0 // pred_fallthru
    _
  %v15 = vld [vmem:[%s0] sm:$0xff]
  %v16 = vld [vmem:[%s0 + $0x8] sm:$0xff]
  %v17 = vld [vmem:[%s0 + $0x10] sm:$0xff]
  %v18 = vld [vmem:[%s0 + $0x18] sm:$0xff]
  %v19 = vld [vmem:[%s1] sm:$0xf]
  %v20 = vld [vmem:[%s1 + $0x4] sm:$0xf]
  %v21 = vld [vmem:[%s1 + $0x8] sm:$0xf]
  %v22 = vld [vmem:[%s1 + $0xc] sm:$0xf]
  %v23 = vld [vmem:[%s1 + $0x10] sm:$0xf]
  %v24 = vld [vmem:[%s1 + $0x14] sm:$0xf]
  %v25 = vld [vmem:[%s1 + $0x18] sm:$0xf]
  %v26 = vld [vmem:[%s1 + $0x1c] sm:$0xf]
  %v27 = vld [vmem:[%s1 + $0x20] sm:$0xf]
  %v28 = vld [vmem:[%s1 + $0x24] sm:$0xf]
  %v29 = vld [vmem:[%s1 + $0x28] sm:$0xf]
  %v30 = vld [vmem:[%s1 + $0x2c] sm:$0xf]
  %v31 = vld [vmem:[%s1 + $0x30] sm:$0xf]
  %v32 = vld [vmem:[%s1 + $0x34] sm:$0xf]
  %v33 = vld [vmem:[%s1 + $0x38] sm:$0xf]
  %v34 = vld [vmem:[%s1 + $0x3c] sm:$0xf]
  %v35 = vld [vmem:[%s1 + $0x40] sm:$0xf]
  %v36 = vld [vmem:[%s1 + $0x44] sm:$0xf]
  %v37 = vld [vmem:[%s1 + $0x48] sm:$0xf]
  %v38 = vld [vmem:[%s1 + $0x4c] sm:$0xf]
  %v39 = vld [vmem:[%s1 + $0x50] sm:$0xf]
  %v40 = vld [vmem:[%s1 + $0x54] sm:$0xf]
  %v41 = vld [vmem:[%s1 + $0x58] sm:$0xf]
  %v42 = vld [vmem:[%s1 + $0x5c] sm:$0xf]
  %v43 = vld [vmem:[%s1 + $0x60] sm:$0xf]
  %v44 = vld [vmem:[%s1 + $0x64] sm:$0xf]
  %v45 = vld [vmem:[%s1 + $0x68] sm:$0xf]
  %v46 = vld [vmem:[%s1 + $0x6c] sm:$0xf]
  %v47 = vld [vmem:[%s1 + $0x70] sm:$0xf]
  %v48 = vld [vmem:[%s1 + $0x74] sm:$0xf]
  %v49 = vld [vmem:[%s1 + $0x78] sm:$0xf]
  %v50 = vld [vmem:[%s1 + $0x7c] sm:$0xf]
  %v51 = vld [vmem:[%s1 + $0x80] sm:$0xf]
  %v52 = vld [vmem:[%s1 + $0x84] sm:$0xf]
  %v53 = vld [vmem:[%s1 + $0x88] sm:$0xf]
  %v54 = vld [vmem:[%s1 + $0x8c] sm:$0xf]
  %v55 = vld [vmem:[%s1 + $0x90] sm:$0xf]
  %v56 = vld [vmem:[%s1 + $0x94] sm:$0xf]
  %v57 = vld [vmem:[%s1 + $0x98] sm:$0xf]
  %v58 = vld [vmem:[%s1 + $0x9c] sm:$0xf]
  %v59 = vld [vmem:[%s1 + $0xa0] sm:$0xf]
  %v60 = vld [vmem:[%s1 + $0xa4] sm:$0xf]
  %v61 = vld [vmem:[%s1 + $0xa8] sm:$0xf]
  %v62 = vld [vmem:[%s1 + $0xac] sm:$0xf]
  %v63 = vld [vmem:[%s1 + $0xb0] sm:$0xf]
  %v64 = vld [vmem:[%s1 + $0xb4] sm:$0xf]
  %v65 = vld [vmem:[%s1 + $0xb8] sm:$0xf]
  %v66 = vld [vmem:[%s1 + $0xbc] sm:$0xf]
  %v67 = vld [vmem:[%s1 + $0xc0] sm:$0xf]
  %v68 = vld [vmem:[%s1 + $0xc4] sm:$0xf]
  %v69 = vld [vmem:[%s1 + $0xc8] sm:$0xf]
  %v70 = vld [vmem:[%s1 + $0xcc] sm:$0xf]
  %v71 = vld [vmem:[%s1 + $0xd0] sm:$0xf]
  %v72 = vld [vmem:[%s1 + $0xd4] sm:$0xf]
  %v73 = vld [vmem:[%s2] sm:$0xff]
  %v74 = vld [vmem:[%s2 + $0x8] sm:$0xff]
  %76 = vset.pattern.permute.xlu0 0
  %77 = vperm.xlu0 %76, %v73
  %v78 = vpop.permute.xlu0 %77
  %81 = vset.pattern.permute.xlu0 0
  %82 = vperm.xlu0 %81, %v74
  %v83 = vpop.permute.xlu0 %82
  %v89 = vunpack.c.l.b16 %v15
  %v90 = vunpack.c.h.b16 %v15
  %v91 = vunpack.c.l.b16 %v16
  %v92 = vunpack.c.h.b16 %v16
  %v93 = vunpack.c.l.b16 %v17
  %v94 = vunpack.c.h.b16 %v17
  %v95 = vunpack.c.l.b16 %v18
  %v96 = vunpack.c.h.b16 %v18
  %v97 = vpack.c.b16 %v93, %v89
  %v98 = vpack.c.b16 %v94, %v90
  %v99 = vpack.c.b16 %v95, %v91
  %v100 = vpack.c.b16 %v96, %v92
  %v158 = vunpack.c.l.b16 %v19
  %v159 = vunpack.c.l.b16 %v20
  %v160 = vunpack.c.l.b16 %v21
  %v161 = vunpack.c.l.b16 %v22
  %v162 = vunpack.c.l.b16 %v23
  %v163 = vunpack.c.l.b16 %v24
  %v164 = vunpack.c.l.b16 %v25
  %v165 = vunpack.c.l.b16 %v26
  %v166 = vunpack.c.l.b16 %v27
  %v167 = vunpack.c.l.b16 %v28
  %v168 = vunpack.c.l.b16 %v29
  %v169 = vunpack.c.l.b16 %v30
  %v170 = vunpack.c.l.b16 %v31
  %v171 = vunpack.c.l.b16 %v32
  %v172 = vunpack.c.l.b16 %v33
  %v173 = vunpack.c.l.b16 %v34
  %v174 = vunpack.c.l.b16 %v35
  %v175 = vunpack.c.l.b16 %v36
  %v176 = vunpack.c.l.b16 %v37
  %v177 = vunpack.c.l.b16 %v38
  %v178 = vunpack.c.l.b16 %v39
  %v179 = vunpack.c.l.b16 %v40
  %v180 = vunpack.c.l.b16 %v41
  %v181 = vunpack.c.l.b16 %v42
  %v182 = vunpack.c.l.b16 %v43
  %v183 = vunpack.c.l.b16 %v44
  %v184 = vunpack.c.l.b16 %v45
  %v185 = vunpack.c.l.b16 %v46
  %v186 = vunpack.c.l.b16 %v47
  %v187 = vunpack.c.l.b16 %v48
  %v188 = vunpack.c.l.b16 %v49
  %v189 = vunpack.c.l.b16 %v50
  %v190 = vunpack.c.l.b16 %v51
  %v191 = vunpack.c.l.b16 %v52
  %v192 = vunpack.c.l.b16 %v53
  %v193 = vunpack.c.l.b16 %v54
  %v194 = vunpack.c.l.b16 %v55
  %v195 = vunpack.c.l.b16 %v56
  %v196 = vunpack.c.l.b16 %v57
  %v197 = vunpack.c.l.b16 %v58
  %v198 = vunpack.c.l.b16 %v59
  %v199 = vunpack.c.l.b16 %v60
  %v200 = vunpack.c.l.b16 %v61
  %v201 = vunpack.c.l.b16 %v62
  %v202 = vunpack.c.l.b16 %v63
  %v203 = vunpack.c.l.b16 %v64
  %v204 = vunpack.c.l.b16 %v65
  %v205 = vunpack.c.l.b16 %v66
  %v206 = vunpack.c.l.b16 %v67
  %v207 = vunpack.c.l.b16 %v68
  %v208 = vunpack.c.l.b16 %v69
  %v209 = vunpack.c.l.b16 %v70
  %v210 = vunpack.c.l.b16 %v71
  %v211 = vunpack.c.l.b16 %v72
  %v212 = vpack.c.b16 %v159, %v158
  %v213 = vpack.c.b16 %v161, %v160
  %v214 = vpack.c.b16 %v163, %v162
  %v215 = vpack.c.b16 %v165, %v164
  %v216 = vpack.c.b16 %v167, %v166
  %v217 = vpack.c.b16 %v169, %v168
  %v218 = vpack.c.b16 %v171, %v170
  %v219 = vpack.c.b16 %v173, %v172
  %v220 = vpack.c.b16 %v175, %v174
  %v221 = vpack.c.b16 %v177, %v176
  %v222 = vpack.c.b16 %v179, %v178
  %v223 = vpack.c.b16 %v181, %v180
  %v224 = vpack.c.b16 %v183, %v182
  %v225 = vpack.c.b16 %v185, %v184
  %v226 = vpack.c.b16 %v187, %v186
  %v227 = vpack.c.b16 %v189, %v188
  %v228 = vpack.c.b16 %v191, %v190
  %v229 = vpack.c.b16 %v193, %v192
  %v230 = vpack.c.b16 %v195, %v194
  %v231 = vpack.c.b16 %v197, %v196
  %v232 = vpack.c.b16 %v199, %v198
  %v233 = vpack.c.b16 %v201, %v200
  %v234 = vpack.c.b16 %v203, %v202
  %v235 = vpack.c.b16 %v205, %v204
  %v236 = vpack.c.b16 %v207, %v206
  %v237 = vpack.c.b16 %v209, %v208
  %v238 = vpack.c.b16 %v211, %v210
  %vm266 = vcmask 392192
  %v268 = vsel %vm266, %v100, 0
  %270 = vmatpush.bf16.msra.mxu0 %v219
  %271 = vmatpush.bf16.msra.mxu0 %v218
  %272 = vmatpush.bf16.msra.mxu0 %v217
  %273 = vmatpush.bf16.msra.mxu0 %v216
  %274 = vmatpush.bf16.msra.mxu0 %v215
  %275 = vmatpush.bf16.msra.mxu0 %v214
  %276 = vmatpush.bf16.msra.mxu0 %v213
  %277 = vmatpush.bf16.msra.mxu0 %v212
  %278 = vmatmul.bf16.gmra.mxu0 %v97
  %v279 = vpop.f32.mrf.mxu0
  %v280 = vadd.f32 %v78, %v279
  %v281 = vpop.f32.mrf.mxu0
  %v282 = vadd.f32 %v83, %v281
  %283 = vdwg.mxu0
  %284 = vmatpush.bf16.msra.mxu0 %v227
  %285 = vmatpush.bf16.msra.mxu0 %v226
  %286 = vmatpush.bf16.msra.mxu0 %v225
  %287 = vmatpush.bf16.msra.mxu0 %v224
  %288 = vmatpush.bf16.msra.mxu0 %v223
  %289 = vmatpush.bf16.msra.mxu0 %v222
  %290 = vmatpush.bf16.msra.mxu0 %v221
  %291 = vmatpush.bf16.msra.mxu0 %v220
  %292 = vmatmul.bf16.gmra.mxu0 %v98
  %v293 = vpop.f32.mrf.mxu0
  %v294 = vadd.f32 %v280, %v293
  %v295 = vpop.f32.mrf.mxu0
  %v296 = vadd.f32 %v282, %v295
  %297 = vdwg.mxu0
  %298 = vmatpush.bf16.msra.mxu0 %v235
  %299 = vmatpush.bf16.msra.mxu0 %v234
  %300 = vmatpush.bf16.msra.mxu0 %v233
  %301 = vmatpush.bf16.msra.mxu0 %v232
  %302 = vmatpush.bf16.msra.mxu0 %v231
  %303 = vmatpush.bf16.msra.mxu0 %v230
  %304 = vmatpush.bf16.msra.mxu0 %v229
  %305 = vmatpush.bf16.msra.mxu0 %v228
  %306 = vmatmul.bf16.gmra.mxu0 %v99
  %v307 = vpop.f32.mrf.mxu0
  %v308 = vadd.f32 %v294, %v307
  %v309 = vpop.f32.mrf.mxu0
  %v310 = vadd.f32 %v296, %v309
  %311 = vdwg.mxu0
  %312 = vmatpush.bf16.msra.mxu0 0
  %313 = vmatpush.bf16.msra.mxu0 0
  %314 = vmatpush.bf16.msra.mxu0 0
  %315 = vmatpush.bf16.msra.mxu0 0
  %316 = vmatpush.bf16.msra.mxu0 0
  %317 = vmatpush.bf16.msra.mxu0 %v238
  %318 = vmatpush.bf16.msra.mxu0 %v237
  %319 = vmatpush.bf16.msra.mxu0 %v236
  %320 = vmatmul.bf16.gmra.mxu0 %v268
  %v321 = vpop.f32.mrf.mxu0
  %v322 = vadd.f32 %v308, %v321
  %v323 = vpop.f32.mrf.mxu0
  %v324 = vadd.f32 %v310, %v323
  %325 = vdwg.mxu0
  %v326 = vmin.f32 %v322, 20.0
  %v327 = vmin.f32 %v324, 20.0
  %v328 = vmul.f32 %v326, 1.442695
  %v329 = vpow.pop %v328
  %v330 = vmul.f32 %v327, 1.442695
  %v331 = vpow.pop %v330
  %v332 = vadd.f32 %v329, 2.0
  %v333 = vadd.f32 %v331, 2.0
  %v334 = vmul.f32 %v329, %v332
  %v335 = vmul.f32 %v331, %v333
  %v336 = vmul.f32 %v322, %v334
  %v337 = vmul.f32 %v324, %v335
  %v338 = vadd.f32 %v334, 2.0
  %v339 = vadd.f32 %v335, 2.0
  %v340 = vrcp.pop %v338
  %v341 = vrcp.pop %v339
  %v342 = vmul.f32 %v336, %v340
  %v343 = vmul.f32 %v337, %v341
  %v344 = vpack.c.bf16 %v342, %v342
  %v345 = vpack.c.bf16 %v343, %v343
  %346 = vst [vmem:[%s3] sm:$0xf] %v344
  %347 = vst [vmem:[%s3 + $0x4] sm:$0xf] %v345
  // Predicated region
  $region14: #{hourglass_forward.9} parent=0 // pred_check
    _
  $region15: #{hourglass_forward.9} parent=0 // pred_check_branch
    %349 = sbr.rel (0) target = $region17
  $region16: #{hourglass_forward.9} parent=0 // pred_region
    _
  $region17: #{hourglass_forward.9} parent=0 // pred_fallthru
    _
  // Predicated region
  $region18: #{hourglass_forward.9} parent=0 // pred_check
    _
  $region19: #{hourglass_forward.9} parent=0 // pred_check_branch
    %351 = sbr.rel (0) target = $region21
  $region20: #{hourglass_forward.9} parent=0 // pred_region
    _
  $region21: #{hourglass_forward.9} parent=0 // pred_fallthru
    _

// kernel: hourglass_forward.10
$region0: #{hourglass_forward.10}
  #allocation0 [shape = 'u32[]', space=smem, size = 0x4, offset = 0x4, fixed_abs, tag = 'smem constant byte address 0x4 - core index']
  #allocation1 [shape = 'u32[72,128]{1,0:T(1,128)}', space=vmem, size = 0x9000, scoped, tag = 'internal scratch']
  %s0 = inlined_call_operand.vmem [shape: bf16[64,128], index: 0, kind: input, shape index: {}]
  %s1 = inlined_call_operand.vmem [shape: bf16[128,128], index: 1, kind: input, shape index: {}]
  %s2 = inlined_call_operand.vmem [shape: bf16[64,64], index: 2, kind: input, shape index: {}]
  %s3 = inlined_call_operand.vmem [shape: bf16[64,128], index: 3, kind: input, shape index: {}]
  %s4 = inlined_call_operand.vmem [shape: f32[64,1], index: 4, kind: input, shape index: {}]
  %s5 = inlined_call_operand.vmem [shape: bf16[64,128], index: 5, kind: output, shape index: {}]
  %s6 = sld [smem:[#allocation0]]
  $region30: #{hourglass_forward.10} parent=0
    _
  %s8 = ssub.s32 1, %s6
  %s9 = scalar_select 0, %s8, %s6
  // Predicated region
  $region2: #{hourglass_forward.10} parent=0 // pred_check
    _
  $region3: #{hourglass_forward.10} parent=0 // pred_check_branch
    %11 = sbr.rel (0) target = $region5
  $region4: #{hourglass_forward.10} parent=0 // pred_region
    _
  $region5: #{hourglass_forward.10} parent=0 // pred_fallthru
    _
  // Predicated region
  $region6: #{hourglass_forward.10} parent=0 // pred_check
    _
  $region7: #{hourglass_forward.10} parent=0 // pred_check_branch
    %13 = sbr.rel (0) target = $region9
  $region8: #{hourglass_forward.10} parent=0 // pred_region
    _
  $region9: #{hourglass_forward.10} parent=0 // pred_fallthru
    _
  // Predicated region
  $region10: #{hourglass_forward.10} parent=0 // pred_check
    _
  $region11: #{hourglass_forward.10} parent=0 // pred_check_branch
    %15 = sbr.rel (0) target = $region13
  $region12: #{hourglass_forward.10} parent=0 // pred_region
    _
  $region13: #{hourglass_forward.10} parent=0 // pred_fallthru
    _
  // Predicated region
  $region14: #{hourglass_forward.10} parent=0 // pred_check
    _
  $region15: #{hourglass_forward.10} parent=0 // pred_check_branch
    %17 = sbr.rel (0) target = $region17
  $region16: #{hourglass_forward.10} parent=0 // pred_region
    _
  $region17: #{hourglass_forward.10} parent=0 // pred_fallthru
    _
  // Predicated region
  $region18: #{hourglass_forward.10} parent=0 // pred_check
    _
  $region19: #{hourglass_forward.10} parent=0 // pred_check_branch
    %19 = sbr.rel (0) target = $region21
  $region20: #{hourglass_forward.10} parent=0 // pred_region
    _
  $region21: #{hourglass_forward.10} parent=0 // pred_fallthru
    _
  %v21 = vld [vmem:[%s0] sm:$0xf]
  %v22 = vld [vmem:[%s0 + $0x4] sm:$0xf]
  %v23 = vld [vmem:[%s0 + $0x8] sm:$0xf]
  %v24 = vld [vmem:[%s0 + $0xc] sm:$0xf]
  %v25 = vld [vmem:[%s0 + $0x10] sm:$0xf]
  %v26 = vld [vmem:[%s0 + $0x14] sm:$0xf]
  %v27 = vld [vmem:[%s0 + $0x18] sm:$0xf]
  %v28 = vld [vmem:[%s0 + $0x1c] sm:$0xf]
  %v29 = vld [vmem:[%s1] sm:$0xf]
  %v30 = vld [vmem:[%s1 + $0x4] sm:$0xf]
  %v31 = vld [vmem:[%s1 + $0x8] sm:$0xf]
  %v32 = vld [vmem:[%s1 + $0xc] sm:$0xf]
  %v33 = vld [vmem:[%s1 + $0x10] sm:$0xf]
  %v34 = vld [vmem:[%s1 + $0x14] sm:$0xf]
  %v35 = vld [vmem:[%s1 + $0x18] sm:$0xf]
  %v36 = vld [vmem:[%s1 + $0x1c] sm:$0xf]
  %v37 = vld [vmem:[%s1 + $0x20] sm:$0xf]
  %v38 = vld [vmem:[%s1 + $0x24] sm:$0xf]
  %v39 = vld [vmem:[%s1 + $0x28] sm:$0xf]
  %v40 = vld [vmem:[%s1 + $0x2c] sm:$0xf]
  %v41 = vld [vmem:[%s1 + $0x30] sm:$0xf]
  %v42 = vld [vmem:[%s1 + $0x34] sm:$0xf]
  %v43 = vld [vmem:[%s1 + $0x38] sm:$0xf]
  %v44 = vld [vmem:[%s1 + $0x3c] sm:$0xf]
  %v45 = vld [vmem:[%s2] sm:$0xf]
  %v46 = vld [vmem:[%s2 + $0x4] sm:$0xf]
  %v47 = vld [vmem:[%s2 + $0x8] sm:$0xf]
  %v48 = vld [vmem:[%s2 + $0xc] sm:$0xf]
  %v49 = vld [vmem:[%s2 + $0x10] sm:$0xf]
  %v50 = vld [vmem:[%s2 + $0x14] sm:$0xf]
  %v51 = vld [vmem:[%s2 + $0x18] sm:$0xf]
  %v52 = vld [vmem:[%s2 + $0x1c] sm:$0xf]
  %v53 = vld [vmem:[%s3] sm:$0xf]
  %v54 = vld [vmem:[%s3 + $0x4] sm:$0xf]
  %v55 = vld [vmem:[%s3 + $0x8] sm:$0xf]
  %v56 = vld [vmem:[%s3 + $0xc] sm:$0xf]
  %v57 = vld [vmem:[%s3 + $0x10] sm:$0xf]
  %v58 = vld [vmem:[%s3 + $0x14] sm:$0xf]
  %v59 = vld [vmem:[%s3 + $0x18] sm:$0xf]
  %v60 = vld [vmem:[%s3 + $0x1c] sm:$0xf]
  %v69 = vunpack.c.l.b16 %v45
  %v70 = vunpack.c.l.b16 %v46
  %v71 = vunpack.c.l.b16 %v47
  %v72 = vunpack.c.l.b16 %v48
  %v73 = vunpack.c.l.b16 %v49
  %v74 = vunpack.c.l.b16 %v50
  %v75 = vunpack.c.l.b16 %v51
  %v76 = vunpack.c.l.b16 %v52
  %v77 = vpack.c.b16 %v70, %v69
  %v78 = vpack.c.b16 %v72, %v71
  %v79 = vpack.c.b16 %v74, %v73
  %v80 = vpack.c.b16 %v76, %v75
  %v89 = vunpack.c.l.b16 %v53
  %v90 = vunpack.c.l.b16 %v54
  %v91 = vunpack.c.l.b16 %v55
  %v92 = vunpack.c.l.b16 %v56
  %v93 = vunpack.c.l.b16 %v57
  %v94 = vunpack.c.l.b16 %v58
  %v95 = vunpack.c.l.b16 %v59
  %v96 = vunpack.c.l.b16 %v60
  %v97 = vpack.c.b16 %v90, %v89
  %v98 = vpack.c.b16 %v92, %v91
  %v99 = vpack.c.b16 %v94, %v93
  %v100 = vpack.c.b16 %v96, %v95
  %vm105 = vcmask 523264
  %v107 = vsel %vm105, %v77, 0
  %v110 = vsel %vm105, %v78, 0
  %v113 = vsel %vm105, %v79, 0
  %v116 = vsel %vm105, %v80, 0
  %118 = vmatpush.bf16.msra.mxu0 0
  %119 = vmatpush.bf16.msra.mxu0 0
  %120 = vmatpush.bf16.msra.mxu0 0
  %121 = vmatpush.bf16.msra.mxu0 0
  %122 = vmatpush.bf16.msra.mxu0 %v100
  %123 = vmatpush.bf16.msra.mxu0 %v99
  %124 = vmatpush.bf16.msra.mxu0 %v98
  %125 = vmatpush.bf16.msra.mxu0 %v97
  %126 = vmatmul.bf16.gmra.mxu0 %v107
  %v127 = vpop.f32.mrf.mxu0
  %v128 = vadd.f32 0.0, %v127
  %v129 = vpop.f32.mrf.mxu0
  %v130 = vadd.f32 0.0, %v129
  %131 = vmatmul.bf16.gmra.mxu0 %v110
  %v132 = vpop.f32.mrf.mxu0
  %v133 = vadd.f32 0.0, %v132
  %v134 = vpop.f32.mrf.mxu0
  %v135 = vadd.f32 0.0, %v134
  %136 = vmatmul.bf16.gmra.mxu0 %v113
  %v137 = vpop.f32.mrf.mxu0
  %v138 = vadd.f32 0.0, %v137
  %v139 = vpop.f32.mrf.mxu0
  %v140 = vadd.f32 0.0, %v139
  %141 = vmatmul.bf16.gmra.mxu0 %v116
  %v142 = vpop.f32.mrf.mxu0
  %v143 = vadd.f32 0.0, %v142
  %v144 = vpop.f32.mrf.mxu0
  %v145 = vadd.f32 0.0, %v144
  %146 = vdwg.mxu0
  %v155 = vunpack.c.l.b16 %v21
  %v156 = vunpack.c.l.b16 %v22
  %v157 = vunpack.c.l.b16 %v23
  %v158 = vunpack.c.l.b16 %v24
  %v159 = vunpack.c.l.b16 %v25
  %v160 = vunpack.c.l.b16 %v26
  %v161 = vunpack.c.l.b16 %v27
  %v162 = vunpack.c.l.b16 %v28
  %v163 = vpack.c.b16 %v156, %v155
  %v164 = vpack.c.b16 %v158, %v157
  %v165 = vpack.c.b16 %v160, %v159
  %v166 = vpack.c.b16 %v162, %v161
  %v187 = vunpack.c.l.b16 %v29
  %v188 = vunpack.c.l.b16 %v30
  %v189 = vunpack.c.l.b16 %v31
  %v190 = vunpack.c.l.b16 %v32
  %v191 = vunpack.c.l.b16 %v33
  %v192 = vunpack.c.l.b16 %v34
  %v193 = vunpack.c.l.b16 %v35
  %v194 = vunpack.c.l.b16 %v36
  %v195 = vunpack.c.l.b16 %v37
  %v196 = vunpack.c.l.b16 %v38
  %v197 = vunpack.c.l.b16 %v39
  %v198 = vunpack.c.l.b16 %v40
  %v199 = vunpack.c.l.b16 %v41
  %v200 = vunpack.c.l.b16 %v42
  %v201 = vunpack.c.l.b16 %v43
  %v202 = vunpack.c.l.b16 %v44
  %v203 = vpack.c.b16 %v188, %v187
  %v204 = vpack.c.b16 %v190, %v189
  %v205 = vpack.c.b16 %v192, %v191
  %v206 = vpack.c.b16 %v194, %v193
  %v207 = vpack.c.b16 %v196, %v195
  %v208 = vpack.c.b16 %v198, %v197
  %v209 = vpack.c.b16 %v200, %v199
  %v210 = vpack.c.b16 %v202, %v201
  %219 = vmatpush.bf16.msra.mxu0 %v210
  %220 = vmatpush.bf16.msra.mxu0 %v209
  %221 = vmatpush.bf16.msra.mxu0 %v208
  %222 = vmatpush.bf16.msra.mxu0 %v207
  %223 = vmatpush.bf16.msra.mxu0 %v206
  %224 = vmatpush.bf16.msra.mxu0 %v205
  %225 = vmatpush.bf16.msra.mxu0 %v204
  %226 = vmatpush.bf16.msra.mxu0 %v203
  %227 = vmatmul.bf16.gmra.mxu0 %v163
  %v228 = vpop.f32.mrf.mxu0
  %v229 = vadd.f32 %v128, %v228
  %v230 = vpop.f32.mrf.mxu0
  %v231 = vadd.f32 %v130, %v230
  %232 = vmatmul.bf16.gmra.mxu0 %v164
  %v233 = vpop.f32.mrf.mxu0
  %v234 = vadd.f32 %v133, %v233
  %v235 = vpop.f32.mrf.mxu0
  %v236 = vadd.f32 %v135, %v235
  %237 = vmatmul.bf16.gmra.mxu0 %v165
  %v238 = vpop.f32.mrf.mxu0
  %v239 = vadd.f32 %v138, %v238
  %v240 = vpop.f32.mrf.mxu0
  %v241 = vadd.f32 %v140, %v240
  %242 = vmatmul.bf16.gmra.mxu0 %v166
  %v243 = vpop.f32.mrf.mxu0
  %v244 = vadd.f32 %v143, %v243
  %v245 = vpop.f32.mrf.mxu0
  %v246 = vadd.f32 %v145, %v245
  %247 = vdwg.mxu0
  %v248 = vld [vmem:[%s4] sm:$0xff]
  %v249 = vld [vmem:[%s4 + $0x8] sm:$0xff]
  %v250 = vld [vmem:[%s4 + $0x10] sm:$0xff]
  %v251 = vld [vmem:[%s4 + $0x18] sm:$0xff]
  %v252 = vld [vmem:[%s4 + $0x20] sm:$0xff]
  %v253 = vld [vmem:[%s4 + $0x28] sm:$0xff]
  %v254 = vld [vmem:[%s4 + $0x30] sm:$0xff]
  %v255 = vld [vmem:[%s4 + $0x38] sm:$0xff]
  %257 = vset.pattern.permute.xlu0 0
  %258 = vperm.xlu0 %257, %v248
  %v259 = vpop.permute.xlu0 %258
  %262 = vset.pattern.permute.xlu0 0
  %263 = vperm.xlu0 %262, %v249
  %v264 = vpop.permute.xlu0 %263
  %267 = vset.pattern.permute.xlu0 0
  %268 = vperm.xlu0 %267, %v250
  %v269 = vpop.permute.xlu0 %268
  %272 = vset.pattern.permute.xlu0 0
  %273 = vperm.xlu0 %272, %v251
  %v274 = vpop.permute.xlu0 %273
  %277 = vset.pattern.permute.xlu0 0
  %278 = vperm.xlu0 %277, %v252
  %v279 = vpop.permute.xlu0 %278
  %282 = vset.pattern.permute.xlu0 0
  %283 = vperm.xlu0 %282, %v253
  %v284 = vpop.permute.xlu0 %283
  %287 = vset.pattern.permute.xlu0 0
  %288 = vperm.xlu0 %287, %v254
  %v289 = vpop.permute.xlu0 %288
  %292 = vset.pattern.permute.xlu0 0
  %293 = vperm.xlu0 %292, %v255
  %v294 = vpop.permute.xlu0 %293
  %v296 = vadd.f32 %v229, %v259
  %v297 = vadd.f32 %v231, %v264
  %v298 = vadd.f32 %v234, %v269
  %v299 = vadd.f32 %v236, %v274
  %v300 = vadd.f32 %v239, %v279
  %v301 = vadd.f32 %v241, %v284
  %v302 = vadd.f32 %v244, %v289
  %v303 = vadd.f32 %v246, %v294
  %v304 = vmin.f32 %v296, 20.0
  %v305 = vmin.f32 %v297, 20.0
  %v306 = vmin.f32 %v298, 20.0
  %v307 = vmin.f32 %v299, 20.0
  %v308 = vmin.f32 %v300, 20.0
  %v309 = vmin.f32 %v301, 20.0
  %v310 = vmin.f32 %v302, 20.0
  %v311 = vmin.f32 %v303, 20.0
  %v312 = vmul.f32 %v304, 1.442695
  %v313 = vpow.pop %v312
  %v314 = vmul.f32 %v305, 1.442695
  %v315 = vpow.pop %v314
  %v316 = vmul.f32 %v306, 1.442695
  %v317 = vpow.pop %v316
  %v318 = vmul.f32 %v307, 1.442695
  %v319 = vpow.pop %v318
  %v320 = vmul.f32 %v308, 1.442695
  %v321 = vpow.pop %v320
  %v322 = vmul.f32 %v309, 1.442695
  %v323 = vpow.pop %v322
  %v324 = vmul.f32 %v310, 1.442695
  %v325 = vpow.pop %v324
  %v326 = vmul.f32 %v311, 1.442695
  %v327 = vpow.pop %v326
  %v328 = vadd.f32 %v313, 2.0
  %v329 = vadd.f32 %v315, 2.0
  %v330 = vadd.f32 %v317, 2.0
  %v331 = vadd.f32 %v319, 2.0
  %v332 = vadd.f32 %v321, 2.0
  %v333 = vadd.f32 %v323, 2.0
  %v334 = vadd.f32 %v325, 2.0
  %v335 = vadd.f32 %v327, 2.0
  %v336 = vmul.f32 %v313, %v328
  %v337 = vmul.f32 %v315, %v329
  %v338 = vmul.f32 %v317, %v330
  %v339 = vmul.f32 %v319, %v331
  %v340 = vmul.f32 %v321, %v332
  %v341 = vmul.f32 %v323, %v333
  %v342 = vmul.f32 %v325, %v334
  %v343 = vmul.f32 %v327, %v335
  %v344 = vmul.f32 %v296, %v336
  %v345 = vmul.f32 %v297, %v337
  %v346 = vmul.f32 %v298, %v338
  %v347 = vmul.f32 %v299, %v339
  %v348 = vmul.f32 %v300, %v340
  %v349 = vmul.f32 %v301, %v341
  %v350 = vmul.f32 %v302, %v342
  %v351 = vmul.f32 %v303, %v343
  %v352 = vadd.f32 %v336, 2.0
  %v353 = vadd.f32 %v337, 2.0
  %v354 = vadd.f32 %v338, 2.0
  %v355 = vadd.f32 %v339, 2.0
  %v356 = vadd.f32 %v340, 2.0
  %v357 = vadd.f32 %v341, 2.0
  %v358 = vadd.f32 %v342, 2.0
  %v359 = vadd.f32 %v343, 2.0
  %v360 = vrcp.pop %v352
  %v361 = vrcp.pop %v353
  %v362 = vrcp.pop %v354
  %v363 = vrcp.pop %v355
  %v364 = vrcp.pop %v356
  %v365 = vrcp.pop %v357
  %v366 = vrcp.pop %v358
  %v367 = vrcp.pop %v359
  %v368 = vmul.f32 %v344, %v360
  %v369 = vmul.f32 %v345, %v361
  %v370 = vmul.f32 %v346, %v362
  %v371 = vmul.f32 %v347, %v363
  %v372 = vmul.f32 %v348, %v364
  %v373 = vmul.f32 %v349, %v365
  %v374 = vmul.f32 %v350, %v366
  %v375 = vmul.f32 %v351, %v367
  %v376 = vpack.c.bf16 %v368, %v368
  %v377 = vpack.c.bf16 %v369, %v369
  %v378 = vpack.c.bf16 %v370, %v370
  %v379 = vpack.c.bf16 %v371, %v371
  %v380 = vpack.c.bf16 %v372, %v372
  %v381 = vpack.c.bf16 %v373, %v373
  %v382 = vpack.c.bf16 %v374, %v374
  %v383 = vpack.c.bf16 %v375, %v375
  %384 = vst [vmem:[%s5] sm:$0xf] %v376
  %385 = vst [vmem:[%s5 + $0x4] sm:$0xf] %v377
  %386 = vst [vmem:[%s5 + $0x8] sm:$0xf] %v378
  %387 = vst [vmem:[%s5 + $0xc] sm:$0xf] %v379
  %388 = vst [vmem:[%s5 + $0x10] sm:$0xf] %v380
  %389 = vst [vmem:[%s5 + $0x14] sm:$0xf] %v381
  %390 = vst [vmem:[%s5 + $0x18] sm:$0xf] %v382
  %391 = vst [vmem:[%s5 + $0x1c] sm:$0xf] %v383
  // Predicated region
  $region22: #{hourglass_forward.10} parent=0 // pred_check
    _
  $region23: #{hourglass_forward.10} parent=0 // pred_check_branch
    %393 = sbr.rel (0) target = $region25
  $region24: #{hourglass_forward.10} parent=0 // pred_region
    _
  $region25: #{hourglass_forward.10} parent=0 // pred_fallthru
    _
  // Predicated region
  $region26: #{hourglass_forward.10} parent=0 // pred_check
    _
  $region27: #{hourglass_forward.10} parent=0 // pred_check_branch
    %395 = sbr.rel (0) target = $region29
  $region28: #{hourglass_forward.10} parent=0 // pred_region
    _
  $region29: #{hourglass_forward.10} parent=0 // pred_fallthru
    _

// kernel: hourglass_forward.11
$region0: #{hourglass_forward.11}
  #allocation0 [shape = 'u32[]', space=smem, size = 0x4, offset = 0x4, fixed_abs, tag = 'smem constant byte address 0x4 - core index']
  #allocation1 [shape = 'u32[72,128]{1,0:T(1,128)}', space=vmem, size = 0x9000, scoped, tag = 'internal scratch']
  %s0 = inlined_call_operand.vmem [shape: bf16[32,64], index: 0, kind: input, shape index: {}]
  %s1 = inlined_call_operand.vmem [shape: bf16[64,512], index: 1, kind: input, shape index: {}]
  %s2 = inlined_call_operand.vmem [shape: bf16[32,32], index: 2, kind: input, shape index: {}]
  %s3 = inlined_call_operand.vmem [shape: bf16[32,512], index: 3, kind: input, shape index: {}]
  %s4 = inlined_call_operand.vmem [shape: f32[32,1], index: 4, kind: input, shape index: {}]
  %s5 = inlined_call_operand.vmem [shape: f32[32,512], index: 5, kind: output, shape index: {}]
  %s6 = sld [smem:[#allocation0]]
  $region148: #{hourglass_forward.11} parent=0
    _
  %s8 = ssub.s32 1, %s6
  %s9 = scalar_select 0, %s8, %s6
  $region1: #{hourglass_forward.11} parent=0
    #allocation2 [shape = 'u8[65536]{0}', space=vmem, size = 0x10000, scoped, tag = 'input window, operand 1']
    #allocation3 [shape = 'u8[32768]{0}', space=vmem, size = 0x8000, scoped, tag = 'input window, operand 3']
    #allocation4 [shape = 'u8[65536]{0}', space=vmem, size = 0x10000, scoped, tag = 'output window, operand 0']
    loop: start=0, step=1, limit=4
    $region2: #{hourglass_forward.11} parent=1 // loop_pre_header
      _
    $region3: #{hourglass_forward.11} parent=1 // loop_header
      %s11 = sphi 0, %s15
      %p12 = scmp.ge.s32.totalorder %s11, 4
      %s19 = sphi 0, %s19
      %s21 = sphi 0, %s19
      %s22 = sphi 0, %s21
      %s36 = sphi 0, %s22
      %s42 = sphi 0, %s44
      %s45 = sphi 0, %s42
      %s46 = sphi 0, %s45
      %s62 = sphi 0, %s46
      %s66 = sphi 0, %s66
      %s68 = sphi 0, %s66
      %s69 = sphi 0, %s68
      %s83 = sphi 0, %s69
      %s89 = sphi 0, %s91
      %s92 = sphi 0, %s89
      %s93 = sphi 0, %s92
      %s109 = sphi 0, %s93
      %s113 = sphi 0, %s113
      %s115 = sphi 0, %s113
      %s116 = sphi 0, %s115
      %s130 = sphi 0, %s116
      %s136 = sphi 0, %s138
      %s139 = sphi 0, %s136
      %s140 = sphi 0, %s139
      %s156 = sphi 0, %s140
    $region4: #{hourglass_forward.11} parent=1 // loop_header_branch
      %14 = sbr.rel (%p12) target = $region8
    $region5: #{hourglass_forward.11} parent=1 // loop_body
      %s16 = ssub.s32 %s11, 1
      %s17 = ssub.s32 %s11, 2
      %s18 = sadd.s32 %s11, 1
      %s20 = sadd.s32 %s19, 1
      %p23 = scmp.eq.s32.totalorder %s11, 1
      %p24 = scmp.ne.s32.totalorder %s19, %s21
      %p25 = scmp.eq.s32.totalorder %s11, 0
      %p26 = por %p24, %p25
      %p27 = scmp.ne.s32.totalorder %s19, %s21
      %p28 = scmp.eq.s32.totalorder %s16, 1
      %p29 = por %p27, %p28
      %p30 = scmp.ne.s32.totalorder %s21, %s22
      %p31 = scmp.eq.s32.totalorder %s16, 0
      %p32 = por %p30, %p31
      %p33 = scmp.ne.s32.totalorder %s21, %s22
      %p34 = scmp.eq.s32.totalorder %s17, 1
      %p35 = por %p33, %p34
      %p37 = scmp.ne.s32.totalorder %s22, %s36
      %p38 = scmp.eq.s32.totalorder %s17, 0
      %p39 = por %p37, %p38
      %s40 = ssub.s32 %s11, %s18
      %p41 = scmp.eq.s32.totalorder %s40, 0
      %s43 = sadd.s32 %s42, 1
      %s44 = scalar_select %p41, %s42, %s43
      %p47 = pneg %p41
      %p48 = scmp.eq.s32.totalorder %s11, 1
      %p49 = por %p47, %p48
      %p50 = scmp.ne.s32.totalorder %s42, %s45
      %p51 = scmp.eq.s32.totalorder %s11, 0
      %p52 = por %p50, %p51
      %p53 = scmp.ne.s32.totalorder %s42, %s45
      %p54 = scmp.eq.s32.totalorder %s16, 1
      %p55 = por %p53, %p54
      %p56 = scmp.ne.s32.totalorder %s45, %s46
      %p57 = scmp.eq.s32.totalorder %s16, 0
      %p58 = por %p56, %p57
      %p59 = scmp.ne.s32.totalorder %s45, %s46
      %p60 = scmp.eq.s32.totalorder %s17, 1
      %p61 = por %p59, %p60
      %p63 = scmp.ne.s32.totalorder %s46, %s62
      %p64 = scmp.eq.s32.totalorder %s17, 0
      %p65 = por %p63, %p64
      %s67 = sadd.s32 %s66, 1
      %p70 = scmp.eq.s32.totalorder %s11, 1
      %p71 = scmp.ne.s32.totalorder %s66, %s68
      %p72 = scmp.eq.s32.totalorder %s11, 0
      %p73 = por %p71, %p72
      %p74 = scmp.ne.s32.totalorder %s66, %s68
      %p75 = scmp.eq.s32.totalorder %s16, 1
      %p76 = por %p74, %p75
      %p77 = scmp.ne.s32.totalorder %s68, %s69
      %p78 = scmp.eq.s32.totalorder %s16, 0
      %p79 = por %p77, %p78
      %p80 = scmp.ne.s32.totalorder %s68, %s69
      %p81 = scmp.eq.s32.totalorder %s17, 1
      %p82 = por %p80, %p81
      %p84 = scmp.ne.s32.totalorder %s69, %s83
      %p85 = scmp.eq.s32.totalorder %s17, 0
      %p86 = por %p84, %p85
      %s87 = ssub.s32 %s11, %s18
      %p88 = scmp.eq.s32.totalorder %s87, 0
      %s90 = sadd.s32 %s89, 1
      %s91 = scalar_select %p88, %s89, %s90
      %p94 = pneg %p88
      %p95 = scmp.eq.s32.totalorder %s11, 1
      %p96 = por %p94, %p95
      %p97 = scmp.ne.s32.totalorder %s89, %s92
      %p98 = scmp.eq.s32.totalorder %s11, 0
      %p99 = por %p97, %p98
      %p100 = scmp.ne.s32.totalorder %s89, %s92
      %p101 = scmp.eq.s32.totalorder %s16, 1
      %p102 = por %p100, %p101
      %p103 = scmp.ne.s32.totalorder %s92, %s93
      %p104 = scmp.eq.s32.totalorder %s16, 0
      %p105 = por %p103, %p104
      %p106 = scmp.ne.s32.totalorder %s92, %s93
      %p107 = scmp.eq.s32.totalorder %s17, 1
      %p108 = por %p106, %p107
      %p110 = scmp.ne.s32.totalorder %s93, %s109
      %p111 = scmp.eq.s32.totalorder %s17, 0
      %p112 = por %p110, %p111
      %s114 = sadd.s32 %s113, 1
      %p117 = scmp.eq.s32.totalorder %s11, 1
      %p118 = scmp.ne.s32.totalorder %s113, %s115
      %p119 = scmp.eq.s32.totalorder %s11, 0
      %p120 = por %p118, %p119
      %p121 = scmp.ne.s32.totalorder %s113, %s115
      %p122 = scmp.eq.s32.totalorder %s16, 1
      %p123 = por %p121, %p122
      %p124 = scmp.ne.s32.totalorder %s115, %s116
      %p125 = scmp.eq.s32.totalorder %s16, 0
      %p126 = por %p124, %p125
      %p127 = scmp.ne.s32.totalorder %s115, %s116
      %p128 = scmp.eq.s32.totalorder %s17, 1
      %p129 = por %p127, %p128
      %p131 = scmp.ne.s32.totalorder %s116, %s130
      %p132 = scmp.eq.s32.totalorder %s17, 0
      %p133 = por %p131, %p132
      %s134 = ssub.s32 %s11, %s18
      %p135 = scmp.eq.s32.totalorder %s134, 0
      %s137 = sadd.s32 %s136, 1
      %s138 = scalar_select %p135, %s136, %s137
      %p141 = pneg %p135
      %p142 = scmp.eq.s32.totalorder %s11, 1
      %p143 = por %p141, %p142
      %p144 = scmp.ne.s32.totalorder %s136, %s139
      %p145 = scmp.eq.s32.totalorder %s11, 0
      %p146 = por %p144, %p145
      %p147 = scmp.ne.s32.totalorder %s136, %s139
      %p148 = scmp.eq.s32.totalorder %s16, 1
      %p149 = por %p147, %p148
      %p150 = scmp.ne.s32.totalorder %s139, %s140
      %p151 = scmp.eq.s32.totalorder %s16, 0
      %p152 = por %p150, %p151
      %p153 = scmp.ne.s32.totalorder %s139, %s140
      %p154 = scmp.eq.s32.totalorder %s17, 1
      %p155 = por %p153, %p154
      %p157 = scmp.ne.s32.totalorder %s140, %s156
      %p158 = scmp.eq.s32.totalorder %s17, 0
      %p159 = por %p157, %p158
      %p160 = scmp.le.s32.totalorder 1, %s11
      %p161 = scmp.lt.s32.totalorder %s11, 3
      %p162 = pnand %p160, %p161
      %p163 = pneg %p162
      // Predicated region
      $region9: #{hourglass_forward.11} parent=5 // pred_check
        _
      $region10: #{hourglass_forward.11} parent=5 // pred_check_branch
        %165 = sbr.rel (%p162) target = $region12
      $region11: #{hourglass_forward.11} parent=5 // pred_region
        %s166 = ssub.s32 %s11, 1
        // Predicated region
        $region13: #{hourglass_forward.11} parent=11 // pred_check
          %p167 = pneg %p32
        $region14: #{hourglass_forward.11} parent=11 // pred_check_branch
          %169 = sbr.rel (%p167) target = $region16
        $region15: #{hourglass_forward.11} parent=11 // pred_region
          _
        $region16: #{hourglass_forward.11} parent=11 // pred_fallthru
          _
        // Predicated region
        $region17: #{hourglass_forward.11} parent=11 // pred_check
          %p170 = pneg %p79
        $region18: #{hourglass_forward.11} parent=11 // pred_check_branch
          %172 = sbr.rel (%p170) target = $region20
        $region19: #{hourglass_forward.11} parent=11 // pred_region
          _
        $region20: #{hourglass_forward.11} parent=11 // pred_fallthru
          _
        // Predicated region
        $region21: #{hourglass_forward.11} parent=11 // pred_check
          %p173 = pneg %p126
        $region22: #{hourglass_forward.11} parent=11 // pred_check_branch
          %175 = sbr.rel (%p173) target = $region24
        $region23: #{hourglass_forward.11} parent=11 // pred_region
          _
        $region24: #{hourglass_forward.11} parent=11 // pred_fallthru
          _
      $region12: #{hourglass_forward.11} parent=5 // pred_fallthru
        _
      %p176 = scmp.lt.s32.totalorder %s11, 2
      // Predicated region
      $region25: #{hourglass_forward.11} parent=5 // pred_check
        %p177 = pneg %p176
      $region26: #{hourglass_forward.11} parent=5 // pred_check_branch
        %179 = sbr.rel (%p177) target = $region28
      $region27: #{hourglass_forward.11} parent=5 // pred_region
        // Predicated region
        $region29: #{hourglass_forward.11} parent=27 // pred_check
          %p180 = pneg %p52
        $region30: #{hourglass_forward.11} parent=27 // pred_check_branch
          %182 = sbr.rel (%p180) target = $region32
        $region31: #{hourglass_forward.11} parent=27 // pred_region
          %s183 = sand.u32 %s42, 1
          %s184 = sand.u32 %s42, 1
          %s185 = smul.addr %s184, 64
          %s186 = scalar_lea.vmem [#allocation2], %s185
          %s187 = smul.u32 2, %s11
          %s188 = smul.addr %s187, 4
          %s189 = scalar_lea.vmem %s1, %s188
          // Predicated region
          $region33: #{hourglass_forward.11} parent=31 // pred_check
            _
          $region34: #{hourglass_forward.11} parent=31 // pred_check_branch
            %191 = sbr.rel (0) target = $region36
          $region35: #{hourglass_forward.11} parent=31 // pred_region
            // Predicated region
            $region37: #{hourglass_forward.11} parent=35 // pred_check
              _
            $region38: #{hourglass_forward.11} parent=35 // pred_check_branch
              %193 = sbr.rel (0) target = $region40
            $region39: #{hourglass_forward.11} parent=35 // pred_region
              // Predicated region
              $region52: #{hourglass_forward.11} parent=39 // pred_check
                _
              $region53: #{hourglass_forward.11} parent=39 // pred_check_branch
                %223 = sbr.rel (0) target = $region55
              $region54: #{hourglass_forward.11} parent=39 // pred_region
                loop: start=0, step=1, limit=1
                $region56: #{hourglass_forward.11} parent=54 // loop_pre_header
                  _
                $region57: #{hourglass_forward.11} parent=54 // loop_header
                  %s225 = sphi 0, %s229
                  %p226 = scmp.ge.s32.totalorder %s225, 1
                  %s230 = sphi %s189, %s189
                  %s231 = sphi %s186, %s186
                $region58: #{hourglass_forward.11} parent=54 // loop_header_branch
                  %228 = sbr.rel (%p226) target = $region62
                $region59: #{hourglass_forward.11} parent=54 // loop_body
                  %v232 = vld [vmem:[%s230] sm:$0xff]
                  %233 = vst [vmem:[%s231] sm:$0xff] %v232
                  %v234 = vld [vmem:[%s230 + $0x10] sm:$0xff]
                  %235 = vst [vmem:[%s231 + $0x8] sm:$0xff] %v234
                  %v236 = vld [vmem:[%s230 + $0x20] sm:$0xff]
                  %237 = vst [vmem:[%s231 + $0x10] sm:$0xff] %v236
                  %v238 = vld [vmem:[%s230 + $0x30] sm:$0xff]
                  %239 = vst [vmem:[%s231 + $0x18] sm:$0xff] %v238
                  %v240 = vld [vmem:[%s230 + $0x40] sm:$0xff]
                  %241 = vst [vmem:[%s231 + $0x20] sm:$0xff] %v240
                  %v242 = vld [vmem:[%s230 + $0x50] sm:$0xff]
                  %243 = vst [vmem:[%s231 + $0x28] sm:$0xff] %v242
                  %v244 = vld [vmem:[%s230 + $0x60] sm:$0xff]
                  %245 = vst [vmem:[%s231 + $0x30] sm:$0xff] %v244
                  %v246 = vld [vmem:[%s230 + $0x70] sm:$0xff]
                  %247 = vst [vmem:[%s231 + $0x38] sm:$0xff] %v246
                $region60: #{hourglass_forward.11} parent=54 // loop_footer
                  %s229 = sadd.s32 1, %s225
                $region61: #{hourglass_forward.11} parent=54 // loop_footer_branch
                  %224 = sbr.rel target = $region57
                $region62: #{hourglass_forward.11} parent=54 // loop_exit
                  _
              $region55: #{hourglass_forward.11} parent=39 // pred_fallthru
                _
              // Predicated region
              $region63: #{hourglass_forward.11} parent=39 // pred_check
                _
              $region64: #{hourglass_forward.11} parent=39 // pred_check_branch
                %249 = sbr.rel target = $region66
              $region65: #{hourglass_forward.11} parent=39 // pred_region
                _
              $region66: #{hourglass_forward.11} parent=39 // pred_fallthru
                _
            $region40: #{hourglass_forward.11} parent=35 // pred_fallthru
              _
            // Predicated region
            $region41: #{hourglass_forward.11} parent=35 // pred_check
              _
            $region42: #{hourglass_forward.11} parent=35 // pred_check_branch
              %195 = sbr.rel target = $region44
            $region43: #{hourglass_forward.11} parent=35 // pred_region
              %s197 = ssub.s32 256, 1
              loop: start=0, step=1, limit=1
              $region45: #{hourglass_forward.11} parent=43 // loop_pre_header
                _
              $region46: #{hourglass_forward.11} parent=43 // loop_header
                %s199 = sphi 0, %s203
                %p200 = scmp.ge.s32.totalorder %s199, 1
                %s204 = sphi %s189, %s189
                %s205 = sphi %s186, %s186
              $region47: #{hourglass_forward.11} parent=43 // loop_header_branch
                %202 = sbr.rel (%p200) target = $region51
              $region48: #{hourglass_forward.11} parent=43 // loop_body
                %v206 = vld [vmem:[%s204] sm:%s197]
                %207 = vst [vmem:[%s205] sm:%s197] %v206
                %v208 = vld [vmem:[%s204 + $0x10] sm:%s197]
                %209 = vst [vmem:[%s205 + $0x8] sm:%s197] %v208
                %v210 = vld [vmem:[%s204 + $0x20] sm:%s197]
                %211 = vst [vmem:[%s205 + $0x10] sm:%s197] %v210
                %v212 = vld [vmem:[%s204 + $0x30] sm:%s197]
                %213 = vst [vmem:[%s205 + $0x18] sm:%s197] %v212
                %v214 = vld [vmem:[%s204 + $0x40] sm:%s197]
                %215 = vst [vmem:[%s205 + $0x20] sm:%s197] %v214
                %v216 = vld [vmem:[%s204 + $0x50] sm:%s197]
                %217 = vst [vmem:[%s205 + $0x28] sm:%s197] %v216
                %v218 = vld [vmem:[%s204 + $0x60] sm:%s197]
                %219 = vst [vmem:[%s205 + $0x30] sm:%s197] %v218
                %v220 = vld [vmem:[%s204 + $0x70] sm:%s197]
                %221 = vst [vmem:[%s205 + $0x38] sm:%s197] %v220
              $region49: #{hourglass_forward.11} parent=43 // loop_footer
                %s203 = sadd.s32 1, %s199
              $region50: #{hourglass_forward.11} parent=43 // loop_footer_branch
                %198 = sbr.rel target = $region46
              $region51: #{hourglass_forward.11} parent=43 // loop_exit
                _
            $region44: #{hourglass_forward.11} parent=35 // pred_fallthru
              _
          $region36: #{hourglass_forward.11} parent=31 // pred_fallthru
            _
          %250 = vnop
        $region32: #{hourglass_forward.11} parent=27 // pred_fallthru
          _
        // Predicated region
        $region67: #{hourglass_forward.11} parent=27 // pred_check
          %p251 = pneg %p99
        $region68: #{hourglass_forward.11} parent=27 // pred_check_branch
          %253 = sbr.rel (%p251) target = $region70
        $region69: #{hourglass_forward.11} parent=27 // pred_region
          %s254 = sand.u32 %s89, 1
          %s255 = sand.u32 %s89, 1
          %s256 = smul.addr %s255, 32
          %s257 = scalar_lea.vmem [#allocation3], %s256
          %s258 = smul.u32 2, %s11
          %s259 = smul.addr %s258, 4
          %s260 = scalar_lea.vmem %s3, %s259
          // Predicated region
          $region71: #{hourglass_forward.11} parent=69 // pred_check
            _
          $region72: #{hourglass_forward.11} parent=69 // pred_check_branch
            %262 = sbr.rel (0) target = $region74
          $region73: #{hourglass_forward.11} parent=69 // pred_region
            // Predicated region
            $region75: #{hourglass_forward.11} parent=73 // pred_check
              _
            $region76: #{hourglass_forward.11} parent=73 // pred_check_branch
              %264 = sbr.rel (0) target = $region78
            $region77: #{hourglass_forward.11} parent=73 // pred_region
              // Predicated region
              $region90: #{hourglass_forward.11} parent=77 // pred_check
                _
              $region91: #{hourglass_forward.11} parent=77 // pred_check_branch
                %286 = sbr.rel (0) target = $region93
              $region92: #{hourglass_forward.11} parent=77 // pred_region
                loop: start=0, step=1, limit=1
                $region94: #{hourglass_forward.11} parent=92 // loop_pre_header
                  _
                $region95: #{hourglass_forward.11} parent=92 // loop_header
                  %s288 = sphi 0, %s292
                  %p289 = scmp.ge.s32.totalorder %s288, 1
                  %s293 = sphi %s260, %s260
                  %s294 = sphi %s257, %s257
                $region96: #{hourglass_forward.11} parent=92 // loop_header_branch
                  %291 = sbr.rel (%p289) target = $region100
                $region97: #{hourglass_forward.11} parent=92 // loop_body
                  %v295 = vld [vmem:[%s293] sm:$0xff]
                  %296 = vst [vmem:[%s294] sm:$0xff] %v295
                  %v297 = vld [vmem:[%s293 + $0x10] sm:$0xff]
                  %298 = vst [vmem:[%s294 + $0x8] sm:$0xff] %v297
                  %v299 = vld [vmem:[%s293 + $0x20] sm:$0xff]
                  %300 = vst [vmem:[%s294 + $0x10] sm:$0xff] %v299
                  %v301 = vld [vmem:[%s293 + $0x30] sm:$0xff]
                  %302 = vst [vmem:[%s294 + $0x18] sm:$0xff] %v301
                $region98: #{hourglass_forward.11} parent=92 // loop_footer
                  %s292 = sadd.s32 1, %s288
                $region99: #{hourglass_forward.11} parent=92 // loop_footer_branch
                  %287 = sbr.rel target = $region95
                $region100: #{hourglass_forward.11} parent=92 // loop_exit
                  _
              $region93: #{hourglass_forward.11} parent=77 // pred_fallthru
                _
              // Predicated region
              $region101: #{hourglass_forward.11} parent=77 // pred_check
                _
              $region102: #{hourglass_forward.11} parent=77 // pred_check_branch
                %304 = sbr.rel target = $region104
              $region103: #{hourglass_forward.11} parent=77 // pred_region
                _
              $region104: #{hourglass_forward.11} parent=77 // pred_fallthru
                _
            $region78: #{hourglass_forward.11} parent=73 // pred_fallthru
              _
            // Predicated region
            $region79: #{hourglass_forward.11} parent=73 // pred_check
              _
            $region80: #{hourglass_forward.11} parent=73 // pred_check_branch
              %266 = sbr.rel target = $region82
            $region81: #{hourglass_forward.11} parent=73 // pred_region
              %s268 = ssub.s32 256, 1
              loop: start=0, step=1, limit=1
              $region83: #{hourglass_forward.11} parent=81 // loop_pre_header
                _
              $region84: #{hourglass_forward.11} parent=81 // loop_header
                %s270 = sphi 0, %s274
                %p271 = scmp.ge.s32.totalorder %s270, 1
                %s275 = sphi %s260, %s260
                %s276 = sphi %s257, %s257
              $region85: #{hourglass_forward.11} parent=81 // loop_header_branch
                %273 = sbr.rel (%p271) target = $region89
              $region86: #{hourglass_forward.11} parent=81 // loop_body
                %v277 = vld [vmem:[%s275] sm:%s268]
                %278 = vst [vmem:[%s276] sm:%s268] %v277
                %v279 = vld [vmem:[%s275 + $0x10] sm:%s268]
                %280 = vst [vmem:[%s276 + $0x8] sm:%s268] %v279
                %v281 = vld [vmem:[%s275 + $0x20] sm:%s268]
                %282 = vst [vmem:[%s276 + $0x10] sm:%s268] %v281
                %v283 = vld [vmem:[%s275 + $0x30] sm:%s268]
                %284 = vst [vmem:[%s276 + $0x18] sm:%s268] %v283
              $region87: #{hourglass_forward.11} parent=81 // loop_footer
                %s274 = sadd.s32 1, %s270
              $region88: #{hourglass_forward.11} parent=81 // loop_footer_branch
                %269 = sbr.rel target = $region84
              $region89: #{hourglass_forward.11} parent=81 // loop_exit
                _
            $region82: #{hourglass_forward.11} parent=73 // pred_fallthru
              _
          $region74: #{hourglass_forward.11} parent=69 // pred_fallthru
            _
          %305 = vnop
        $region70: #{hourglass_forward.11} parent=27 // pred_fallthru
          _
      $region28: #{hourglass_forward.11} parent=5 // pred_fallthru
        _
      %p306 = scmp.le.s32.totalorder 1, %s11
      %p307 = scmp.lt.s32.totalorder %s11, 3
      %p308 = pnand %p306, %p307
      %p309 = pneg %p308
      // Predicated region
      $region105: #{hourglass_forward.11} parent=5 // pred_check
        _
      $region106: #{hourglass_forward.11} parent=5 // pred_check_branch
        %311 = sbr.rel (%p308) target = $region108
      $region107: #{hourglass_forward.11} parent=5 // pred_region
        %s312 = ssub.s32 %s11, 1
        %s313 = sand.u32 %s45, 1
        %s314 = sand.u32 %s45, 1
        %s315 = smul.addr %s314, 64
        %s316 = scalar_lea.vmem [#allocation2], %s315
        // Predicated region
        $region109: #{hourglass_forward.11} parent=107 // pred_check
          %p317 = pneg %p58
        $region110: #{hourglass_forward.11} parent=107 // pred_check_branch
          %319 = sbr.rel (%p317) target = $region112
        $region111: #{hourglass_forward.11} parent=107 // pred_region
          _
        $region112: #{hourglass_forward.11} parent=107 // pred_fallthru
          _
        %s320 = sand.u32 %s92, 1
        %s321 = sand.u32 %s92, 1
        %s322 = smul.addr %s321, 32
        %s323 = scalar_lea.vmem [#allocation3], %s322
        // Predicated region
        $region113: #{hourglass_forward.11} parent=107 // pred_check
          %p324 = pneg %p105
        $region114: #{hourglass_forward.11} parent=107 // pred_check_branch
          %326 = sbr.rel (%p324) target = $region116
        $region115: #{hourglass_forward.11} parent=107 // pred_region
          _
        $region116: #{hourglass_forward.11} parent=107 // pred_fallthru
          _
        %p327 = pneg %p32
        %p328 = pneg %p29
        %s329 = sand.u32 %s45, 1
        %s330 = sand.u32 %s45, 1
        %s331 = smul.addr %s330, 64
        %s332 = scalar_lea.vmem [#allocation2], %s331
        %p333 = pneg %p58
        %p334 = pneg %p55
        %p335 = pneg %p79
        %p336 = pneg %p76
        %s337 = sand.u32 %s92, 1
        %s338 = sand.u32 %s92, 1
        %s339 = smul.addr %s338, 32
        %s340 = scalar_lea.vmem [#allocation3], %s339
        %p341 = pneg %p105
        %p342 = pneg %p102
        %p343 = pneg %p126
        %p344 = pneg %p123
        %p345 = pneg %p152
        %p346 = pneg %p149
        %s347 = sand.u32 %s139, 1
        %s348 = sand.u32 %s139, 1
        %s349 = smul.addr %s348, 64
        %s350 = scalar_lea.vmem [#allocation4], %s349
        %s351 = smul.u32 2, %s16
        %s352 = smul.u32 2, %s16
        %s353 = smul.u32 2, %s16
        %v355 = vld [vmem:[%s0] sm:$0xf]
        %v356 = vld [vmem:[%s0 + $0x4] sm:$0xf]
        %v357 = vld [vmem:[%s0 + $0x8] sm:$0xf]
        %v358 = vld [vmem:[%s0 + $0xc] sm:$0xf]
        %v359 = vld [vmem:[%s316] sm:$0xff]
        %v360 = vld [vmem:[%s316 + $0x8] sm:$0xff]
        %v361 = vld [vmem:[%s316 + $0x10] sm:$0xff]
        %v362 = vld [vmem:[%s316 + $0x18] sm:$0xff]
        %v363 = vld [vmem:[%s316 + $0x20] sm:$0xff]
        %v364 = vld [vmem:[%s316 + $0x28] sm:$0xff]
        %v365 = vld [vmem:[%s316 + $0x30] sm:$0xff]
        %v366 = vld [vmem:[%s316 + $0x38] sm:$0xff]
        %v367 = vld [vmem:[%s2] sm:$0xf]
        %v368 = vld [vmem:[%s2 + $0x4] sm:$0xf]
        %v369 = vld [vmem:[%s2 + $0x8] sm:$0xf]
        %v370 = vld [vmem:[%s2 + $0xc] sm:$0xf]
        %v371 = vld [vmem:[%s323] sm:$0xff]
        %v372 = vld [vmem:[%s323 + $0x8] sm:$0xff]
        %v373 = vld [vmem:[%s323 + $0x10] sm:$0xff]
        %v374 = vld [vmem:[%s323 + $0x18] sm:$0xff]
        %v379 = vunpack.c.l.b16 %v367
        %v380 = vunpack.c.l.b16 %v368
        %v381 = vunpack.c.l.b16 %v369
        %v382 = vunpack.c.l.b16 %v370
        %v383 = vpack.c.b16 %v380, %v379
        %v384 = vpack.c.b16 %v382, %v381
        %v389 = vunpack.c.l.b16 %v371
        %v390 = vunpack.c.h.b16 %v371
        %v391 = vunpack.c.l.b16 %v372
        %v392 = vunpack.c.h.b16 %v372
        %v393 = vunpack.c.l.b16 %v373
        %v394 = vunpack.c.h.b16 %v373
        %v395 = vunpack.c.l.b16 %v374
        %v396 = vunpack.c.h.b16 %v374
        %v397 = vpack.c.b16 %v391, %v389
        %v398 = vpack.c.b16 %v392, %v390
        %v399 = vpack.c.b16 %v395, %v393
        %v400 = vpack.c.b16 %v396, %v394
        %vm405 = vcmask 261120
        %v407 = vsel %vm405, %v383, 0
        %v410 = vsel %vm405, %v384, 0
        %412 = vmatpush.bf16.msra.mxu0 0
        %413 = vmatpush.bf16.msra.mxu0 0
        %414 = vmatpush.bf16.msra.mxu0 0
        %415 = vmatpush.bf16.msra.mxu0 0
        %416 = vmatpush.bf16.msra.mxu0 0
        %417 = vmatpush.bf16.msra.mxu0 0
        %418 = vmatpush.bf16.msra.mxu0 %v399
        %419 = vmatpush.bf16.msra.mxu0 %v397
        %420 = vmatmul.bf16.gmra.mxu0 %v407
        %v421 = vpop.f32.mrf.mxu0
        %v422 = vadd.f32 0.0, %v421
        %v423 = vpop.f32.mrf.mxu0
        %v424 = vadd.f32 0.0, %v423
        %425 = vmatmul.bf16.gmra.mxu0 %v410
        %v426 = vpop.f32.mrf.mxu0
        %v427 = vadd.f32 0.0, %v426
        %v428 = vpop.f32.mrf.mxu0
        %v429 = vadd.f32 0.0, %v428
        %430 = vdwg.mxu0
        %431 = vmatpush.bf16.msra.mxu0 0
        %432 = vmatpush.bf16.msra.mxu0 0
        %433 = vmatpush.bf16.msra.mxu0 0
        %434 = vmatpush.bf16.msra.mxu0 0
        %435 = vmatpush.bf16.msra.mxu0 0
        %436 = vmatpush.bf16.msra.mxu0 0
        %437 = vmatpush.bf16.msra.mxu0 %v400
        %438 = vmatpush.bf16.msra.mxu0 %v398
        %439 = vmatmul.bf16.gmra.mxu0 %v407
        %v440 = vpop.f32.mrf.mxu0
        %v441 = vadd.f32 0.0, %v440
        %v442 = vpop.f32.mrf.mxu0
        %v443 = vadd.f32 0.0, %v442
        %444 = vmatmul.bf16.gmra.mxu0 %v410
        %v445 = vpop.f32.mrf.mxu0
        %v446 = vadd.f32 0.0, %v445
        %v447 = vpop.f32.mrf.mxu0
        %v448 = vadd.f32 0.0, %v447
        %449 = vdwg.mxu0
        %v454 = vunpack.c.l.b16 %v355
        %v455 = vunpack.c.l.b16 %v356
        %v456 = vunpack.c.l.b16 %v357
        %v457 = vunpack.c.l.b16 %v358
        %v458 = vpack.c.b16 %v455, %v454
        %v459 = vpack.c.b16 %v457, %v456
        %v468 = vunpack.c.l.b16 %v359
        %v469 = vunpack.c.h.b16 %v359
        %v470 = vunpack.c.l.b16 %v360
        %v471 = vunpack.c.h.b16 %v360
        %v472 = vunpack.c.l.b16 %v361
        %v473 = vunpack.c.h.b16 %v361
        %v474 = vunpack.c.l.b16 %v362
        %v475 = vunpack.c.h.b16 %v362
        %v476 = vunpack.c.l.b16 %v363
        %v477 = vunpack.c.h.b16 %v363
        %v478 = vunpack.c.l.b16 %v364
        %v479 = vunpack.c.h.b16 %v364
        %v480 = vunpack.c.l.b16 %v365
        %v481 = vunpack.c.h.b16 %v365
        %v482 = vunpack.c.l.b16 %v366
        %v483 = vunpack.c.h.b16 %v366
        %v484 = vpack.c.b16 %v470, %v468
        %v485 = vpack.c.b16 %v471, %v469
        %v486 = vpack.c.b16 %v474, %v472
        %v487 = vpack.c.b16 %v475, %v473
        %v488 = vpack.c.b16 %v478, %v476
        %v489 = vpack.c.b16 %v479, %v477
        %v490 = vpack.c.b16 %v482, %v480
        %v491 = vpack.c.b16 %v483, %v481
        %vm500 = vcmask 523264
        %v502 = vsel %vm500, %v458, 0
        %v505 = vsel %vm500, %v459, 0
        %507 = vmatpush.bf16.msra.mxu0 0
        %508 = vmatpush.bf16.msra.mxu0 0
        %509 = vmatpush.bf16.msra.mxu0 0
        %510 = vmatpush.bf16.msra.mxu0 0
        %511 = vmatpush.bf16.msra.mxu0 %v490
        %512 = vmatpush.bf16.msra.mxu0 %v488
        %513 = vmatpush.bf16.msra.mxu0 %v486
        %514 = vmatpush.bf16.msra.mxu0 %v484
        %515 = vmatmul.bf16.gmra.mxu0 %v502
        %v516 = vpop.f32.mrf.mxu0
        %v517 = vadd.f32 %v422, %v516
        %v518 = vpop.f32.mrf.mxu0
        %v519 = vadd.f32 %v424, %v518
        %520 = vmatmul.bf16.gmra.mxu0 %v505
        %v521 = vpop.f32.mrf.mxu0
        %v522 = vadd.f32 %v427, %v521
        %v523 = vpop.f32.mrf.mxu0
        %v524 = vadd.f32 %v429, %v523
        %525 = vdwg.mxu0
        %526 = vmatpush.bf16.msra.mxu0 0
        %527 = vmatpush.bf16.msra.mxu0 0
        %528 = vmatpush.bf16.msra.mxu0 0
        %529 = vmatpush.bf16.msra.mxu0 0
        %530 = vmatpush.bf16.msra.mxu0 %v491
        %531 = vmatpush.bf16.msra.mxu0 %v489
        %532 = vmatpush.bf16.msra.mxu0 %v487
        %533 = vmatpush.bf16.msra.mxu0 %v485
        %534 = vmatmul.bf16.gmra.mxu0 %v502
        %v535 = vpop.f32.mrf.mxu0
        %v536 = vadd.f32 %v441, %v535
        %v537 = vpop.f32.mrf.mxu0
        %v538 = vadd.f32 %v443, %v537
        %539 = vmatmul.bf16.gmra.mxu0 %v505
        %v540 = vpop.f32.mrf.mxu0
        %v541 = vadd.f32 %v446, %v540
        %v542 = vpop.f32.mrf.mxu0
        %v543 = vadd.f32 %v448, %v542
        %544 = vdwg.mxu0
        %v545 = vld [vmem:[%s4] sm:$0xff]
        %v546 = vld [vmem:[%s4 + $0x8] sm:$0xff]
        %v547 = vld [vmem:[%s4 + $0x10] sm:$0xff]
        %v548 = vld [vmem:[%s4 + $0x18] sm:$0xff]
        %550 = vset.pattern.permute.xlu0 0
        %551 = vperm.xlu0 %550, %v545
        %v552 = vpop.permute.xlu0 %551
        %555 = vset.pattern.permute.xlu0 0
        %556 = vperm.xlu0 %555, %v546
        %v557 = vpop.permute.xlu0 %556
        %560 = vset.pattern.permute.xlu0 0
        %561 = vperm.xlu0 %560, %v547
        %v562 = vpop.permute.xlu0 %561
        %565 = vset.pattern.permute.xlu0 0
        %566 = vperm.xlu0 %565, %v548
        %v567 = vpop.permute.xlu0 %566
        %v569 = vadd.f32 %v517, %v552
        %v570 = vadd.f32 %v536, %v552
        %v571 = vadd.f32 %v519, %v557
        %v572 = vadd.f32 %v538, %v557
        %v573 = vadd.f32 %v522, %v562
        %v574 = vadd.f32 %v541, %v562
        %v575 = vadd.f32 %v524, %v567
        %v576 = vadd.f32 %v543, %v567
        %v577 = vmin.f32 %v569, 20.0
        %v578 = vmin.f32 %v570, 20.0
        %v579 = vmin.f32 %v571, 20.0
        %v580 = vmin.f32 %v572, 20.0
        %v581 = vmin.f32 %v573, 20.0
        %v582 = vmin.f32 %v574, 20.0
        %v583 = vmin.f32 %v575, 20.0
        %v584 = vmin.f32 %v576, 20.0
        %v585 = vmul.f32 %v577, 1.442695
        %v586 = vpow.pop %v585
        %v587 = vmul.f32 %v578, 1.442695
        %v588 = vpow.pop %v587
        %v589 = vmul.f32 %v579, 1.442695
        %v590 = vpow.pop %v589
        %v591 = vmul.f32 %v580, 1.442695
        %v592 = vpow.pop %v591
        %v593 = vmul.f32 %v581, 1.442695
        %v594 = vpow.pop %v593
        %v595 = vmul.f32 %v582, 1.442695
        %v596 = vpow.pop %v595
        %v597 = vmul.f32 %v583, 1.442695
        %v598 = vpow.pop %v597
        %v599 = vmul.f32 %v584, 1.442695
        %v600 = vpow.pop %v599
        %v601 = vadd.f32 %v586, 2.0
        %v602 = vadd.f32 %v588, 2.0
        %v603 = vadd.f32 %v590, 2.0
        %v604 = vadd.f32 %v592, 2.0
        %v605 = vadd.f32 %v594, 2.0
        %v606 = vadd.f32 %v596, 2.0
        %v607 = vadd.f32 %v598, 2.0
        %v608 = vadd.f32 %v600, 2.0
        %v609 = vmul.f32 %v586, %v601
        %v610 = vmul.f32 %v588, %v602
        %v611 = vmul.f32 %v590, %v603
        %v612 = vmul.f32 %v592, %v604
        %v613 = vmul.f32 %v594, %v605
        %v614 = vmul.f32 %v596, %v606
        %v615 = vmul.f32 %v598, %v607
        %v616 = vmul.f32 %v600, %v608
        %v617 = vmul.f32 %v569, %v609
        %v618 = vmul.f32 %v570, %v610
        %v619 = vmul.f32 %v571, %v611
        %v620 = vmul.f32 %v572, %v612
        %v621 = vmul.f32 %v573, %v613
        %v622 = vmul.f32 %v574, %v614
        %v623 = vmul.f32 %v575, %v615
        %v624 = vmul.f32 %v576, %v616
        %v625 = vadd.f32 %v609, 2.0
        %v626 = vadd.f32 %v610, 2.0
        %v627 = vadd.f32 %v611, 2.0
        %v628 = vadd.f32 %v612, 2.0
        %v629 = vadd.f32 %v613, 2.0
        %v630 = vadd.f32 %v614, 2.0
        %v631 = vadd.f32 %v615, 2.0
        %v632 = vadd.f32 %v616, 2.0
        %v633 = vrcp.pop %v625
        %v634 = vrcp.pop %v626
        %v635 = vrcp.pop %v627
        %v636 = vrcp.pop %v628
        %v637 = vrcp.pop %v629
        %v638 = vrcp.pop %v630
        %v639 = vrcp.pop %v631
        %v640 = vrcp.pop %v632
        %v641 = vmul.f32 %v617, %v633
        %v642 = vmul.f32 %v618, %v634
        %v643 = vmul.f32 %v619, %v635
        %v644 = vmul.f32 %v620, %v636
        %v645 = vmul.f32 %v621, %v637
        %v646 = vmul.f32 %v622, %v638
        %v647 = vmul.f32 %v623, %v639
        %v648 = vmul.f32 %v624, %v640
        %649 = vst [vmem:[%s350] sm:$0xff] %v641
        %650 = vst [vmem:[%s350 + $0x8] sm:$0xff] %v642
        %651 = vst [vmem:[%s350 + $0x10] sm:$0xff] %v643
        %652 = vst [vmem:[%s350 + $0x18] sm:$0xff] %v644
        %653 = vst [vmem:[%s350 + $0x20] sm:$0xff] %v645
        %654 = vst [vmem:[%s350 + $0x28] sm:$0xff] %v646
        %655 = vst [vmem:[%s350 + $0x30] sm:$0xff] %v647
        %656 = vst [vmem:[%s350 + $0x38] sm:$0xff] %v648
        %s657 = sand.u32 %s139, 1
        %s658 = sand.u32 %s139, 1
        %s659 = smul.addr %s658, 64
        %s660 = scalar_lea.vmem [#allocation4], %s659
        // Predicated region
        $region117: #{hourglass_forward.11} parent=107 // pred_check
          %p661 = pneg %p149
        $region118: #{hourglass_forward.11} parent=107 // pred_check_branch
          %663 = sbr.rel (%p661) target = $region120
        $region119: #{hourglass_forward.11} parent=107 // pred_region
          %s664 = smul.u32 2, %s16
          %s665 = smul.addr %s664, 8
          %s666 = scalar_lea.vmem %s5, %s665
          // Predicated region
          $region121: #{hourglass_forward.11} parent=119 // pred_check
            _
          $region122: #{hourglass_forward.11} parent=119 // pred_check_branch
            %668 = sbr.rel (0) target = $region124
          $region123: #{hourglass_forward.11} parent=119 // pred_region
            // Predicated region
            $region125: #{hourglass_forward.11} parent=123 // pred_check
              _
            $region126: #{hourglass_forward.11} parent=123 // pred_check_branch
              %670 = sbr.rel (0) target = $region128
            $region127: #{hourglass_forward.11} parent=123 // pred_region
              loop: start=0, step=1, limit=1
              $region129: #{hourglass_forward.11} parent=127 // loop_pre_header
                _
              $region130: #{hourglass_forward.11} parent=127 // loop_header
                %s672 = sphi 0, %s676
                %p673 = scmp.ge.s32.totalorder %s672, 1
                %s677 = sphi %s660, %s660
                %s678 = sphi %s666, %s666
              $region131: #{hourglass_forward.11} parent=127 // loop_header_branch
                %675 = sbr.rel (%p673) target = $region135
              $region132: #{hourglass_forward.11} parent=127 // loop_body
                %v679 = vld [vmem:[%s677] sm:$0xff]
                %680 = vst [vmem:[%s678] sm:$0xff] %v679
                %v681 = vld [vmem:[%s677 + $0x8] sm:$0xff]
                %682 = vst [vmem:[%s678 + $0x8] sm:$0xff] %v681
                %v683 = vld [vmem:[%s677 + $0x10] sm:$0xff]
                %684 = vst [vmem:[%s678 + $0x20] sm:$0xff] %v683
                %v685 = vld [vmem:[%s677 + $0x18] sm:$0xff]
                %686 = vst [vmem:[%s678 + $0x28] sm:$0xff] %v685
                %v687 = vld [vmem:[%s677 + $0x20] sm:$0xff]
                %688 = vst [vmem:[%s678 + $0x40] sm:$0xff] %v687
                %v689 = vld [vmem:[%s677 + $0x28] sm:$0xff]
                %690 = vst [vmem:[%s678 + $0x48] sm:$0xff] %v689
                %v691 = vld [vmem:[%s677 + $0x30] sm:$0xff]
                %692 = vst [vmem:[%s678 + $0x60] sm:$0xff] %v691
                %v693 = vld [vmem:[%s677 + $0x38] sm:$0xff]
                %694 = vst [vmem:[%s678 + $0x68] sm:$0xff] %v693
              $region133: #{hourglass_forward.11} parent=127 // loop_footer
                %s676 = sadd.s32 1, %s672
              $region134: #{hourglass_forward.11} parent=127 // loop_footer_branch
                %671 = sbr.rel target = $region130
              $region135: #{hourglass_forward.11} parent=127 // loop_exit
                _
            $region128: #{hourglass_forward.11} parent=123 // pred_fallthru
              _
            // Predicated region
            $region136: #{hourglass_forward.11} parent=123 // pred_check
              _
            $region137: #{hourglass_forward.11} parent=123 // pred_check_branch
              %696 = sbr.rel target = $region139
            $region138: #{hourglass_forward.11} parent=123 // pred_region
              _
            $region139: #{hourglass_forward.11} parent=123 // pred_fallthru
              _
          $region124: #{hourglass_forward.11} parent=119 // pred_fallthru
            _
          %697 = vnop
        $region120: #{hourglass_forward.11} parent=107 // pred_fallthru
          _
      $region108: #{hourglass_forward.11} parent=5 // pred_fallthru
        _
      %p698 = scmp.le.s32.totalorder 2, %s11
      // Predicated region
      $region140: #{hourglass_forward.11} parent=5 // pred_check
        %p699 = pneg %p698
      $region141: #{hourglass_forward.11} parent=5 // pred_check_branch
        %701 = sbr.rel (%p699) target = $region143
      $region142: #{hourglass_forward.11} parent=5 // pred_region
        %s702 = ssub.s32 %s11, 2
        // Predicated region
        $region144: #{hourglass_forward.11} parent=142 // pred_check
          %p703 = pneg %p155
        $region145: #{hourglass_forward.11} parent=142 // pred_check_branch
          %705 = sbr.rel (%p703) target = $region147
        $region146: #{hourglass_forward.11} parent=142 // pred_region
          %s706 = sand.u32 %s140, 1
          %s707 = sand.u32 %s140, 1
          %s708 = smul.addr %s707, 64
          %s709 = scalar_lea.vmem [#allocation4], %s708
        $region147: #{hourglass_forward.11} parent=142 // pred_fallthru
          _
      $region143: #{hourglass_forward.11} parent=5 // pred_fallthru
        _
    $region6: #{hourglass_forward.11} parent=1 // loop_footer
      %s15 = sadd.s32 1, %s11
    $region7: #{hourglass_forward.11} parent=1 // loop_footer_branch
      %10 = sbr.rel target = $region3
    $region8: #{hourglass_forward.11} parent=1 // loop_exit
      _

</llo_original>
